<compile_context>
chip_gen: v5e
topology: v5e:2x2
jax: 0.10.0
libtpu: 0.0.40
codegen_flags: <defaults>
</compile_context>

<pallas_src>
import functools

import jax
import jax.numpy as jnp
from jax import lax
from jax.experimental import pallas as pl
from jax.experimental.pallas import tpu as pltpu


def _silu(v):
    return v * jax.nn.sigmoid(v)


def _bottleneck_kernel(x_ref, w1_ref, b1_ref, w2_ref, b2_ref, o_ref,
                       pad_ref, acc_ref, *, add):
    """One batch element per grid step, fully fused in VMEM.

    x_ref  : (1, H, W, C1)   input tile, NHWC (original dtype)
    w1_ref : (C1, C_)        BN-folded 1x1 weights (MXU dtype, e.g. bf16)
    b1_ref : (1, C_)         BN-folded 1x1 bias (f32)
    w2_ref : (3, 3*C_, C2)   BN-folded 3x3 weights; kh-major, K packed (kw, ci)
    b2_ref : (1, C2)         BN-folded 3x3 bias (f32)
    o_ref  : (1, H, W, C2)   output tile, NHWC
    pad_ref: (H+2, W, 3*C_)  VMEM scratch: cv1 output, three kw-shifted copies
                             packed on the lane axis, zero top/bottom rows
    acc_ref: (H*W, C2)       f32 VMEM accumulator for the 3 fused-K taps
    """
    _, H, W, c1 = x_ref.shape
    c3 = pad_ref.shape[-1]
    c_ = c3 // 3
    c2 = o_ref.shape[-1]
    f32 = jnp.float32
    mdt = w1_ref.dtype

    # Top / bottom zero-pad rows.  Only 2*W*3C_ elements per step (the old
    # full (H+2)*(W+2)*C_ f32 memset is gone).  Re-written every step so
    # correctness does not depend on grid scheduling / megacore splitting.
    zrow = jnp.zeros((W, c3), mdt)
    pad_ref[0] = zrow
    pad_ref[H + 1] = zrow

    # ---- cv1: 1x1 conv (+ folded BN) + SiLU --------------------------------
    # bf16 operands on the MXU, f32 accumulation; bias + SiLU in f32.
    x = x_ref[0].reshape(H * W, c1)
    y1 = jnp.dot(x.astype(mdt), w1_ref[...], preferred_element_type=f32)
    y1 = _silu(y1 + b1_ref[...])
    y1 = y1.reshape(H, W, c_).astype(mdt)      # stored bf16 in the VMEM scratch

    # Pack the three kw-shifted copies (y1[w-1], y1[w], y1[w+1]; zero outside
    # the image) next to each other on the lane (channel) axis.  The kw shifts
    # happen once per step here instead of as 9 sublane-misaligned reads, and
    # the kh taps below become free leading-axis slices of pad_ref.
    zcol = jnp.zeros((H, 1, c_), mdt)
    left = jnp.concatenate([zcol, y1[:, :W - 1, :]], axis=1)     # y1[h, w-1]
    right = jnp.concatenate([y1[:, 1:, :], zcol], axis=1)        # y1[h, w+1]
    pad_ref[1:H + 1] = jnp.concatenate([left, y1, right], axis=-1)

    # ---- cv2: 3x3 conv (+ folded BN) + SiLU as 3 fused-K (=3*C_) matmuls ---
    acc_ref[...] = jnp.dot(pad_ref[0:H].reshape(H * W, c3), w2_ref[0],
                           preferred_element_type=f32)
    acc_ref[...] += jnp.dot(pad_ref[1:H + 1].reshape(H * W, c3), w2_ref[1],
                            preferred_element_type=f32)
    acc_ref[...] += jnp.dot(pad_ref[2:H + 2].reshape(H * W, c3), w2_ref[2],
                            preferred_element_type=f32)
    y2 = _silu(acc_ref[...] + b2_ref[...])     # bias added once, post-loop

    # ---- optional residual (kept in f32) ------------------------------------
    if add:
        y2 = y2 + x.astype(f32)
    o_ref[0] = y2.reshape(H, W, c2).astype(o_ref.dtype)


def _fold_params(params, eps, mxu_dtype):
    """Fold inference-mode BatchNorm into the conv weights/bias (pure XLA)."""
    (w1, g1, be1, m1, v1, w2, g2, be2, m2, v2) = params
    f32 = jnp.float32
    c_ = w1.shape[0]
    c2 = w2.shape[0]
    s1 = (g1 / jnp.sqrt(v1 + eps)).astype(f32)
    w1t = (w1[:, :, 0, 0].astype(f32) * s1[:, None]).T.astype(mxu_dtype)
    b1f = (be1 - m1 * s1).astype(f32)[None, :]                       # (1, C_)
    s2 = (g2 / jnp.sqrt(v2 + eps)).astype(f32)
    w2f = w2.astype(f32) * s2[:, None, None, None]                   # (C2,C_,3,3)
    w2t = jnp.transpose(w2f, (2, 3, 1, 0)).reshape(3, 3 * c_, c2)    # (3,3C_,C2)
    w2t = w2t.astype(mxu_dtype)
    b2f = (be2 - m2 * s2).astype(f32)[None, :]                       # (1, C2)
    return w1t, b1f, w2t, b2f


def bottleneck_nhwc(x, params, *, shortcut=True, eps=1e-5,
                    mxu_dtype=jnp.bfloat16):
    """Fused Bottleneck on NHWC activations (preferred layout for chaining)."""
    B, H, W, C1 = x.shape
    w1t, b1f, w2t, b2f = _fold_params(params, eps, mxu_dtype)
    c_ = w1t.shape[1]
    C2 = w2t.shape[-1]
    add = bool(shortcut) and (C1 == C2)

    xi = jnp.dtype(x.dtype).itemsize
    mi = jnp.dtype(mxu_dtype).itemsize
    # Per-step VMEM: double-buffered in/out blocks + scratch + weights plus a
    # generous margin for in-kernel value temporaries (defaults of 16/32 MiB
    # scoped VMEM are too small for whole-image blocks at production sizes).
    step_bytes = (2 * H * W * C1 * xi + 2 * H * W * C2 * xi
                  + (H + 2) * W * 3 * c_ * mi + H * W * C2 * 4
                  + 2 * (w1t.size + w2t.size) * mi + (b1f.size + b2f.size) * 4
                  + H * W * (C1 + 5 * c_ + 2 * C2) * 4)
    vmem_limit = int(min(max(2 * step_bytes, 8 * 1024 * 1024),
                         100 * 1024 * 1024))

    cost = pl.CostEstimate(
        flops=2 * B * H * W * c_ * (C1 + 9 * C2),
        transcendentals=B * H * W * (c_ + C2),
        bytes_accessed=int(B * H * W * (C1 + C2) * xi
                           + (w1t.size + w2t.size) * mi
                           + (b1f.size + b2f.size) * 4))

    return pl.pallas_call(
        functools.partial(_bottleneck_kernel, add=add),
        out_shape=jax.ShapeDtypeStruct((B, H, W, C2), x.dtype),
        grid=(B,),
        in_specs=[
            pl.BlockSpec((1, H, W, C1), lambda i: (i, 0, 0, 0)),
            pl.BlockSpec((C1, c_), lambda i: (0, 0)),
            pl.BlockSpec((1, c_), lambda i: (0, 0)),
            pl.BlockSpec((3, 3 * c_, C2), lambda i: (0, 0, 0)),
            pl.BlockSpec((1, C2), lambda i: (0, 0)),
        ],
        out_specs=pl.BlockSpec((1, H, W, C2), lambda i: (i, 0, 0, 0)),
        scratch_shapes=[
            pltpu.VMEM((H + 2, W, 3 * c_), mxu_dtype),   # packed padded cv1 out
            pltpu.VMEM((H * W, C2), jnp.float32),        # f32 cv2 accumulator
        ],
        compiler_params=pltpu.CompilerParams(
            dimension_semantics=("parallel",),
            vmem_limit_bytes=vmem_limit),
        cost_estimate=cost,
    )(x, w1t, b1f, w2t, b2f)


def bottleneck(x, params, *, shortcut=True, eps=1e-5, mxu_dtype=jnp.bfloat16):
    """NCHW interface matching the PyTorch module.

    For chained Bottlenecks prefer `bottleneck_nhwc` and keep activations NHWC
    between calls: each NCHW<->NHWC transpose is a full extra HBM round trip.
    """
    x_nhwc = jnp.transpose(x, (0, 2, 3, 1))
    out = bottleneck_nhwc(x_nhwc, params, shortcut=shortcut, eps=eps,
                          mxu_dtype=mxu_dtype)
    return jnp.transpose(out, (0, 3, 1, 2))


def bottleneck_ref(x, params, *, shortcut=True, eps=1e-5):
    """Pure-f32 JAX reference mirroring the PyTorch forward (BN eval mode)."""
    (w1, g1, be1, m1, v1, w2, g2, be2, m2, v2) = params

    def conv_bn_silu(h, w, g, be, m, v, pad):
        y = lax.conv_general_dilated(
            h, w, window_strides=(1, 1), padding=[(pad, pad), (pad, pad)],
            dimension_numbers=("NCHW", "OIHW", "NCHW"))
        s = g / jnp.sqrt(v + eps)
        y = y * s[None, :, None, None] + (be - m * s)[None, :, None, None]
        return _silu(y)

    y = conv_bn_silu(x, w1, g1, be1, m1, v1, 0)
    y = conv_bn_silu(y, w2, g2, be2, m2, v2, 1)
    add = bool(shortcut) and (x.shape[1] == w2.shape[0])
    return x + y if add else y


def bottleneck_mxu_ref(x, params, *, shortcut=True, eps=1e-5,
                       mxu_dtype=jnp.bfloat16):
    """lax.conv reference matching the kernel's numerics exactly (same folded
    + MXU-dtype weights, bf16 operands, f32 accumulation) for tight checks."""
    f32 = jnp.float32
    w1t, b1f, w2t, b2f = _fold_params(params, eps, mxu_dtype)
    c1, c_ = w1t.shape
    c2 = w2t.shape[-1]
    w1o = w1t.T[:, :, None, None]                                   # (C_,C1,1,1)
    w2o = jnp.transpose(w2t.reshape(3, 3, c_, c2), (3, 2, 0, 1))    # (C2,C_,3,3)

    y = lax.conv_general_dilated(
        x.astype(mxu_dtype), w1o, (1, 1), [(0, 0), (0, 0)],
        dimension_numbers=("NCHW", "OIHW", "NCHW"), preferred_element_type=f32)
    y = _silu(y + b1f[0][None, :, None, None])
    y = lax.conv_general_dilated(
        y.astype(mxu_dtype), w2o, (1, 1), [(1, 1), (1, 1)],
        dimension_numbers=("NCHW", "OIHW", "NCHW"), preferred_element_type=f32)
    y = _silu(y + b2f[0][None, :, None, None])
    add = bool(shortcut) and (x.shape[1] == c2)
    out = x.astype(f32) + y if add else y
    return out.astype(x.dtype)


if __name__ == "__main__":
    key = jax.random.PRNGKey(0)
    ks = jax.random.split(key, 12)

    # Bottleneck(c1=4, c2=4, shortcut=True, e=0.5) -> hidden c_ = 2.
    B, C1, C2, H, W = 2, 4, 4, 16, 16
    c_ = int(C2 * 0.5)

    x = jax.random.normal(ks[0], (B, C1, H, W), dtype=jnp.float32)
    w1 = jax.random.normal(ks[1], (c_, C1, 1, 1), dtype=jnp.float32) * 0.5
    w2 = jax.random.normal(ks[2], (C2, c_, 3, 3), dtype=jnp.float32) * 0.2
    g1 = jax.random.uniform(ks[3], (c_,), minval=0.5, maxval=1.5)
    be1 = jax.random.normal(ks[4], (c_,)) * 0.1
    m1 = jax.random.normal(ks[5], (c_,)) * 0.1
    v1 = jax.random.uniform(ks[6], (c_,), minval=0.5, maxval=1.5)
    g2 = jax.random.uniform(ks[7], (C2,), minval=0.5, maxval=1.5)
    be2 = jax.random.normal(ks[8], (C2,)) * 0.1
    m2 = jax.random.normal(ks[9], (C2,)) * 0.1
    v2 = jax.random.uniform(ks[10], (C2,), minval=0.5, maxval=1.5)

    params = (w1, g1, be1, m1, v1, w2, g2, be2, m2, v2)

    out = jax.block_until_ready(bottleneck(x, params, shortcut=True))
    assert out.shape == (B, C2, H, W), out.shape
    assert out.dtype == x.dtype

    # Tight check vs. a reference that mirrors the kernel's bf16-MXU numerics.
    ref_mxu = bottleneck_mxu_ref(x, params, shortcut=True)
    err_mxu = float(jnp.max(jnp.abs(out - ref_mxu)))
    assert jnp.allclose(out, ref_mxu, atol=5e-3, rtol=5e-3), err_mxu

    # Loose sanity check vs. the pure-f32 PyTorch-mirror reference
    # (difference is only bf16 MXU rounding).
    ref_f32 = bottleneck_ref(x, params, shortcut=True)
    err_f32 = float(jnp.max(jnp.abs(out - ref_f32)))
    assert jnp.allclose(out, ref_f32, atol=1e-1, rtol=1e-1), err_f32

    print("KERNEL_OK")
</pallas_src>

<mosaic_0001>
module attributes {stable_mosaic.version = 11 : i64} {
  func.func @_bottleneck_kernel(%arg0: i32, %arg1: memref<1x16x16x4xf32, #tpu.memory_space<vmem>>, %arg2: memref<4x2xbf16, #tpu.memory_space<vmem>>, %arg3: memref<1x2xf32, #tpu.memory_space<vmem>>, %arg4: memref<3x6x4xbf16, #tpu.memory_space<vmem>>, %arg5: memref<1x4xf32, #tpu.memory_space<vmem>>, %arg6: memref<1x16x16x4xf32, #tpu.memory_space<vmem>>, %arg7: memref<18x16x6xbf16, #tpu.memory_space<vmem>>, %arg8: memref<256x4xf32, #tpu.memory_space<vmem>>) attributes {dimension_semantics = [#tpu.dimension_semantics<parallel>], iteration_bounds = array<i64: 2>, scalar_prefetch = 0 : i64, scratch_operands = 2 : i64, tpu.core_type = #tpu.core_type<tc>, window_params = [{transform_indices = @transform_0, window_bounds = array<i64: 1, 16, 16, 4>}, {pipeline_mode = #tpu.pipeline_mode<synchronous>, transform_indices = @transform_1, window_bounds = array<i64: 4, 2>}, {pipeline_mode = #tpu.pipeline_mode<synchronous>, transform_indices = @transform_2, window_bounds = array<i64: 1, 2>}, {pipeline_mode = #tpu.pipeline_mode<synchronous>, transform_indices = @transform_3, window_bounds = array<i64: 3, 6, 4>}, {pipeline_mode = #tpu.pipeline_mode<synchronous>, transform_indices = @transform_4, window_bounds = array<i64: 1, 4>}, {transform_indices = @transform_5, window_bounds = array<i64: 1, 16, 16, 4>}]} {
    %cst = arith.constant 0.000000e+00 : bf16
    %0 = vector.broadcast %cst : bf16 to vector<16x6xbf16>
    %c0 = arith.constant 0 : index
    %c0_0 = arith.constant 0 : index
    %c0_1 = arith.constant 0 : index
    %1 = vector.load %arg7[%c0, %c0_0, %c0_1] : memref<18x16x6xbf16, #tpu.memory_space<vmem>>, vector<1x16x6xbf16>
    %2 = vector.shape_cast %1 : vector<1x16x6xbf16> to vector<16x6xbf16>
    %3 = vector.shape_cast %0 : vector<16x6xbf16> to vector<1x16x6xbf16>
    tpu.vector_store %arg7[%c0, %c0_0, %c0_1], %3 {strides = array<i32>} : memref<18x16x6xbf16, #tpu.memory_space<vmem>>, vector<1x16x6xbf16>,
    %c17 = arith.constant 17 : index
    %c0_2 = arith.constant 0 : index
    %c0_3 = arith.constant 0 : index
    %4 = vector.load %arg7[%c17, %c0_2, %c0_3] : memref<18x16x6xbf16, #tpu.memory_space<vmem>>, vector<1x16x6xbf16>
    %5 = vector.shape_cast %4 : vector<1x16x6xbf16> to vector<16x6xbf16>
    %6 = vector.shape_cast %0 : vector<16x6xbf16> to vector<1x16x6xbf16>
    tpu.vector_store %arg7[%c17, %c0_2, %c0_3], %6 {strides = array<i32>} : memref<18x16x6xbf16, #tpu.memory_space<vmem>>, vector<1x16x6xbf16>,
    %c0_4 = arith.constant 0 : index
    %c0_5 = arith.constant 0 : index
    %c0_6 = arith.constant 0 : index
    %c0_7 = arith.constant 0 : index
    %7 = vector.load %arg1[%c0_4, %c0_5, %c0_6, %c0_7] : memref<1x16x16x4xf32, #tpu.memory_space<vmem>>, vector<1x16x16x4xf32>
    %8 = vector.shape_cast %7 : vector<1x16x16x4xf32> to vector<16x16x4xf32>
    %9 = vector.shape_cast %8 : vector<16x16x4xf32> to vector<256x4xf32>
    %10 = arith.truncf %9 : vector<256x4xf32> to vector<256x4xbf16>
    %c0_8 = arith.constant 0 : index
    %c0_9 = arith.constant 0 : index
    %11 = vector.load %arg2[%c0_8, %c0_9] : memref<4x2xbf16, #tpu.memory_space<vmem>>, vector<4x2xbf16>
    %cst_10 = arith.constant dense<0.000000e+00> : vector<256x2xf32>
    %12 = tpu.matmul %10, %11, %cst_10 {dimension_numbers = #tpu.dot_dimension_numbers<[1], [0], [0], [1], [0, 0, 1, 1], [], []>} : vector<256x4xbf16>, vector<4x2xbf16>, vector<256x2xf32> -> vector<256x2xf32>
    %c0_11 = arith.constant 0 : index
    %c0_12 = arith.constant 0 : index
    %13 = vector.load %arg3[%c0_11, %c0_12] : memref<1x2xf32, #tpu.memory_space<vmem>>, vector<1x2xf32>
    %14 = vector.broadcast %13 : vector<1x2xf32> to vector<256x2xf32>
    %15 = arith.addf %12, %14 : vector<256x2xf32>
    %16 = arith.negf %15 : vector<256x2xf32>
    %17 = math.exp %16 : vector<256x2xf32>
    %cst_13 = arith.constant 1.000000e+00 : f32
    %18 = vector.broadcast %cst_13 : f32 to vector<256x2xf32>
    %19 = arith.addf %18, %17 : vector<256x2xf32>
    %20 = arith.divf %18, %19 : vector<256x2xf32>
    %21 = arith.mulf %15, %20 : vector<256x2xf32>
    %22 = vector.shape_cast %21 : vector<256x2xf32> to vector<16x16x2xf32>
    %23 = arith.truncf %22 : vector<16x16x2xf32> to vector<16x16x2xbf16>
    %cst_14 = arith.constant 0.000000e+00 : bf16
    %24 = vector.broadcast %cst_14 : bf16 to vector<16x1x2xbf16>
    %25 = vector.extract_strided_slice %23 {offsets = [0, 0, 0], sizes = [16, 15, 2], strides = [1, 1, 1]} : vector<16x16x2xbf16> to vector<16x15x2xbf16>
    %26 = tpu.concatenate %24, %25 in 1 : vector<16x1x2xbf16>, vector<16x15x2xbf16> -> vector<16x16x2xbf16>
    %27 = vector.extract_strided_slice %23 {offsets = [0, 1, 0], sizes = [16, 15, 2], strides = [1, 1, 1]} : vector<16x16x2xbf16> to vector<16x15x2xbf16>
    %28 = tpu.concatenate %27, %24 in 1 : vector<16x15x2xbf16>, vector<16x1x2xbf16> -> vector<16x16x2xbf16>
    %29 = tpu.concatenate %26, %23, %28 in 2 : vector<16x16x2xbf16>, vector<16x16x2xbf16>, vector<16x16x2xbf16> -> vector<16x16x6xbf16>
    %c1 = arith.constant 1 : index
    %c0_15 = arith.constant 0 : index
    %c0_16 = arith.constant 0 : index
    %30 = vector.load %arg7[%c1, %c0_15, %c0_16] : memref<18x16x6xbf16, #tpu.memory_space<vmem>>, vector<16x16x6xbf16>
    tpu.vector_store %arg7[%c1, %c0_15, %c0_16], %29 {strides = array<i32>} : memref<18x16x6xbf16, #tpu.memory_space<vmem>>, vector<16x16x6xbf16>,
    %c0_17 = arith.constant 0 : index
    %c0_18 = arith.constant 0 : index
    %c0_19 = arith.constant 0 : index
    %31 = vector.load %arg7[%c0_17, %c0_18, %c0_19] : memref<18x16x6xbf16, #tpu.memory_space<vmem>>, vector<16x16x6xbf16>
    %32 = vector.shape_cast %31 : vector<16x16x6xbf16> to vector<256x6xbf16>
    %c0_20 = arith.constant 0 : index
    %c0_21 = arith.constant 0 : index
    %c0_22 = arith.constant 0 : index
    %33 = vector.load %arg4[%c0_20, %c0_21, %c0_22] : memref<3x6x4xbf16, #tpu.memory_space<vmem>>, vector<1x6x4xbf16>
    %34 = vector.shape_cast %33 : vector<1x6x4xbf16> to vector<6x4xbf16>
    %cst_23 = arith.constant dense<0.000000e+00> : vector<256x4xf32>
    %35 = tpu.matmul %32, %34, %cst_23 {dimension_numbers = #tpu.dot_dimension_numbers<[1], [0], [0], [1], [0, 0, 1, 1], [], []>} : vector<256x6xbf16>, vector<6x4xbf16>, vector<256x4xf32> -> vector<256x4xf32>
    %c0_24 = arith.constant 0 : index
    %c0_25 = arith.constant 0 : index
    %36 = vector.load %arg8[%c0_24, %c0_25] : memref<256x4xf32, #tpu.memory_space<vmem>>, vector<256x4xf32>
    tpu.vector_store %arg8[%c0_24, %c0_25], %35 {strides = array<i32>} : memref<256x4xf32, #tpu.memory_space<vmem>>, vector<256x4xf32>,
    %c0_26 = arith.constant 0 : index
    %c0_27 = arith.constant 0 : index
    %37 = vector.load %arg8[%c0_26, %c0_27] : memref<256x4xf32, #tpu.memory_space<vmem>>, vector<256x4xf32>
    %c1_28 = arith.constant 1 : index
    %c0_29 = arith.constant 0 : index
    %c0_30 = arith.constant 0 : index
    %38 = vector.load %arg7[%c1_28, %c0_29, %c0_30] : memref<18x16x6xbf16, #tpu.memory_space<vmem>>, vector<16x16x6xbf16>
    %39 = vector.shape_cast %38 : vector<16x16x6xbf16> to vector<256x6xbf16>
    %c1_31 = arith.constant 1 : index
    %c0_32 = arith.constant 0 : index
    %c0_33 = arith.constant 0 : index
    %40 = vector.load %arg4[%c1_31, %c0_32, %c0_33] : memref<3x6x4xbf16, #tpu.memory_space<vmem>>, vector<1x6x4xbf16>
    %41 = vector.shape_cast %40 : vector<1x6x4xbf16> to vector<6x4xbf16>
    %cst_34 = arith.constant dense<0.000000e+00> : vector<256x4xf32>
    %42 = tpu.matmul %39, %41, %cst_34 {dimension_numbers = #tpu.dot_dimension_numbers<[1], [0], [0], [1], [0, 0, 1, 1], [], []>} : vector<256x6xbf16>, vector<6x4xbf16>, vector<256x4xf32> -> vector<256x4xf32>
    %43 = arith.addf %37, %42 : vector<256x4xf32>
    %c0_35 = arith.constant 0 : index
    %c0_36 = arith.constant 0 : index
    %44 = vector.load %arg8[%c0_35, %c0_36] : memref<256x4xf32, #tpu.memory_space<vmem>>, vector<256x4xf32>
    tpu.vector_store %arg8[%c0_35, %c0_36], %43 {strides = array<i32>} : memref<256x4xf32, #tpu.memory_space<vmem>>, vector<256x4xf32>,
    %c0_37 = arith.constant 0 : index
    %c0_38 = arith.constant 0 : index
    %45 = vector.load %arg8[%c0_37, %c0_38] : memref<256x4xf32, #tpu.memory_space<vmem>>, vector<256x4xf32>
    %c2 = arith.constant 2 : index
    %c0_39 = arith.constant 0 : index
    %c0_40 = arith.constant 0 : index
    %46 = vector.load %arg7[%c2, %c0_39, %c0_40] : memref<18x16x6xbf16, #tpu.memory_space<vmem>>, vector<16x16x6xbf16>
    %47 = vector.shape_cast %46 : vector<16x16x6xbf16> to vector<256x6xbf16>
    %c2_41 = arith.constant 2 : index
    %c0_42 = arith.constant 0 : index
    %c0_43 = arith.constant 0 : index
    %48 = vector.load %arg4[%c2_41, %c0_42, %c0_43] : memref<3x6x4xbf16, #tpu.memory_space<vmem>>, vector<1x6x4xbf16>
    %49 = vector.shape_cast %48 : vector<1x6x4xbf16> to vector<6x4xbf16>
    %cst_44 = arith.constant dense<0.000000e+00> : vector<256x4xf32>
    %50 = tpu.matmul %47, %49, %cst_44 {dimension_numbers = #tpu.dot_dimension_numbers<[1], [0], [0], [1], [0, 0, 1, 1], [], []>} : vector<256x6xbf16>, vector<6x4xbf16>, vector<256x4xf32> -> vector<256x4xf32>
    %51 = arith.addf %45, %50 : vector<256x4xf32>
    %c0_45 = arith.constant 0 : index
    %c0_46 = arith.constant 0 : index
    %52 = vector.load %arg8[%c0_45, %c0_46] : memref<256x4xf32, #tpu.memory_space<vmem>>, vector<256x4xf32>
    tpu.vector_store %arg8[%c0_45, %c0_46], %51 {strides = array<i32>} : memref<256x4xf32, #tpu.memory_space<vmem>>, vector<256x4xf32>,
    %c0_47 = arith.constant 0 : index
    %c0_48 = arith.constant 0 : index
    %53 = vector.load %arg8[%c0_47, %c0_48] : memref<256x4xf32, #tpu.memory_space<vmem>>, vector<256x4xf32>
    %c0_49 = arith.constant 0 : index
    %c0_50 = arith.constant 0 : index
    %54 = vector.load %arg5[%c0_49, %c0_50] : memref<1x4xf32, #tpu.memory_space<vmem>>, vector<1x4xf32>
    %55 = vector.broadcast %54 : vector<1x4xf32> to vector<256x4xf32>
    %56 = arith.addf %53, %55 : vector<256x4xf32>
    %57 = arith.negf %56 : vector<256x4xf32>
    %58 = math.exp %57 : vector<256x4xf32>
    %cst_51 = arith.constant 1.000000e+00 : f32
    %59 = vector.broadcast %cst_51 : f32 to vector<256x4xf32>
    %60 = arith.addf %59, %58 : vector<256x4xf32>
    %61 = arith.divf %59, %60 : vector<256x4xf32>
    %62 = arith.mulf %56, %61 : vector<256x4xf32>
    %63 = arith.addf %62, %9 : vector<256x4xf32>
    %64 = vector.shape_cast %63 : vector<256x4xf32> to vector<16x16x4xf32>
    %c0_52 = arith.constant 0 : index
    %c0_53 = arith.constant 0 : index
    %c0_54 = arith.constant 0 : index
    %c0_55 = arith.constant 0 : index
    %65 = vector.load %arg6[%c0_52, %c0_53, %c0_54, %c0_55] : memref<1x16x16x4xf32, #tpu.memory_space<vmem>>, vector<1x16x16x4xf32>
    %66 = vector.shape_cast %65 : vector<1x16x16x4xf32> to vector<16x16x4xf32>
    %67 = vector.shape_cast %64 : vector<16x16x4xf32> to vector<1x16x16x4xf32>
    tpu.vector_store %arg6[%c0_52, %c0_53, %c0_54, %c0_55], %67 {strides = array<i32>} : memref<1x16x16x4xf32, #tpu.memory_space<vmem>>, vector<1x16x16x4xf32>,
    return
  }
  func.func @transform_0(%arg0: i32) -> (i32, i32, i32, i32) {
    %c0_i32 = arith.constant 0 : i32
    %c0_i32_0 = arith.constant 0 : i32
    %c0_i32_1 = arith.constant 0 : i32
    %c0_i32_2 = arith.constant 0 : i32
    return %arg0, %c0_i32, %c0_i32_0, %c0_i32_1 : i32, i32, i32, i32
  }
  func.func @transform_1(%arg0: i32) -> (i32, i32) {
    %c0_i32 = arith.constant 0 : i32
    %c0_i32_0 = arith.constant 0 : i32
    %c0_i32_1 = arith.constant 0 : i32
    return %c0_i32, %c0_i32_0 : i32, i32
  }
  func.func @transform_2(%arg0: i32) -> (i32, i32) {
    %c0_i32 = arith.constant 0 : i32
    %c0_i32_0 = arith.constant 0 : i32
    %c0_i32_1 = arith.constant 0 : i32
    return %c0_i32, %c0_i32_0 : i32, i32
  }
  func.func @transform_3(%arg0: i32) -> (i32, i32, i32) {
    %c0_i32 = arith.constant 0 : i32
    %c0_i32_0 = arith.constant 0 : i32
    %c0_i32_1 = arith.constant 0 : i32
    %c0_i32_2 = arith.constant 0 : i32
    return %c0_i32, %c0_i32_0, %c0_i32_1 : i32, i32, i32
  }
  func.func @transform_4(%arg0: i32) -> (i32, i32) {
    %c0_i32 = arith.constant 0 : i32
    %c0_i32_0 = arith.constant 0 : i32
    %c0_i32_1 = arith.constant 0 : i32
    return %c0_i32, %c0_i32_0 : i32, i32
  }
  func.func @transform_5(%arg0: i32) -> (i32, i32, i32, i32) {
    %c0_i32 = arith.constant 0 : i32
    %c0_i32_0 = arith.constant 0 : i32
    %c0_i32_1 = arith.constant 0 : i32
    %c0_i32_2 = arith.constant 0 : i32
    return %arg0, %c0_i32, %c0_i32_0, %c0_i32_1 : i32, i32, i32, i32
  }
}

</mosaic_0001>

<llo_original>
// kernel: tpu_custom_call.1
$region0: #{tpu_custom_call.1}
  #allocation0 [shape = 'u32[]', space=smem, size = 0x4, offset = 0x4, fixed_abs, tag = 'smem constant byte address 0x4 - core index']
  #allocation1 [shape = 'u32[72,128]{1,0:T(1,128)}', space=vmem, size = 0x9000, scoped, tag = 'internal scratch']
  #allocation2 [shape = 'bf16[18,16,6]{2,1,0:T(8,128)(2,1)}', space=vmem, size = 0x12000, scoped, tag = 'scratch operand']
  #allocation3 [shape = 'f32[256,4]{1,0:T(8,128)}', space=vmem, size = 0x20000, scoped, tag = 'scratch operand']
  %s0 = inlined_call_operand.vmem [shape: f32[2,16,16,4], index: 0, kind: input, shape index: {}]
  %s1 = inlined_call_operand.vmem [shape: bf16[4,2], index: 1, kind: input, shape index: {}]
  %s2 = inlined_call_operand.vmem [shape: f32[1,2], index: 2, kind: input, shape index: {}]
  %s3 = inlined_call_operand.vmem [shape: bf16[3,6,4], index: 3, kind: input, shape index: {}]
  %s4 = inlined_call_operand.vmem [shape: f32[1,4], index: 4, kind: input, shape index: {}]
  %s5 = inlined_call_operand.vmem [shape: f32[2,16,16,4], index: 5, kind: output, shape index: {}]
  %s6 = sld [smem:[#allocation0]]
  $region53: #{tpu_custom_call.1} parent=0
    _
  %s8 = ssub.s32 1, %s6
  %s9 = scalar_select 0, %s8, %s6
  loop: start=0, step=1, limit=4
  $region2: #{tpu_custom_call.1} parent=0 // loop_pre_header
    _
  $region3: #{tpu_custom_call.1} parent=0 // loop_header
    %s11 = sphi 0, %s15
    %p12 = scmp.ge.s32.totalorder %s11, 4
    %s21 = sphi 0, %s23
    %s24 = sphi 0, %s21
    %s25 = sphi 0, %s24
    %s41 = sphi 0, %s25
    %s45 = sphi 0, %s45
    %s47 = sphi 0, %s45
    %s48 = sphi 0, %s47
    %s62 = sphi 0, %s48
    %s66 = sphi 0, %s66
    %s68 = sphi 0, %s66
    %s69 = sphi 0, %s68
    %s83 = sphi 0, %s69
    %s87 = sphi 0, %s87
    %s89 = sphi 0, %s87
    %s90 = sphi 0, %s89
    %s104 = sphi 0, %s90
    %s108 = sphi 0, %s108
    %s110 = sphi 0, %s108
    %s111 = sphi 0, %s110
    %s125 = sphi 0, %s111
    %s131 = sphi 0, %s133
    %s134 = sphi 0, %s131
    %s135 = sphi 0, %s134
    %s151 = sphi 0, %s135
  $region4: #{tpu_custom_call.1} parent=0 // loop_header_branch
    %14 = sbr.rel (%p12) target = $region8
  $region5: #{tpu_custom_call.1} parent=0 // loop_body
    %s16 = ssub.s32 %s11, 1
    %s17 = ssub.s32 %s11, 2
    %s18 = sadd.s32 %s11, 1
    %s19 = ssub.s32 %s11, %s18
    %p20 = scmp.eq.s32.totalorder %s19, 0
    %s22 = sadd.s32 %s21, 1
    %s23 = scalar_select %p20, %s21, %s22
    %p26 = pneg %p20
    %p27 = scmp.eq.s32.totalorder %s11, 1
    %p28 = por %p26, %p27
    %p29 = scmp.ne.s32.totalorder %s21, %s24
    %p30 = scmp.eq.s32.totalorder %s11, 0
    %p31 = por %p29, %p30
    %p32 = scmp.ne.s32.totalorder %s21, %s24
    %p33 = scmp.eq.s32.totalorder %s16, 1
    %p34 = por %p32, %p33
    %p35 = scmp.ne.s32.totalorder %s24, %s25
    %p36 = scmp.eq.s32.totalorder %s16, 0
    %p37 = por %p35, %p36
    %p38 = scmp.ne.s32.totalorder %s24, %s25
    %p39 = scmp.eq.s32.totalorder %s17, 1
    %p40 = por %p38, %p39
    %p42 = scmp.ne.s32.totalorder %s25, %s41
    %p43 = scmp.eq.s32.totalorder %s17, 0
    %p44 = por %p42, %p43
    %s46 = sadd.s32 %s45, 1
    %p49 = scmp.eq.s32.totalorder %s11, 1
    %p50 = scmp.ne.s32.totalorder %s45, %s47
    %p51 = scmp.eq.s32.totalorder %s11, 0
    %p52 = por %p50, %p51
    %p53 = scmp.ne.s32.totalorder %s45, %s47
    %p54 = scmp.eq.s32.totalorder %s16, 1
    %p55 = por %p53, %p54
    %p56 = scmp.ne.s32.totalorder %s47, %s48
    %p57 = scmp.eq.s32.totalorder %s16, 0
    %p58 = por %p56, %p57
    %p59 = scmp.ne.s32.totalorder %s47, %s48
    %p60 = scmp.eq.s32.totalorder %s17, 1
    %p61 = por %p59, %p60
    %p63 = scmp.ne.s32.totalorder %s48, %s62
    %p64 = scmp.eq.s32.totalorder %s17, 0
    %p65 = por %p63, %p64
    %s67 = sadd.s32 %s66, 1
    %p70 = scmp.eq.s32.totalorder %s11, 1
    %p71 = scmp.ne.s32.totalorder %s66, %s68
    %p72 = scmp.eq.s32.totalorder %s11, 0
    %p73 = por %p71, %p72
    %p74 = scmp.ne.s32.totalorder %s66, %s68
    %p75 = scmp.eq.s32.totalorder %s16, 1
    %p76 = por %p74, %p75
    %p77 = scmp.ne.s32.totalorder %s68, %s69
    %p78 = scmp.eq.s32.totalorder %s16, 0
    %p79 = por %p77, %p78
    %p80 = scmp.ne.s32.totalorder %s68, %s69
    %p81 = scmp.eq.s32.totalorder %s17, 1
    %p82 = por %p80, %p81
    %p84 = scmp.ne.s32.totalorder %s69, %s83
    %p85 = scmp.eq.s32.totalorder %s17, 0
    %p86 = por %p84, %p85
    %s88 = sadd.s32 %s87, 1
    %p91 = scmp.eq.s32.totalorder %s11, 1
    %p92 = scmp.ne.s32.totalorder %s87, %s89
    %p93 = scmp.eq.s32.totalorder %s11, 0
    %p94 = por %p92, %p93
    %p95 = scmp.ne.s32.totalorder %s87, %s89
    %p96 = scmp.eq.s32.totalorder %s16, 1
    %p97 = por %p95, %p96
    %p98 = scmp.ne.s32.totalorder %s89, %s90
    %p99 = scmp.eq.s32.totalorder %s16, 0
    %p100 = por %p98, %p99
    %p101 = scmp.ne.s32.totalorder %s89, %s90
    %p102 = scmp.eq.s32.totalorder %s17, 1
    %p103 = por %p101, %p102
    %p105 = scmp.ne.s32.totalorder %s90, %s104
    %p106 = scmp.eq.s32.totalorder %s17, 0
    %p107 = por %p105, %p106
    %s109 = sadd.s32 %s108, 1
    %p112 = scmp.eq.s32.totalorder %s11, 1
    %p113 = scmp.ne.s32.totalorder %s108, %s110
    %p114 = scmp.eq.s32.totalorder %s11, 0
    %p115 = por %p113, %p114
    %p116 = scmp.ne.s32.totalorder %s108, %s110
    %p117 = scmp.eq.s32.totalorder %s16, 1
    %p118 = por %p116, %p117
    %p119 = scmp.ne.s32.totalorder %s110, %s111
    %p120 = scmp.eq.s32.totalorder %s16, 0
    %p121 = por %p119, %p120
    %p122 = scmp.ne.s32.totalorder %s110, %s111
    %p123 = scmp.eq.s32.totalorder %s17, 1
    %p124 = por %p122, %p123
    %p126 = scmp.ne.s32.totalorder %s111, %s125
    %p127 = scmp.eq.s32.totalorder %s17, 0
    %p128 = por %p126, %p127
    %s129 = ssub.s32 %s11, %s18
    %p130 = scmp.eq.s32.totalorder %s129, 0
    %s132 = sadd.s32 %s131, 1
    %s133 = scalar_select %p130, %s131, %s132
    %p136 = pneg %p130
    %p137 = scmp.eq.s32.totalorder %s11, 1
    %p138 = por %p136, %p137
    %p139 = scmp.ne.s32.totalorder %s131, %s134
    %p140 = scmp.eq.s32.totalorder %s11, 0
    %p141 = por %p139, %p140
    %p142 = scmp.ne.s32.totalorder %s131, %s134
    %p143 = scmp.eq.s32.totalorder %s16, 1
    %p144 = por %p142, %p143
    %p145 = scmp.ne.s32.totalorder %s134, %s135
    %p146 = scmp.eq.s32.totalorder %s16, 0
    %p147 = por %p145, %p146
    %p148 = scmp.ne.s32.totalorder %s134, %s135
    %p149 = scmp.eq.s32.totalorder %s17, 1
    %p150 = por %p148, %p149
    %p152 = scmp.ne.s32.totalorder %s135, %s151
    %p153 = scmp.eq.s32.totalorder %s17, 0
    %p154 = por %p152, %p153
    %p155 = scmp.le.s32.totalorder 1, %s11
    %p156 = scmp.lt.s32.totalorder %s11, 3
    %p157 = pnand %p155, %p156
    %p158 = pneg %p157
    // Predicated region
    $region9: #{tpu_custom_call.1} parent=5 // pred_check
      _
    $region10: #{tpu_custom_call.1} parent=5 // pred_check_branch
      %160 = sbr.rel (%p157) target = $region12
    $region11: #{tpu_custom_call.1} parent=5 // pred_region
      %s161 = ssub.s32 %s11, 1
      // Predicated region
      $region13: #{tpu_custom_call.1} parent=11 // pred_check
        %p162 = pneg %p58
      $region14: #{tpu_custom_call.1} parent=11 // pred_check_branch
        %164 = sbr.rel (%p162) target = $region16
      $region15: #{tpu_custom_call.1} parent=11 // pred_region
        _
      $region16: #{tpu_custom_call.1} parent=11 // pred_fallthru
        _
      // Predicated region
      $region17: #{tpu_custom_call.1} parent=11 // pred_check
        %p165 = pneg %p79
      $region18: #{tpu_custom_call.1} parent=11 // pred_check_branch
        %167 = sbr.rel (%p165) target = $region20
      $region19: #{tpu_custom_call.1} parent=11 // pred_region
        _
      $region20: #{tpu_custom_call.1} parent=11 // pred_fallthru
        _
      // Predicated region
      $region21: #{tpu_custom_call.1} parent=11 // pred_check
        %p168 = pneg %p100
      $region22: #{tpu_custom_call.1} parent=11 // pred_check_branch
        %170 = sbr.rel (%p168) target = $region24
      $region23: #{tpu_custom_call.1} parent=11 // pred_region
        _
      $region24: #{tpu_custom_call.1} parent=11 // pred_fallthru
        _
      // Predicated region
      $region25: #{tpu_custom_call.1} parent=11 // pred_check
        %p171 = pneg %p121
      $region26: #{tpu_custom_call.1} parent=11 // pred_check_branch
        %173 = sbr.rel (%p171) target = $region28
      $region27: #{tpu_custom_call.1} parent=11 // pred_region
        _
      $region28: #{tpu_custom_call.1} parent=11 // pred_fallthru
        _
    $region12: #{tpu_custom_call.1} parent=5 // pred_fallthru
      _
    %p174 = scmp.lt.s32.totalorder %s11, 2
    // Predicated region
    $region29: #{tpu_custom_call.1} parent=5 // pred_check
      %p175 = pneg %p174
    $region30: #{tpu_custom_call.1} parent=5 // pred_check_branch
      %177 = sbr.rel (%p175) target = $region32
    $region31: #{tpu_custom_call.1} parent=5 // pred_region
      // Predicated region
      $region33: #{tpu_custom_call.1} parent=31 // pred_check
        %p178 = pneg %p31
      $region34: #{tpu_custom_call.1} parent=31 // pred_check_branch
        %180 = sbr.rel (%p178) target = $region36
      $region35: #{tpu_custom_call.1} parent=31 // pred_region
        %p181 = scmp.lt.s32.totalorder %s11, 1
        %s182 = scalar_select %p181, %s11, 1
        %s183 = smul.addr %s182, 32
        %s184 = smul.addr %s183, 8
        %s185 = scalar_lea.vmem %s0, %s184
      $region36: #{tpu_custom_call.1} parent=31 // pred_fallthru
        _
    $region32: #{tpu_custom_call.1} parent=5 // pred_fallthru
      _
    %p186 = scmp.le.s32.totalorder 1, %s11
    %p187 = scmp.lt.s32.totalorder %s11, 3
    %p188 = pnand %p186, %p187
    %p189 = pneg %p188
    // Predicated region
    $region37: #{tpu_custom_call.1} parent=5 // pred_check
      _
    $region38: #{tpu_custom_call.1} parent=5 // pred_check_branch
      %191 = sbr.rel (%p188) target = $region40
    $region39: #{tpu_custom_call.1} parent=5 // pred_region
      %s192 = ssub.s32 %s11, 1
      %p193 = scmp.lt.s32.totalorder %s16, 1
      %s194 = scalar_select %p193, %s16, 1
      %s195 = smul.addr %s194, 32
      %s196 = smul.addr %s195, 8
      %s197 = scalar_lea.vmem %s0, %s196
      %p198 = pneg %p37
      %p199 = pneg %p34
      %p200 = pneg %p58
      %p201 = pneg %p55
      %p202 = pneg %p79
      %p203 = pneg %p76
      %p204 = pneg %p100
      %p205 = pneg %p97
      %p206 = pneg %p121
      %p207 = pneg %p118
      %p208 = pneg %p147
      %p209 = pneg %p144
      %p210 = scmp.lt.s32.totalorder %s16, 1
      %s211 = scalar_select %p210, %s16, 1
      %s212 = smul.addr %s211, 32
      %s213 = smul.addr %s212, 8
      %s214 = scalar_lea.vmem %s5, %s213
      %p215 = scmp.lt.s32.totalorder %s16, 1
      %s216 = scalar_select %p215, %s16, 1
      %s217 = smul.addr %s216, 32
      %s218 = smul.addr %s217, 8
      %s219 = scalar_lea.vmem %s0, %s218
      %p220 = scmp.lt.s32.totalorder %s16, 1
      %s221 = scalar_select %p220, %s16, 1
      %s222 = smul.addr %s221, 32
      %s223 = smul.addr %s222, 8
      %s224 = scalar_lea.vmem %s5, %s223
      %vm226 = vcmask 44032
      %227 = vst.msk [vmem:[#allocation2] sm:$0xf] %vm226, 0
      %228 = vst.msk [vmem:[#allocation2 + $0x4] sm:$0xf] %vm226, 0
      %s229 = scalar_lea.vmem [#allocation2], 136
      %230 = vst.msk [vmem:[%s229] sm:$0xf] %vm226, 0
      %231 = vst.msk [vmem:[%s229 + $0x4] sm:$0xf] %vm226, 0
      %v232 = vld [vmem:[%s219] sm:$0xff]
      %v233 = vld [vmem:[%s219 + $0x8] sm:$0xff]
      %v234 = vld [vmem:[%s219 + $0x10] sm:$0xff]
      %v235 = vld [vmem:[%s219 + $0x18] sm:$0xff]
      %v236 = vld [vmem:[%s219 + $0x20] sm:$0xff]
      %v237 = vld [vmem:[%s219 + $0x28] sm:$0xff]
      %v238 = vld [vmem:[%s219 + $0x30] sm:$0xff]
      %v239 = vld [vmem:[%s219 + $0x38] sm:$0xff]
      %v240 = vld [vmem:[%s219 + $0x40] sm:$0xff]
      %v241 = vld [vmem:[%s219 + $0x48] sm:$0xff]
      %v242 = vld [vmem:[%s219 + $0x50] sm:$0xff]
      %v243 = vld [vmem:[%s219 + $0x58] sm:$0xff]
      %v244 = vld [vmem:[%s219 + $0x60] sm:$0xff]
      %v245 = vld [vmem:[%s219 + $0x68] sm:$0xff]
      %v246 = vld [vmem:[%s219 + $0x70] sm:$0xff]
      %v247 = vld [vmem:[%s219 + $0x78] sm:$0xff]
      %v248 = vld [vmem:[%s219 + $0x80] sm:$0xff]
      %v249 = vld [vmem:[%s219 + $0x88] sm:$0xff]
      %v250 = vld [vmem:[%s219 + $0x90] sm:$0xff]
      %v251 = vld [vmem:[%s219 + $0x98] sm:$0xff]
      %v252 = vld [vmem:[%s219 + $0xa0] sm:$0xff]
      %v253 = vld [vmem:[%s219 + $0xa8] sm:$0xff]
      %v254 = vld [vmem:[%s219 + $0xb0] sm:$0xff]
      %v255 = vld [vmem:[%s219 + $0xb8] sm:$0xff]
      %v256 = vld [vmem:[%s219 + $0xc0] sm:$0xff]
      %v257 = vld [vmem:[%s219 + $0xc8] sm:$0xff]
      %v258 = vld [vmem:[%s219 + $0xd0] sm:$0xff]
      %v259 = vld [vmem:[%s219 + $0xd8] sm:$0xff]
      %v260 = vld [vmem:[%s219 + $0xe0] sm:$0xff]
      %v261 = vld [vmem:[%s219 + $0xe8] sm:$0xff]
      %v262 = vld [vmem:[%s219 + $0xf0] sm:$0xff]
      %v263 = vld [vmem:[%s219 + $0xf8] sm:$0xff]
      %v264 = vpack.c.bf16 %v233, %v232
      %v265 = vpack.c.bf16 %v235, %v234
      %v266 = vpack.c.bf16 %v237, %v236
      %v267 = vpack.c.bf16 %v239, %v238
      %v268 = vpack.c.bf16 %v241, %v240
      %v269 = vpack.c.bf16 %v243, %v242
      %v270 = vpack.c.bf16 %v245, %v244
      %v271 = vpack.c.bf16 %v247, %v246
      %v272 = vpack.c.bf16 %v249, %v248
      %v273 = vpack.c.bf16 %v251, %v250
      %v274 = vpack.c.bf16 %v253, %v252
      %v275 = vpack.c.bf16 %v255, %v254
      %v276 = vpack.c.bf16 %v257, %v256
      %v277 = vpack.c.bf16 %v259, %v258
      %v278 = vpack.c.bf16 %v261, %v260
      %v279 = vpack.c.bf16 %v263, %v262
      %v280 = vld [vmem:[%s1] sm:$0x3]
      %v281 = vld [vmem:[%s2] sm:$0x1]
      %v283 = vperm.slane %v281, 0
      %vm285 = vcmask 31744
      %v287 = vsel %vm285, %v264, 0
      %v290 = vsel %vm285, %v265, 0
      %v293 = vsel %vm285, %v266, 0
      %v296 = vsel %vm285, %v267, 0
      %v299 = vsel %vm285, %v268, 0
      %v302 = vsel %vm285, %v269, 0
      %v305 = vsel %vm285, %v270, 0
      %v308 = vsel %vm285, %v271, 0
      %v311 = vsel %vm285, %v272, 0
      %v314 = vsel %vm285, %v273, 0
      %v317 = vsel %vm285, %v274, 0
      %v320 = vsel %vm285, %v275, 0
      %v323 = vsel %vm285, %v276, 0
      %v326 = vsel %vm285, %v277, 0
      %v329 = vsel %vm285, %v278, 0
      %v332 = vsel %vm285, %v279, 0
      %vm334 = vcmask 1041408
      %v336 = vsel %vm334, %v280, 0
      %338 = vmatpush.bf16.msra.mxu0 0
      %339 = vmatpush.bf16.msra.mxu0 0
      %340 = vmatpush.bf16.msra.mxu0 0
      %341 = vmatpush.bf16.msra.mxu0 0
      %342 = vmatpush.bf16.msra.mxu0 0
      %343 = vmatpush.bf16.msra.mxu0 0
      %344 = vmatpush.bf16.msra.mxu0 0
      %345 = vmatpush.bf16.msra.mxu0 %v336
      %346 = vmatmul.bf16.gmra.mxu0 %v287
      %v347 = vpop.f32.mrf.mxu0
      %v348 = vadd.f32 %v283, %v347
      %v349 = vpop.f32.mrf.mxu0
      %v350 = vadd.f32 %v283, %v349
      %351 = vmatmul.bf16.gmra.mxu0 %v290
      %v352 = vpop.f32.mrf.mxu0
      %v353 = vadd.f32 %v283, %v352
      %v354 = vpop.f32.mrf.mxu0
      %v355 = vadd.f32 %v283, %v354
      %356 = vmatmul.bf16.gmra.mxu0 %v293
      %v357 = vpop.f32.mrf.mxu0
      %v358 = vadd.f32 %v283, %v357
      %v359 = vpop.f32.mrf.mxu0
      %v360 = vadd.f32 %v283, %v359
      %361 = vmatmul.bf16.gmra.mxu0 %v296
      %v362 = vpop.f32.mrf.mxu0
      %v363 = vadd.f32 %v283, %v362
      %v364 = vpop.f32.mrf.mxu0
      %v365 = vadd.f32 %v283, %v364
      %366 = vmatmul.bf16.gmra.mxu0 %v299
      %v367 = vpop.f32.mrf.mxu0
      %v368 = vadd.f32 %v283, %v367
      %v369 = vpop.f32.mrf.mxu0
      %v370 = vadd.f32 %v283, %v369
      %371 = vmatmul.bf16.gmra.mxu0 %v302
      %v372 = vpop.f32.mrf.mxu0
      %v373 = vadd.f32 %v283, %v372
      %v374 = vpop.f32.mrf.mxu0
      %v375 = vadd.f32 %v283, %v374
      %376 = vmatmul.bf16.gmra.mxu0 %v305
      %v377 = vpop.f32.mrf.mxu0
      %v378 = vadd.f32 %v283, %v377
      %v379 = vpop.f32.mrf.mxu0
      %v380 = vadd.f32 %v283, %v379
      %381 = vmatmul.bf16.gmra.mxu0 %v308
      %v382 = vpop.f32.mrf.mxu0
      %v383 = vadd.f32 %v283, %v382
      %v384 = vpop.f32.mrf.mxu0
      %v385 = vadd.f32 %v283, %v384
      %386 = vmatmul.bf16.gmra.mxu0 %v311
      %v387 = vpop.f32.mrf.mxu0
      %v388 = vadd.f32 %v283, %v387
      %v389 = vpop.f32.mrf.mxu0
      %v390 = vadd.f32 %v283, %v389
      %391 = vmatmul.bf16.gmra.mxu0 %v314
      %v392 = vpop.f32.mrf.mxu0
      %v393 = vadd.f32 %v283, %v392
      %v394 = vpop.f32.mrf.mxu0
      %v395 = vadd.f32 %v283, %v394
      %396 = vmatmul.bf16.gmra.mxu0 %v317
      %v397 = vpop.f32.mrf.mxu0
      %v398 = vadd.f32 %v283, %v397
      %v399 = vpop.f32.mrf.mxu0
      %v400 = vadd.f32 %v283, %v399
      %401 = vmatmul.bf16.gmra.mxu0 %v320
      %v402 = vpop.f32.mrf.mxu0
      %v403 = vadd.f32 %v283, %v402
      %v404 = vpop.f32.mrf.mxu0
      %v405 = vadd.f32 %v283, %v404
      %406 = vmatmul.bf16.gmra.mxu0 %v323
      %v407 = vpop.f32.mrf.mxu0
      %v408 = vadd.f32 %v283, %v407
      %v409 = vpop.f32.mrf.mxu0
      %v410 = vadd.f32 %v283, %v409
      %411 = vmatmul.bf16.gmra.mxu0 %v326
      %v412 = vpop.f32.mrf.mxu0
      %v413 = vadd.f32 %v283, %v412
      %v414 = vpop.f32.mrf.mxu0
      %v415 = vadd.f32 %v283, %v414
      %416 = vmatmul.bf16.gmra.mxu0 %v329
      %v417 = vpop.f32.mrf.mxu0
      %v418 = vadd.f32 %v283, %v417
      %v419 = vpop.f32.mrf.mxu0
      %v420 = vadd.f32 %v283, %v419
      %421 = vmatmul.bf16.gmra.mxu0 %v332
      %v422 = vpop.f32.mrf.mxu0
      %v423 = vadd.f32 %v283, %v422
      %v424 = vpop.f32.mrf.mxu0
      %v425 = vadd.f32 %v283, %v424
      %426 = vdwg.mxu0
      %v427 = vxor.u32 %v348, 2147483648
      %v428 = vxor.u32 %v350, 2147483648
      %v429 = vxor.u32 %v353, 2147483648
      %v430 = vxor.u32 %v355, 2147483648
      %v431 = vxor.u32 %v358, 2147483648
      %v432 = vxor.u32 %v360, 2147483648
      %v433 = vxor.u32 %v363, 2147483648
      %v434 = vxor.u32 %v365, 2147483648
      %v435 = vxor.u32 %v368, 2147483648
      %v436 = vxor.u32 %v370, 2147483648
      %v437 = vxor.u32 %v373, 2147483648
      %v438 = vxor.u32 %v375, 2147483648
      %v439 = vxor.u32 %v378, 2147483648
      %v440 = vxor.u32 %v380, 2147483648
      %v441 = vxor.u32 %v383, 2147483648
      %v442 = vxor.u32 %v385, 2147483648
      %v443 = vxor.u32 %v388, 2147483648
      %v444 = vxor.u32 %v390, 2147483648
      %v445 = vxor.u32 %v393, 2147483648
      %v446 = vxor.u32 %v395, 2147483648
      %v447 = vxor.u32 %v398, 2147483648
      %v448 = vxor.u32 %v400, 2147483648
      %v449 = vxor.u32 %v403, 2147483648
      %v450 = vxor.u32 %v405, 2147483648
      %v451 = vxor.u32 %v408, 2147483648
      %v452 = vxor.u32 %v410, 2147483648
      %v453 = vxor.u32 %v413, 2147483648
      %v454 = vxor.u32 %v415, 2147483648
      %v455 = vxor.u32 %v418, 2147483648
      %v456 = vxor.u32 %v420, 2147483648
      %v457 = vxor.u32 %v423, 2147483648
      %v458 = vxor.u32 %v425, 2147483648
      %v459 = vmul.f32 %v427, 1.442695
      %v460 = vpow.pop %v459
      %v461 = vmul.f32 %v428, 1.442695
      %v462 = vpow.pop %v461
      %v463 = vmul.f32 %v429, 1.442695
      %v464 = vpow.pop %v463
      %v465 = vmul.f32 %v430, 1.442695
      %v466 = vpow.pop %v465
      %v467 = vmul.f32 %v431, 1.442695
      %v468 = vpow.pop %v467
      %v469 = vmul.f32 %v432, 1.442695
      %v470 = vpow.pop %v469
      %v471 = vmul.f32 %v433, 1.442695
      %v472 = vpow.pop %v471
      %v473 = vmul.f32 %v434, 1.442695
      %v474 = vpow.pop %v473
      %v475 = vmul.f32 %v435, 1.442695
      %v476 = vpow.pop %v475
      %v477 = vmul.f32 %v436, 1.442695
      %v478 = vpow.pop %v477
      %v479 = vmul.f32 %v437, 1.442695
      %v480 = vpow.pop %v479
      %v481 = vmul.f32 %v438, 1.442695
      %v482 = vpow.pop %v481
      %v483 = vmul.f32 %v439, 1.442695
      %v484 = vpow.pop %v483
      %v485 = vmul.f32 %v440, 1.442695
      %v486 = vpow.pop %v485
      %v487 = vmul.f32 %v441, 1.442695
      %v488 = vpow.pop %v487
      %v489 = vmul.f32 %v442, 1.442695
      %v490 = vpow.pop %v489
      %v491 = vmul.f32 %v443, 1.442695
      %v492 = vpow.pop %v491
      %v493 = vmul.f32 %v444, 1.442695
      %v494 = vpow.pop %v493
      %v495 = vmul.f32 %v445, 1.442695
      %v496 = vpow.pop %v495
      %v497 = vmul.f32 %v446, 1.442695
      %v498 = vpow.pop %v497
      %v499 = vmul.f32 %v447, 1.442695
      %v500 = vpow.pop %v499
      %v501 = vmul.f32 %v448, 1.442695
      %v502 = vpow.pop %v501
      %v503 = vmul.f32 %v449, 1.442695
      %v504 = vpow.pop %v503
      %v505 = vmul.f32 %v450, 1.442695
      %v506 = vpow.pop %v505
      %v507 = vmul.f32 %v451, 1.442695
      %v508 = vpow.pop %v507
      %v509 = vmul.f32 %v452, 1.442695
      %v510 = vpow.pop %v509
      %v511 = vmul.f32 %v453, 1.442695
      %v512 = vpow.pop %v511
      %v513 = vmul.f32 %v454, 1.442695
      %v514 = vpow.pop %v513
      %v515 = vmul.f32 %v455, 1.442695
      %v516 = vpow.pop %v515
      %v517 = vmul.f32 %v456, 1.442695
      %v518 = vpow.pop %v517
      %v519 = vmul.f32 %v457, 1.442695
      %v520 = vpow.pop %v519
      %v521 = vmul.f32 %v458, 1.442695
      %v522 = vpow.pop %v521
      %v523 = vadd.f32 %v460, 1.0
      %v524 = vadd.f32 %v462, 1.0
      %v525 = vadd.f32 %v464, 1.0
      %v526 = vadd.f32 %v466, 1.0
      %v527 = vadd.f32 %v468, 1.0
      %v528 = vadd.f32 %v470, 1.0
      %v529 = vadd.f32 %v472, 1.0
      %v530 = vadd.f32 %v474, 1.0
      %v531 = vadd.f32 %v476, 1.0
      %v532 = vadd.f32 %v478, 1.0
      %v533 = vadd.f32 %v480, 1.0
      %v534 = vadd.f32 %v482, 1.0
      %v535 = vadd.f32 %v484, 1.0
      %v536 = vadd.f32 %v486, 1.0
      %v537 = vadd.f32 %v488, 1.0
      %v538 = vadd.f32 %v490, 1.0
      %v539 = vadd.f32 %v492, 1.0
      %v540 = vadd.f32 %v494, 1.0
      %v541 = vadd.f32 %v496, 1.0
      %v542 = vadd.f32 %v498, 1.0
      %v543 = vadd.f32 %v500, 1.0
      %v544 = vadd.f32 %v502, 1.0
      %v545 = vadd.f32 %v504, 1.0
      %v546 = vadd.f32 %v506, 1.0
      %v547 = vadd.f32 %v508, 1.0
      %v548 = vadd.f32 %v510, 1.0
      %v549 = vadd.f32 %v512, 1.0
      %v550 = vadd.f32 %v514, 1.0
      %v551 = vadd.f32 %v516, 1.0
      %v552 = vadd.f32 %v518, 1.0
      %v553 = vadd.f32 %v520, 1.0
      %v554 = vadd.f32 %v522, 1.0
      %v555 = vrcp.pop %v523
      %v556 = vmul.f32 %v523, %v555
      %v557 = vsub.f32 1.0, %v556
      %v558 = vmul.f32 %v555, %v557
      %v559 = vadd.f32 %v555, %v558
      %vm560 = vweird.f32 %v523
      %vm561 = vweird.f32 %v555
      %vm562 = vmor %vm560, %vm561
      %v563 = vsel %vm562, %v555, %v559
      %v564 = vand.u32 2147483647, %v523
      %vm565 = vcmp.eq.f32.partialorder %v564, 8.507059e+37
      %v566 = vand.u32 %v523, 2147483648
      %v567 = vor.u32 1.1754944e-38, %v566
      %v568 = vsel %vm565, %v567, %v563
      %v569 = vmul.f32 1.0, %v568
      %v570 = vrcp.pop %v524
      %v571 = vmul.f32 %v524, %v570
      %v572 = vsub.f32 1.0, %v571
      %v573 = vmul.f32 %v570, %v572
      %v574 = vadd.f32 %v570, %v573
      %vm575 = vweird.f32 %v524
      %vm576 = vweird.f32 %v570
      %vm577 = vmor %vm575, %vm576
      %v578 = vsel %vm577, %v570, %v574
      %v579 = vand.u32 2147483647, %v524
      %vm580 = vcmp.eq.f32.partialorder %v579, 8.507059e+37
      %v581 = vand.u32 %v524, 2147483648
      %v582 = vor.u32 1.1754944e-38, %v581
      %v583 = vsel %vm580, %v582, %v578
      %v584 = vmul.f32 1.0, %v583
      %v585 = vrcp.pop %v525
      %v586 = vmul.f32 %v525, %v585
      %v587 = vsub.f32 1.0, %v586
      %v588 = vmul.f32 %v585, %v587
      %v589 = vadd.f32 %v585, %v588
      %vm590 = vweird.f32 %v525
      %vm591 = vweird.f32 %v585
      %vm592 = vmor %vm590, %vm591
      %v593 = vsel %vm592, %v585, %v589
      %v594 = vand.u32 2147483647, %v525
      %vm595 = vcmp.eq.f32.partialorder %v594, 8.507059e+37
      %v596 = vand.u32 %v525, 2147483648
      %v597 = vor.u32 1.1754944e-38, %v596
      %v598 = vsel %vm595, %v597, %v593
      %v599 = vmul.f32 1.0, %v598
      %v600 = vrcp.pop %v526
      %v601 = vmul.f32 %v526, %v600
      %v602 = vsub.f32 1.0, %v601
      %v603 = vmul.f32 %v600, %v602
      %v604 = vadd.f32 %v600, %v603
      %vm605 = vweird.f32 %v526
      %vm606 = vweird.f32 %v600
      %vm607 = vmor %vm605, %vm606
      %v608 = vsel %vm607, %v600, %v604
      %v609 = vand.u32 2147483647, %v526
      %vm610 = vcmp.eq.f32.partialorder %v609, 8.507059e+37
      %v611 = vand.u32 %v526, 2147483648
      %v612 = vor.u32 1.1754944e-38, %v611
      %v613 = vsel %vm610, %v612, %v608
      %v614 = vmul.f32 1.0, %v613
      %v615 = vrcp.pop %v527
      %v616 = vmul.f32 %v527, %v615
      %v617 = vsub.f32 1.0, %v616
      %v618 = vmul.f32 %v615, %v617
      %v619 = vadd.f32 %v615, %v618
      %vm620 = vweird.f32 %v527
      %vm621 = vweird.f32 %v615
      %vm622 = vmor %vm620, %vm621
      %v623 = vsel %vm622, %v615, %v619
      %v624 = vand.u32 2147483647, %v527
      %vm625 = vcmp.eq.f32.partialorder %v624, 8.507059e+37
      %v626 = vand.u32 %v527, 2147483648
      %v627 = vor.u32 1.1754944e-38, %v626
      %v628 = vsel %vm625, %v627, %v623
      %v629 = vmul.f32 1.0, %v628
      %v630 = vrcp.pop %v528
      %v631 = vmul.f32 %v528, %v630
      %v632 = vsub.f32 1.0, %v631
      %v633 = vmul.f32 %v630, %v632
      %v634 = vadd.f32 %v630, %v633
      %vm635 = vweird.f32 %v528
      %vm636 = vweird.f32 %v630
      %vm637 = vmor %vm635, %vm636
      %v638 = vsel %vm637, %v630, %v634
      %v639 = vand.u32 2147483647, %v528
      %vm640 = vcmp.eq.f32.partialorder %v639, 8.507059e+37
      %v641 = vand.u32 %v528, 2147483648
      %v642 = vor.u32 1.1754944e-38, %v641
      %v643 = vsel %vm640, %v642, %v638
      %v644 = vmul.f32 1.0, %v643
      %v645 = vrcp.pop %v529
      %v646 = vmul.f32 %v529, %v645
      %v647 = vsub.f32 1.0, %v646
      %v648 = vmul.f32 %v645, %v647
      %v649 = vadd.f32 %v645, %v648
      %vm650 = vweird.f32 %v529
      %vm651 = vweird.f32 %v645
      %vm652 = vmor %vm650, %vm651
      %v653 = vsel %vm652, %v645, %v649
      %v654 = vand.u32 2147483647, %v529
      %vm655 = vcmp.eq.f32.partialorder %v654, 8.507059e+37
      %v656 = vand.u32 %v529, 2147483648
      %v657 = vor.u32 1.1754944e-38, %v656
      %v658 = vsel %vm655, %v657, %v653
      %v659 = vmul.f32 1.0, %v658
      %v660 = vrcp.pop %v530
      %v661 = vmul.f32 %v530, %v660
      %v662 = vsub.f32 1.0, %v661
      %v663 = vmul.f32 %v660, %v662
      %v664 = vadd.f32 %v660, %v663
      %vm665 = vweird.f32 %v530
      %vm666 = vweird.f32 %v660
      %vm667 = vmor %vm665, %vm666
      %v668 = vsel %vm667, %v660, %v664
      %v669 = vand.u32 2147483647, %v530
      %vm670 = vcmp.eq.f32.partialorder %v669, 8.507059e+37
      %v671 = vand.u32 %v530, 2147483648
      %v672 = vor.u32 1.1754944e-38, %v671
      %v673 = vsel %vm670, %v672, %v668
      %v674 = vmul.f32 1.0, %v673
      %v675 = vrcp.pop %v531
      %v676 = vmul.f32 %v531, %v675
      %v677 = vsub.f32 1.0, %v676
      %v678 = vmul.f32 %v675, %v677
      %v679 = vadd.f32 %v675, %v678
      %vm680 = vweird.f32 %v531
      %vm681 = vweird.f32 %v675
      %vm682 = vmor %vm680, %vm681
      %v683 = vsel %vm682, %v675, %v679
      %v684 = vand.u32 2147483647, %v531
      %vm685 = vcmp.eq.f32.partialorder %v684, 8.507059e+37
      %v686 = vand.u32 %v531, 2147483648
      %v687 = vor.u32 1.1754944e-38, %v686
      %v688 = vsel %vm685, %v687, %v683
      %v689 = vmul.f32 1.0, %v688
      %v690 = vrcp.pop %v532
      %v691 = vmul.f32 %v532, %v690
      %v692 = vsub.f32 1.0, %v691
      %v693 = vmul.f32 %v690, %v692
      %v694 = vadd.f32 %v690, %v693
      %vm695 = vweird.f32 %v532
      %vm696 = vweird.f32 %v690
      %vm697 = vmor %vm695, %vm696
      %v698 = vsel %vm697, %v690, %v694
      %v699 = vand.u32 2147483647, %v532
      %vm700 = vcmp.eq.f32.partialorder %v699, 8.507059e+37
      %v701 = vand.u32 %v532, 2147483648
      %v702 = vor.u32 1.1754944e-38, %v701
      %v703 = vsel %vm700, %v702, %v698
      %v704 = vmul.f32 1.0, %v703
      %v705 = vrcp.pop %v533
      %v706 = vmul.f32 %v533, %v705
      %v707 = vsub.f32 1.0, %v706
      %v708 = vmul.f32 %v705, %v707
      %v709 = vadd.f32 %v705, %v708
      %vm710 = vweird.f32 %v533
      %vm711 = vweird.f32 %v705
      %vm712 = vmor %vm710, %vm711
      %v713 = vsel %vm712, %v705, %v709
      %v714 = vand.u32 2147483647, %v533
      %vm715 = vcmp.eq.f32.partialorder %v714, 8.507059e+37
      %v716 = vand.u32 %v533, 2147483648
      %v717 = vor.u32 1.1754944e-38, %v716
      %v718 = vsel %vm715, %v717, %v713
      %v719 = vmul.f32 1.0, %v718
      %v720 = vrcp.pop %v534
      %v721 = vmul.f32 %v534, %v720
      %v722 = vsub.f32 1.0, %v721
      %v723 = vmul.f32 %v720, %v722
      %v724 = vadd.f32 %v720, %v723
      %vm725 = vweird.f32 %v534
      %vm726 = vweird.f32 %v720
      %vm727 = vmor %vm725, %vm726
      %v728 = vsel %vm727, %v720, %v724
      %v729 = vand.u32 2147483647, %v534
      %vm730 = vcmp.eq.f32.partialorder %v729, 8.507059e+37
      %v731 = vand.u32 %v534, 2147483648
      %v732 = vor.u32 1.1754944e-38, %v731
      %v733 = vsel %vm730, %v732, %v728
      %v734 = vmul.f32 1.0, %v733
      %v735 = vrcp.pop %v535
      %v736 = vmul.f32 %v535, %v735
      %v737 = vsub.f32 1.0, %v736
      %v738 = vmul.f32 %v735, %v737
      %v739 = vadd.f32 %v735, %v738
      %vm740 = vweird.f32 %v535
      %vm741 = vweird.f32 %v735
      %vm742 = vmor %vm740, %vm741
      %v743 = vsel %vm742, %v735, %v739
      %v744 = vand.u32 2147483647, %v535
      %vm745 = vcmp.eq.f32.partialorder %v744, 8.507059e+37
      %v746 = vand.u32 %v535, 2147483648
      %v747 = vor.u32 1.1754944e-38, %v746
      %v748 = vsel %vm745, %v747, %v743
      %v749 = vmul.f32 1.0, %v748
      %v750 = vrcp.pop %v536
      %v751 = vmul.f32 %v536, %v750
      %v752 = vsub.f32 1.0, %v751
      %v753 = vmul.f32 %v750, %v752
      %v754 = vadd.f32 %v750, %v753
      %vm755 = vweird.f32 %v536
      %vm756 = vweird.f32 %v750
      %vm757 = vmor %vm755, %vm756
      %v758 = vsel %vm757, %v750, %v754
      %v759 = vand.u32 2147483647, %v536
      %vm760 = vcmp.eq.f32.partialorder %v759, 8.507059e+37
      %v761 = vand.u32 %v536, 2147483648
      %v762 = vor.u32 1.1754944e-38, %v761
      %v763 = vsel %vm760, %v762, %v758
      %v764 = vmul.f32 1.0, %v763
      %v765 = vrcp.pop %v537
      %v766 = vmul.f32 %v537, %v765
      %v767 = vsub.f32 1.0, %v766
      %v768 = vmul.f32 %v765, %v767
      %v769 = vadd.f32 %v765, %v768
      %vm770 = vweird.f32 %v537
      %vm771 = vweird.f32 %v765
      %vm772 = vmor %vm770, %vm771
      %v773 = vsel %vm772, %v765, %v769
      %v774 = vand.u32 2147483647, %v537
      %vm775 = vcmp.eq.f32.partialorder %v774, 8.507059e+37
      %v776 = vand.u32 %v537, 2147483648
      %v777 = vor.u32 1.1754944e-38, %v776
      %v778 = vsel %vm775, %v777, %v773
      %v779 = vmul.f32 1.0, %v778
      %v780 = vrcp.pop %v538
      %v781 = vmul.f32 %v538, %v780
      %v782 = vsub.f32 1.0, %v781
      %v783 = vmul.f32 %v780, %v782
      %v784 = vadd.f32 %v780, %v783
      %vm785 = vweird.f32 %v538
      %vm786 = vweird.f32 %v780
      %vm787 = vmor %vm785, %vm786
      %v788 = vsel %vm787, %v780, %v784
      %v789 = vand.u32 2147483647, %v538
      %vm790 = vcmp.eq.f32.partialorder %v789, 8.507059e+37
      %v791 = vand.u32 %v538, 2147483648
      %v792 = vor.u32 1.1754944e-38, %v791
      %v793 = vsel %vm790, %v792, %v788
      %v794 = vmul.f32 1.0, %v793
      %v795 = vrcp.pop %v539
      %v796 = vmul.f32 %v539, %v795
      %v797 = vsub.f32 1.0, %v796
      %v798 = vmul.f32 %v795, %v797
      %v799 = vadd.f32 %v795, %v798
      %vm800 = vweird.f32 %v539
      %vm801 = vweird.f32 %v795
      %vm802 = vmor %vm800, %vm801
      %v803 = vsel %vm802, %v795, %v799
      %v804 = vand.u32 2147483647, %v539
      %vm805 = vcmp.eq.f32.partialorder %v804, 8.507059e+37
      %v806 = vand.u32 %v539, 2147483648
      %v807 = vor.u32 1.1754944e-38, %v806
      %v808 = vsel %vm805, %v807, %v803
      %v809 = vmul.f32 1.0, %v808
      %v810 = vrcp.pop %v540
      %v811 = vmul.f32 %v540, %v810
      %v812 = vsub.f32 1.0, %v811
      %v813 = vmul.f32 %v810, %v812
      %v814 = vadd.f32 %v810, %v813
      %vm815 = vweird.f32 %v540
      %vm816 = vweird.f32 %v810
      %vm817 = vmor %vm815, %vm816
      %v818 = vsel %vm817, %v810, %v814
      %v819 = vand.u32 2147483647, %v540
      %vm820 = vcmp.eq.f32.partialorder %v819, 8.507059e+37
      %v821 = vand.u32 %v540, 2147483648
      %v822 = vor.u32 1.1754944e-38, %v821
      %v823 = vsel %vm820, %v822, %v818
      %v824 = vmul.f32 1.0, %v823
      %v825 = vrcp.pop %v541
      %v826 = vmul.f32 %v541, %v825
      %v827 = vsub.f32 1.0, %v826
      %v828 = vmul.f32 %v825, %v827
      %v829 = vadd.f32 %v825, %v828
      %vm830 = vweird.f32 %v541
      %vm831 = vweird.f32 %v825
      %vm832 = vmor %vm830, %vm831
      %v833 = vsel %vm832, %v825, %v829
      %v834 = vand.u32 2147483647, %v541
      %vm835 = vcmp.eq.f32.partialorder %v834, 8.507059e+37
      %v836 = vand.u32 %v541, 2147483648
      %v837 = vor.u32 1.1754944e-38, %v836
      %v838 = vsel %vm835, %v837, %v833
      %v839 = vmul.f32 1.0, %v838
      %v840 = vrcp.pop %v542
      %v841 = vmul.f32 %v542, %v840
      %v842 = vsub.f32 1.0, %v841
      %v843 = vmul.f32 %v840, %v842
      %v844 = vadd.f32 %v840, %v843
      %vm845 = vweird.f32 %v542
      %vm846 = vweird.f32 %v840
      %vm847 = vmor %vm845, %vm846
      %v848 = vsel %vm847, %v840, %v844
      %v849 = vand.u32 2147483647, %v542
      %vm850 = vcmp.eq.f32.partialorder %v849, 8.507059e+37
      %v851 = vand.u32 %v542, 2147483648
      %v852 = vor.u32 1.1754944e-38, %v851
      %v853 = vsel %vm850, %v852, %v848
      %v854 = vmul.f32 1.0, %v853
      %v855 = vrcp.pop %v543
      %v856 = vmul.f32 %v543, %v855
      %v857 = vsub.f32 1.0, %v856
      %v858 = vmul.f32 %v855, %v857
      %v859 = vadd.f32 %v855, %v858
      %vm860 = vweird.f32 %v543
      %vm861 = vweird.f32 %v855
      %vm862 = vmor %vm860, %vm861
      %v863 = vsel %vm862, %v855, %v859
      %v864 = vand.u32 2147483647, %v543
      %vm865 = vcmp.eq.f32.partialorder %v864, 8.507059e+37
      %v866 = vand.u32 %v543, 2147483648
      %v867 = vor.u32 1.1754944e-38, %v866
      %v868 = vsel %vm865, %v867, %v863
      %v869 = vmul.f32 1.0, %v868
      %v870 = vrcp.pop %v544
      %v871 = vmul.f32 %v544, %v870
      %v872 = vsub.f32 1.0, %v871
      %v873 = vmul.f32 %v870, %v872
      %v874 = vadd.f32 %v870, %v873
      %vm875 = vweird.f32 %v544
      %vm876 = vweird.f32 %v870
      %vm877 = vmor %vm875, %vm876
      %v878 = vsel %vm877, %v870, %v874
      %v879 = vand.u32 2147483647, %v544
      %vm880 = vcmp.eq.f32.partialorder %v879, 8.507059e+37
      %v881 = vand.u32 %v544, 2147483648
      %v882 = vor.u32 1.1754944e-38, %v881
      %v883 = vsel %vm880, %v882, %v878
      %v884 = vmul.f32 1.0, %v883
      %v885 = vrcp.pop %v545
      %v886 = vmul.f32 %v545, %v885
      %v887 = vsub.f32 1.0, %v886
      %v888 = vmul.f32 %v885, %v887
      %v889 = vadd.f32 %v885, %v888
      %vm890 = vweird.f32 %v545
      %vm891 = vweird.f32 %v885
      %vm892 = vmor %vm890, %vm891
      %v893 = vsel %vm892, %v885, %v889
      %v894 = vand.u32 2147483647, %v545
      %vm895 = vcmp.eq.f32.partialorder %v894, 8.507059e+37
      %v896 = vand.u32 %v545, 2147483648
      %v897 = vor.u32 1.1754944e-38, %v896
      %v898 = vsel %vm895, %v897, %v893
      %v899 = vmul.f32 1.0, %v898
      %v900 = vrcp.pop %v546
      %v901 = vmul.f32 %v546, %v900
      %v902 = vsub.f32 1.0, %v901
      %v903 = vmul.f32 %v900, %v902
      %v904 = vadd.f32 %v900, %v903
      %vm905 = vweird.f32 %v546
      %vm906 = vweird.f32 %v900
      %vm907 = vmor %vm905, %vm906
      %v908 = vsel %vm907, %v900, %v904
      %v909 = vand.u32 2147483647, %v546
      %vm910 = vcmp.eq.f32.partialorder %v909, 8.507059e+37
      %v911 = vand.u32 %v546, 2147483648
      %v912 = vor.u32 1.1754944e-38, %v911
      %v913 = vsel %vm910, %v912, %v908
      %v914 = vmul.f32 1.0, %v913
      %v915 = vrcp.pop %v547
      %v916 = vmul.f32 %v547, %v915
      %v917 = vsub.f32 1.0, %v916
      %v918 = vmul.f32 %v915, %v917
      %v919 = vadd.f32 %v915, %v918
      %vm920 = vweird.f32 %v547
      %vm921 = vweird.f32 %v915
      %vm922 = vmor %vm920, %vm921
      %v923 = vsel %vm922, %v915, %v919
      %v924 = vand.u32 2147483647, %v547
      %vm925 = vcmp.eq.f32.partialorder %v924, 8.507059e+37
      %v926 = vand.u32 %v547, 2147483648
      %v927 = vor.u32 1.1754944e-38, %v926
      %v928 = vsel %vm925, %v927, %v923
      %v929 = vmul.f32 1.0, %v928
      %v930 = vrcp.pop %v548
      %v931 = vmul.f32 %v548, %v930
      %v932 = vsub.f32 1.0, %v931
      %v933 = vmul.f32 %v930, %v932
      %v934 = vadd.f32 %v930, %v933
      %vm935 = vweird.f32 %v548
      %vm936 = vweird.f32 %v930
      %vm937 = vmor %vm935, %vm936
      %v938 = vsel %vm937, %v930, %v934
      %v939 = vand.u32 2147483647, %v548
      %vm940 = vcmp.eq.f32.partialorder %v939, 8.507059e+37
      %v941 = vand.u32 %v548, 2147483648
      %v942 = vor.u32 1.1754944e-38, %v941
      %v943 = vsel %vm940, %v942, %v938
      %v944 = vmul.f32 1.0, %v943
      %v945 = vrcp.pop %v549
      %v946 = vmul.f32 %v549, %v945
      %v947 = vsub.f32 1.0, %v946
      %v948 = vmul.f32 %v945, %v947
      %v949 = vadd.f32 %v945, %v948
      %vm950 = vweird.f32 %v549
      %vm951 = vweird.f32 %v945
      %vm952 = vmor %vm950, %vm951
      %v953 = vsel %vm952, %v945, %v949
      %v954 = vand.u32 2147483647, %v549
      %vm955 = vcmp.eq.f32.partialorder %v954, 8.507059e+37
      %v956 = vand.u32 %v549, 2147483648
      %v957 = vor.u32 1.1754944e-38, %v956
      %v958 = vsel %vm955, %v957, %v953
      %v959 = vmul.f32 1.0, %v958
      %v960 = vrcp.pop %v550
      %v961 = vmul.f32 %v550, %v960
      %v962 = vsub.f32 1.0, %v961
      %v963 = vmul.f32 %v960, %v962
      %v964 = vadd.f32 %v960, %v963
      %vm965 = vweird.f32 %v550
      %vm966 = vweird.f32 %v960
      %vm967 = vmor %vm965, %vm966
      %v968 = vsel %vm967, %v960, %v964
      %v969 = vand.u32 2147483647, %v550
      %vm970 = vcmp.eq.f32.partialorder %v969, 8.507059e+37
      %v971 = vand.u32 %v550, 2147483648
      %v972 = vor.u32 1.1754944e-38, %v971
      %v973 = vsel %vm970, %v972, %v968
      %v974 = vmul.f32 1.0, %v973
      %v975 = vrcp.pop %v551
      %v976 = vmul.f32 %v551, %v975
      %v977 = vsub.f32 1.0, %v976
      %v978 = vmul.f32 %v975, %v977
      %v979 = vadd.f32 %v975, %v978
      %vm980 = vweird.f32 %v551
      %vm981 = vweird.f32 %v975
      %vm982 = vmor %vm980, %vm981
      %v983 = vsel %vm982, %v975, %v979
      %v984 = vand.u32 2147483647, %v551
      %vm985 = vcmp.eq.f32.partialorder %v984, 8.507059e+37
      %v986 = vand.u32 %v551, 2147483648
      %v987 = vor.u32 1.1754944e-38, %v986
      %v988 = vsel %vm985, %v987, %v983
      %v989 = vmul.f32 1.0, %v988
      %v990 = vrcp.pop %v552
      %v991 = vmul.f32 %v552, %v990
      %v992 = vsub.f32 1.0, %v991
      %v993 = vmul.f32 %v990, %v992
      %v994 = vadd.f32 %v990, %v993
      %vm995 = vweird.f32 %v552
      %vm996 = vweird.f32 %v990
      %vm997 = vmor %vm995, %vm996
      %v998 = vsel %vm997, %v990, %v994
      %v999 = vand.u32 2147483647, %v552
      %vm1000 = vcmp.eq.f32.partialorder %v999, 8.507059e+37
      %v1001 = vand.u32 %v552, 2147483648
      %v1002 = vor.u32 1.1754944e-38, %v1001
      %v1003 = vsel %vm1000, %v1002, %v998
      %v1004 = vmul.f32 1.0, %v1003
      %v1005 = vrcp.pop %v553
      %v1006 = vmul.f32 %v553, %v1005
      %v1007 = vsub.f32 1.0, %v1006
      %v1008 = vmul.f32 %v1005, %v1007
      %v1009 = vadd.f32 %v1005, %v1008
      %vm1010 = vweird.f32 %v553
      %vm1011 = vweird.f32 %v1005
      %vm1012 = vmor %vm1010, %vm1011
      %v1013 = vsel %vm1012, %v1005, %v1009
      %v1014 = vand.u32 2147483647, %v553
      %vm1015 = vcmp.eq.f32.partialorder %v1014, 8.507059e+37
      %v1016 = vand.u32 %v553, 2147483648
      %v1017 = vor.u32 1.1754944e-38, %v1016
      %v1018 = vsel %vm1015, %v1017, %v1013
      %v1019 = vmul.f32 1.0, %v1018
      %v1020 = vrcp.pop %v554
      %v1021 = vmul.f32 %v554, %v1020
      %v1022 = vsub.f32 1.0, %v1021
      %v1023 = vmul.f32 %v1020, %v1022
      %v1024 = vadd.f32 %v1020, %v1023
      %vm1025 = vweird.f32 %v554
      %vm1026 = vweird.f32 %v1020
      %vm1027 = vmor %vm1025, %vm1026
      %v1028 = vsel %vm1027, %v1020, %v1024
      %v1029 = vand.u32 2147483647, %v554
      %vm1030 = vcmp.eq.f32.partialorder %v1029, 8.507059e+37
      %v1031 = vand.u32 %v554, 2147483648
      %v1032 = vor.u32 1.1754944e-38, %v1031
      %v1033 = vsel %vm1030, %v1032, %v1028
      %v1034 = vmul.f32 1.0, %v1033
      %v1035 = vmul.f32 %v348, %v569
      %v1036 = vmul.f32 %v350, %v584
      %v1037 = vmul.f32 %v353, %v599
      %v1038 = vmul.f32 %v355, %v614
      %v1039 = vmul.f32 %v358, %v629
      %v1040 = vmul.f32 %v360, %v644
      %v1041 = vmul.f32 %v363, %v659
      %v1042 = vmul.f32 %v365, %v674
      %v1043 = vmul.f32 %v368, %v689
      %v1044 = vmul.f32 %v370, %v704
      %v1045 = vmul.f32 %v373, %v719
      %v1046 = vmul.f32 %v375, %v734
      %v1047 = vmul.f32 %v378, %v749
      %v1048 = vmul.f32 %v380, %v764
      %v1049 = vmul.f32 %v383, %v779
      %v1050 = vmul.f32 %v385, %v794
      %v1051 = vmul.f32 %v388, %v809
      %v1052 = vmul.f32 %v390, %v824
      %v1053 = vmul.f32 %v393, %v839
      %v1054 = vmul.f32 %v395, %v854
      %v1055 = vmul.f32 %v398, %v869
      %v1056 = vmul.f32 %v400, %v884
      %v1057 = vmul.f32 %v403, %v899
      %v1058 = vmul.f32 %v405, %v914
      %v1059 = vmul.f32 %v408, %v929
      %v1060 = vmul.f32 %v410, %v944
      %v1061 = vmul.f32 %v413, %v959
      %v1062 = vmul.f32 %v415, %v974
      %v1063 = vmul.f32 %v418, %v989
      %v1064 = vmul.f32 %v420, %v1004
      %v1065 = vmul.f32 %v423, %v1019
      %v1066 = vmul.f32 %v425, %v1034
      %v1067 = vpack.c.bf16 %v1035, %v1035
      %v1068 = vpack.c.bf16 %v1036, %v1036
      %v1069 = vpack.c.bf16 %v1037, %v1037
      %v1070 = vpack.c.bf16 %v1038, %v1038
      %v1071 = vpack.c.bf16 %v1039, %v1039
      %v1072 = vpack.c.bf16 %v1040, %v1040
      %v1073 = vpack.c.bf16 %v1041, %v1041
      %v1074 = vpack.c.bf16 %v1042, %v1042
      %v1075 = vpack.c.bf16 %v1043, %v1043
      %v1076 = vpack.c.bf16 %v1044, %v1044
      %v1077 = vpack.c.bf16 %v1045, %v1045
      %v1078 = vpack.c.bf16 %v1046, %v1046
      %v1079 = vpack.c.bf16 %v1047, %v1047
      %v1080 = vpack.c.bf16 %v1048, %v1048
      %v1081 = vpack.c.bf16 %v1049, %v1049
      %v1082 = vpack.c.bf16 %v1050, %v1050
      %v1083 = vpack.c.bf16 %v1051, %v1051
      %v1084 = vpack.c.bf16 %v1052, %v1052
      %v1085 = vpack.c.bf16 %v1053, %v1053
      %v1086 = vpack.c.bf16 %v1054, %v1054
      %v1087 = vpack.c.bf16 %v1055, %v1055
      %v1088 = vpack.c.bf16 %v1056, %v1056
      %v1089 = vpack.c.bf16 %v1057, %v1057
      %v1090 = vpack.c.bf16 %v1058, %v1058
      %v1091 = vpack.c.bf16 %v1059, %v1059
      %v1092 = vpack.c.bf16 %v1060, %v1060
      %v1093 = vpack.c.bf16 %v1061, %v1061
      %v1094 = vpack.c.bf16 %v1062, %v1062
      %v1095 = vpack.c.bf16 %v1063, %v1063
      %v1096 = vpack.c.bf16 %v1064, %v1064
      %v1097 = vpack.c.bf16 %v1065, %v1065
      %v1098 = vpack.c.bf16 %v1066, %v1066
      %v1131 = vunpack.c.l.b16 %v1067
      %v1132 = vunpack.c.l.b16 %v1068
      %v1133 = vunpack.c.l.b16 %v1069
      %v1134 = vunpack.c.l.b16 %v1070
      %v1135 = vunpack.c.l.b16 %v1071
      %v1136 = vunpack.c.l.b16 %v1072
      %v1137 = vunpack.c.l.b16 %v1073
      %v1138 = vunpack.c.l.b16 %v1074
      %v1139 = vunpack.c.l.b16 %v1075
      %v1140 = vunpack.c.l.b16 %v1076
      %v1141 = vunpack.c.l.b16 %v1077
      %v1142 = vunpack.c.l.b16 %v1078
      %v1143 = vunpack.c.l.b16 %v1079
      %v1144 = vunpack.c.l.b16 %v1080
      %v1145 = vunpack.c.l.b16 %v1081
      %v1146 = vunpack.c.l.b16 %v1082
      %v1147 = vunpack.c.l.b16 %v1083
      %v1148 = vunpack.c.l.b16 %v1084
      %v1149 = vunpack.c.l.b16 %v1085
      %v1150 = vunpack.c.l.b16 %v1086
      %v1151 = vunpack.c.l.b16 %v1087
      %v1152 = vunpack.c.l.b16 %v1088
      %v1153 = vunpack.c.l.b16 %v1089
      %v1154 = vunpack.c.l.b16 %v1090
      %v1155 = vunpack.c.l.b16 %v1091
      %v1156 = vunpack.c.l.b16 %v1092
      %v1157 = vunpack.c.l.b16 %v1093
      %v1158 = vunpack.c.l.b16 %v1094
      %v1159 = vunpack.c.l.b16 %v1095
      %v1160 = vunpack.c.l.b16 %v1096
      %v1161 = vunpack.c.l.b16 %v1097
      %v1162 = vunpack.c.l.b16 %v1098
      %v1163 = vpack.c.b16 %v1132, %v1131
      %v1164 = vpack.c.b16 %v1134, %v1133
      %v1165 = vpack.c.b16 %v1136, %v1135
      %v1166 = vpack.c.b16 %v1138, %v1137
      %v1167 = vpack.c.b16 %v1140, %v1139
      %v1168 = vpack.c.b16 %v1142, %v1141
      %v1169 = vpack.c.b16 %v1144, %v1143
      %v1170 = vpack.c.b16 %v1146, %v1145
      %v1171 = vpack.c.b16 %v1148, %v1147
      %v1172 = vpack.c.b16 %v1150, %v1149
      %v1173 = vpack.c.b16 %v1152, %v1151
      %v1174 = vpack.c.b16 %v1154, %v1153
      %v1175 = vpack.c.b16 %v1156, %v1155
      %v1176 = vpack.c.b16 %v1158, %v1157
      %v1177 = vpack.c.b16 %v1160, %v1159
      %v1178 = vpack.c.b16 %v1162, %v1161
      %v1180 = vshrl.u32 %v1163, 16
      %v1182 = vrot.slane %v1180, 7
      %v1183 = vshll.u32 %v1163, 16
      %v1185 = vor.u32 %v1182, %v1183
      %v1187 = vshrl.u32 %v1164, 16
      %v1189 = vrot.slane %v1187, 7
      %v1190 = vshll.u32 %v1164, 16
      %v1192 = vor.u32 %v1189, %v1190
      %v1194 = vshrl.u32 %v1165, 16
      %v1196 = vrot.slane %v1194, 7
      %v1197 = vshll.u32 %v1165, 16
      %v1199 = vor.u32 %v1196, %v1197
      %v1201 = vshrl.u32 %v1166, 16
      %v1203 = vrot.slane %v1201, 7
      %v1204 = vshll.u32 %v1166, 16
      %v1206 = vor.u32 %v1203, %v1204
      %v1208 = vshrl.u32 %v1167, 16
      %v1210 = vrot.slane %v1208, 7
      %v1211 = vshll.u32 %v1167, 16
      %v1213 = vor.u32 %v1210, %v1211
      %v1215 = vshrl.u32 %v1168, 16
      %v1217 = vrot.slane %v1215, 7
      %v1218 = vshll.u32 %v1168, 16
      %v1220 = vor.u32 %v1217, %v1218
      %v1222 = vshrl.u32 %v1169, 16
      %v1224 = vrot.slane %v1222, 7
      %v1225 = vshll.u32 %v1169, 16
      %v1227 = vor.u32 %v1224, %v1225
      %v1229 = vshrl.u32 %v1170, 16
      %v1231 = vrot.slane %v1229, 7
      %v1232 = vshll.u32 %v1170, 16
      %v1234 = vor.u32 %v1231, %v1232
      %v1236 = vshrl.u32 %v1171, 16
      %v1238 = vrot.slane %v1236, 7
      %v1239 = vshll.u32 %v1171, 16
      %v1241 = vor.u32 %v1238, %v1239
      %v1243 = vshrl.u32 %v1172, 16
      %v1245 = vrot.slane %v1243, 7
      %v1246 = vshll.u32 %v1172, 16
      %v1248 = vor.u32 %v1245, %v1246
      %v1250 = vshrl.u32 %v1173, 16
      %v1252 = vrot.slane %v1250, 7
      %v1253 = vshll.u32 %v1173, 16
      %v1255 = vor.u32 %v1252, %v1253
      %v1257 = vshrl.u32 %v1174, 16
      %v1259 = vrot.slane %v1257, 7
      %v1260 = vshll.u32 %v1174, 16
      %v1262 = vor.u32 %v1259, %v1260
      %v1264 = vshrl.u32 %v1175, 16
      %v1266 = vrot.slane %v1264, 7
      %v1267 = vshll.u32 %v1175, 16
      %v1269 = vor.u32 %v1266, %v1267
      %v1271 = vshrl.u32 %v1176, 16
      %v1273 = vrot.slane %v1271, 7
      %v1274 = vshll.u32 %v1176, 16
      %v1276 = vor.u32 %v1273, %v1274
      %v1278 = vshrl.u32 %v1177, 16
      %v1280 = vrot.slane %v1278, 7
      %v1281 = vshll.u32 %v1177, 16
      %v1283 = vor.u32 %v1280, %v1281
      %v1285 = vshrl.u32 %v1178, 16
      %v1287 = vrot.slane %v1285, 7
      %v1288 = vshll.u32 %v1178, 16
      %v1290 = vor.u32 %v1287, %v1288
      %vm1307 = vcmask 1040384
      %vm1308 = vsmask.f32 256
      %vm1309 = vmand %vm1307, %vm1308
      %v1310 = vsel %vm1309, 0, %v1185
      %v1311 = vsel %vm1309, 0, %v1192
      %v1312 = vsel %vm1309, 0, %v1199
      %v1313 = vsel %vm1309, 0, %v1206
      %v1314 = vsel %vm1309, 0, %v1213
      %v1315 = vsel %vm1309, 0, %v1220
      %v1316 = vsel %vm1309, 0, %v1227
      %v1317 = vsel %vm1309, 0, %v1234
      %v1318 = vsel %vm1309, 0, %v1241
      %v1319 = vsel %vm1309, 0, %v1248
      %v1320 = vsel %vm1309, 0, %v1255
      %v1321 = vsel %vm1309, 0, %v1262
      %v1322 = vsel %vm1309, 0, %v1269
      %v1323 = vsel %vm1309, 0, %v1276
      %v1324 = vsel %vm1309, 0, %v1283
      %v1325 = vsel %vm1309, 0, %v1290
      %v1326 = vrot.slane %v1183, 1
      %v1327 = vor.u32 %v1180, %v1326
      %v1328 = vrot.slane %v1190, 1
      %v1329 = vor.u32 %v1187, %v1328
      %v1330 = vrot.slane %v1197, 1
      %v1331 = vor.u32 %v1194, %v1330
      %v1332 = vrot.slane %v1204, 1
      %v1333 = vor.u32 %v1201, %v1332
      %v1334 = vrot.slane %v1211, 1
      %v1335 = vor.u32 %v1208, %v1334
      %v1336 = vrot.slane %v1218, 1
      %v1337 = vor.u32 %v1215, %v1336
      %v1338 = vrot.slane %v1225, 1
      %v1339 = vor.u32 %v1222, %v1338
      %v1340 = vrot.slane %v1232, 1
      %v1341 = vor.u32 %v1229, %v1340
      %v1342 = vrot.slane %v1239, 1
      %v1343 = vor.u32 %v1236, %v1342
      %v1344 = vrot.slane %v1246, 1
      %v1345 = vor.u32 %v1243, %v1344
      %v1346 = vrot.slane %v1253, 1
      %v1347 = vor.u32 %v1250, %v1346
      %v1348 = vrot.slane %v1260, 1
      %v1349 = vor.u32 %v1257, %v1348
      %v1350 = vrot.slane %v1267, 1
      %v1351 = vor.u32 %v1264, %v1350
      %v1352 = vrot.slane %v1274, 1
      %v1353 = vor.u32 %v1271, %v1352
      %v1354 = vrot.slane %v1281, 1
      %v1355 = vor.u32 %v1278, %v1354
      %v1356 = vrot.slane %v1288, 1
      %v1357 = vor.u32 %v1285, %v1356
      %vm1374 = vcmask 1047552
      %vm1375 = vsmask.f32 7424
      %vm1376 = vmand %vm1374, %vm1375
      %v1377 = vsel %vm1376, %v1327, 0
      %v1378 = vsel %vm1376, %v1329, 0
      %v1379 = vsel %vm1376, %v1331, 0
      %v1380 = vsel %vm1376, %v1333, 0
      %v1381 = vsel %vm1376, %v1335, 0
      %v1382 = vsel %vm1376, %v1337, 0
      %v1383 = vsel %vm1376, %v1339, 0
      %v1384 = vsel %vm1376, %v1341, 0
      %v1385 = vsel %vm1376, %v1343, 0
      %v1386 = vsel %vm1376, %v1345, 0
      %v1387 = vsel %vm1376, %v1347, 0
      %v1388 = vsel %vm1376, %v1349, 0
      %v1389 = vsel %vm1376, %v1351, 0
      %v1390 = vsel %vm1376, %v1353, 0
      %v1391 = vsel %vm1376, %v1355, 0
      %v1392 = vsel %vm1376, %v1357, 0
      %1393 = vrot.lane.b32.xlu0 %v1163, 2
      %v1394 = vpop.permute.xlu0 %1393
      %1395 = vrot.lane.b32.xlu0 %v1164, 2
      %v1396 = vpop.permute.xlu0 %1395
      %1397 = vrot.lane.b32.xlu0 %v1165, 2
      %v1398 = vpop.permute.xlu0 %1397
      %1399 = vrot.lane.b32.xlu0 %v1166, 2
      %v1400 = vpop.permute.xlu0 %1399
      %1401 = vrot.lane.b32.xlu0 %v1167, 2
      %v1402 = vpop.permute.xlu0 %1401
      %1403 = vrot.lane.b32.xlu0 %v1168, 2
      %v1404 = vpop.permute.xlu0 %1403
      %1405 = vrot.lane.b32.xlu0 %v1169, 2
      %v1406 = vpop.permute.xlu0 %1405
      %1407 = vrot.lane.b32.xlu0 %v1170, 2
      %v1408 = vpop.permute.xlu0 %1407
      %1409 = vrot.lane.b32.xlu0 %v1171, 2
      %v1410 = vpop.permute.xlu0 %1409
      %1411 = vrot.lane.b32.xlu0 %v1172, 2
      %v1412 = vpop.permute.xlu0 %1411
      %1413 = vrot.lane.b32.xlu0 %v1173, 2
      %v1414 = vpop.permute.xlu0 %1413
      %1415 = vrot.lane.b32.xlu0 %v1174, 2
      %v1416 = vpop.permute.xlu0 %1415
      %1417 = vrot.lane.b32.xlu0 %v1175, 2
      %v1418 = vpop.permute.xlu0 %1417
      %1419 = vrot.lane.b32.xlu0 %v1176, 2
      %v1420 = vpop.permute.xlu0 %1419
      %1421 = vrot.lane.b32.xlu0 %v1177, 2
      %v1422 = vpop.permute.xlu0 %1421
      %1423 = vrot.lane.b32.xlu0 %v1178, 2
      %v1424 = vpop.permute.xlu0 %1423
      %1441 = vrot.lane.b32.xlu0 %v1377, 4
      %v1442 = vpop.permute.xlu0 %1441
      %1443 = vrot.lane.b32.xlu0 %v1378, 4
      %v1444 = vpop.permute.xlu0 %1443
      %1445 = vrot.lane.b32.xlu0 %v1379, 4
      %v1446 = vpop.permute.xlu0 %1445
      %1447 = vrot.lane.b32.xlu0 %v1380, 4
      %v1448 = vpop.permute.xlu0 %1447
      %1449 = vrot.lane.b32.xlu0 %v1381, 4
      %v1450 = vpop.permute.xlu0 %1449
      %1451 = vrot.lane.b32.xlu0 %v1382, 4
      %v1452 = vpop.permute.xlu0 %1451
      %1453 = vrot.lane.b32.xlu0 %v1383, 4
      %v1454 = vpop.permute.xlu0 %1453
      %1455 = vrot.lane.b32.xlu0 %v1384, 4
      %v1456 = vpop.permute.xlu0 %1455
      %1457 = vrot.lane.b32.xlu0 %v1385, 4
      %v1458 = vpop.permute.xlu0 %1457
      %1459 = vrot.lane.b32.xlu0 %v1386, 4
      %v1460 = vpop.permute.xlu0 %1459
      %1461 = vrot.lane.b32.xlu0 %v1387, 4
      %v1462 = vpop.permute.xlu0 %1461
      %1463 = vrot.lane.b32.xlu0 %v1388, 4
      %v1464 = vpop.permute.xlu0 %1463
      %1465 = vrot.lane.b32.xlu0 %v1389, 4
      %v1466 = vpop.permute.xlu0 %1465
      %1467 = vrot.lane.b32.xlu0 %v1390, 4
      %v1468 = vpop.permute.xlu0 %1467
      %1469 = vrot.lane.b32.xlu0 %v1391, 4
      %v1470 = vpop.permute.xlu0 %1469
      %1471 = vrot.lane.b32.xlu0 %v1392, 4
      %v1472 = vpop.permute.xlu0 %1471
      %vm1473 = vcmask 15360
      %v1476 = vsel %vm1473, %v1310, %v1394
      %v1479 = vsel %vm1473, %v1311, %v1396
      %v1482 = vsel %vm1473, %v1312, %v1398
      %v1485 = vsel %vm1473, %v1313, %v1400
      %v1488 = vsel %vm1473, %v1314, %v1402
      %v1491 = vsel %vm1473, %v1315, %v1404
      %v1494 = vsel %vm1473, %v1316, %v1406
      %v1497 = vsel %vm1473, %v1317, %v1408
      %v1500 = vsel %vm1473, %v1318, %v1410
      %v1503 = vsel %vm1473, %v1319, %v1412
      %v1506 = vsel %vm1473, %v1320, %v1414
      %v1509 = vsel %vm1473, %v1321, %v1416
      %v1512 = vsel %vm1473, %v1322, %v1418
      %v1515 = vsel %vm1473, %v1323, %v1420
      %v1518 = vsel %vm1473, %v1324, %v1422
      %v1521 = vsel %vm1473, %v1325, %v1424
      %v1523 = vsel %vm285, %v1476, %v1442
      %v1525 = vsel %vm285, %v1479, %v1444
      %v1527 = vsel %vm285, %v1482, %v1446
      %v1529 = vsel %vm285, %v1485, %v1448
      %v1531 = vsel %vm285, %v1488, %v1450
      %v1533 = vsel %vm285, %v1491, %v1452
      %v1535 = vsel %vm285, %v1494, %v1454
      %v1537 = vsel %vm285, %v1497, %v1456
      %v1539 = vsel %vm285, %v1500, %v1458
      %v1541 = vsel %vm285, %v1503, %v1460
      %v1543 = vsel %vm285, %v1506, %v1462
      %v1545 = vsel %vm285, %v1509, %v1464
      %v1547 = vsel %vm285, %v1512, %v1466
      %v1549 = vsel %vm285, %v1515, %v1468
      %v1551 = vsel %vm285, %v1518, %v1470
      %v1553 = vsel %vm285, %v1521, %v1472
      %v1570 = vunpack.c.l.b16 %v1523
      %v1571 = vunpack.c.h.b16 %v1523
      %v1572 = vunpack.c.l.b16 %v1525
      %v1573 = vunpack.c.h.b16 %v1525
      %v1574 = vunpack.c.l.b16 %v1527
      %v1575 = vunpack.c.h.b16 %v1527
      %v1576 = vunpack.c.l.b16 %v1529
      %v1577 = vunpack.c.h.b16 %v1529
      %v1578 = vunpack.c.l.b16 %v1531
      %v1579 = vunpack.c.h.b16 %v1531
      %v1580 = vunpack.c.l.b16 %v1533
      %v1581 = vunpack.c.h.b16 %v1533
      %v1582 = vunpack.c.l.b16 %v1535
      %v1583 = vunpack.c.h.b16 %v1535
      %v1584 = vunpack.c.l.b16 %v1537
      %v1585 = vunpack.c.h.b16 %v1537
      %v1586 = vunpack.c.l.b16 %v1539
      %v1587 = vunpack.c.h.b16 %v1539
      %v1588 = vunpack.c.l.b16 %v1541
      %v1589 = vunpack.c.h.b16 %v1541
      %v1590 = vunpack.c.l.b16 %v1543
      %v1591 = vunpack.c.h.b16 %v1543
      %v1592 = vunpack.c.l.b16 %v1545
      %v1593 = vunpack.c.h.b16 %v1545
      %v1594 = vunpack.c.l.b16 %v1547
      %v1595 = vunpack.c.h.b16 %v1547
      %v1596 = vunpack.c.l.b16 %v1549
      %v1597 = vunpack.c.h.b16 %v1549
      %v1598 = vunpack.c.l.b16 %v1551
      %v1599 = vunpack.c.h.b16 %v1551
      %v1600 = vunpack.c.l.b16 %v1553
      %v1601 = vunpack.c.h.b16 %v1553
      %v1602 = vpack.c.b16 %v1570, %v1570
      %v1603 = vpack.c.b16 %v1571, %v1571
      %v1604 = vpack.c.b16 %v1572, %v1572
      %v1605 = vpack.c.b16 %v1573, %v1573
      %v1606 = vpack.c.b16 %v1574, %v1574
      %v1607 = vpack.c.b16 %v1575, %v1575
      %v1608 = vpack.c.b16 %v1576, %v1576
      %v1609 = vpack.c.b16 %v1577, %v1577
      %v1610 = vpack.c.b16 %v1578, %v1578
      %v1611 = vpack.c.b16 %v1579, %v1579
      %v1612 = vpack.c.b16 %v1580, %v1580
      %v1613 = vpack.c.b16 %v1581, %v1581
      %v1614 = vpack.c.b16 %v1582, %v1582
      %v1615 = vpack.c.b16 %v1583, %v1583
      %v1616 = vpack.c.b16 %v1584, %v1584
      %v1617 = vpack.c.b16 %v1585, %v1585
      %v1618 = vpack.c.b16 %v1586, %v1586
      %v1619 = vpack.c.b16 %v1587, %v1587
      %v1620 = vpack.c.b16 %v1588, %v1588
      %v1621 = vpack.c.b16 %v1589, %v1589
      %v1622 = vpack.c.b16 %v1590, %v1590
      %v1623 = vpack.c.b16 %v1591, %v1591
      %v1624 = vpack.c.b16 %v1592, %v1592
      %v1625 = vpack.c.b16 %v1593, %v1593
      %v1626 = vpack.c.b16 %v1594, %v1594
      %v1627 = vpack.c.b16 %v1595, %v1595
      %v1628 = vpack.c.b16 %v1596, %v1596
      %v1629 = vpack.c.b16 %v1597, %v1597
      %v1630 = vpack.c.b16 %v1598, %v1598
      %v1631 = vpack.c.b16 %v1599, %v1599
      %v1632 = vpack.c.b16 %v1600, %v1600
      %v1633 = vpack.c.b16 %v1601, %v1601
      %s1666 = scalar_lea.vmem [#allocation2], 8
      %1667 = vst.msk [vmem:[%s1666] sm:$0xf] %vm226, %v1602
      %1668 = vst.msk [vmem:[%s1666 + $0x4] sm:$0xf] %vm226, %v1603
      %1669 = vst.msk [vmem:[%s1666 + $0x8] sm:$0xf] %vm226, %v1604
      %1670 = vst.msk [vmem:[%s1666 + $0xc] sm:$0xf] %vm226, %v1605
      %1671 = vst.msk [vmem:[%s1666 + $0x10] sm:$0xf] %vm226, %v1606
      %1672 = vst.msk [vmem:[%s1666 + $0x14] sm:$0xf] %vm226, %v1607
      %1673 = vst.msk [vmem:[%s1666 + $0x18] sm:$0xf] %vm226, %v1608
      %1674 = vst.msk [vmem:[%s1666 + $0x1c] sm:$0xf] %vm226, %v1609
      %1675 = vst.msk [vmem:[%s1666 + $0x20] sm:$0xf] %vm226, %v1610
      %1676 = vst.msk [vmem:[%s1666 + $0x24] sm:$0xf] %vm226, %v1611
      %1677 = vst.msk [vmem:[%s1666 + $0x28] sm:$0xf] %vm226, %v1612
      %1678 = vst.msk [vmem:[%s1666 + $0x2c] sm:$0xf] %vm226, %v1613
      %1679 = vst.msk [vmem:[%s1666 + $0x30] sm:$0xf] %vm226, %v1614
      %1680 = vst.msk [vmem:[%s1666 + $0x34] sm:$0xf] %vm226, %v1615
      %1681 = vst.msk [vmem:[%s1666 + $0x38] sm:$0xf] %vm226, %v1616
      %1682 = vst.msk [vmem:[%s1666 + $0x3c] sm:$0xf] %vm226, %v1617
      %1683 = vst.msk [vmem:[%s1666 + $0x40] sm:$0xf] %vm226, %v1618
      %1684 = vst.msk [vmem:[%s1666 + $0x44] sm:$0xf] %vm226, %v1619
      %1685 = vst.msk [vmem:[%s1666 + $0x48] sm:$0xf] %vm226, %v1620
      %1686 = vst.msk [vmem:[%s1666 + $0x4c] sm:$0xf] %vm226, %v1621
      %1687 = vst.msk [vmem:[%s1666 + $0x50] sm:$0xf] %vm226, %v1622
      %1688 = vst.msk [vmem:[%s1666 + $0x54] sm:$0xf] %vm226, %v1623
      %1689 = vst.msk [vmem:[%s1666 + $0x58] sm:$0xf] %vm226, %v1624
      %1690 = vst.msk [vmem:[%s1666 + $0x5c] sm:$0xf] %vm226, %v1625
      %1691 = vst.msk [vmem:[%s1666 + $0x60] sm:$0xf] %vm226, %v1626
      %1692 = vst.msk [vmem:[%s1666 + $0x64] sm:$0xf] %vm226, %v1627
      %1693 = vst.msk [vmem:[%s1666 + $0x68] sm:$0xf] %vm226, %v1628
      %1694 = vst.msk [vmem:[%s1666 + $0x6c] sm:$0xf] %vm226, %v1629
      %1695 = vst.msk [vmem:[%s1666 + $0x70] sm:$0xf] %vm226, %v1630
      %1696 = vst.msk [vmem:[%s1666 + $0x74] sm:$0xf] %vm226, %v1631
      %1697 = vst.msk [vmem:[%s1666 + $0x78] sm:$0xf] %vm226, %v1632
      %1698 = vst.msk [vmem:[%s1666 + $0x7c] sm:$0xf] %vm226, %v1633
      %v1699 = vld [vmem:[#allocation2] sm:$0xf]
      %v1700 = vld [vmem:[#allocation2 + $0x4] sm:$0xf]
      %v1701 = vld [vmem:[#allocation2 + $0x8] sm:$0xf]
      %v1702 = vld [vmem:[#allocation2 + $0xc] sm:$0xf]
      %v1703 = vld [vmem:[#allocation2 + $0x10] sm:$0xf]
      %v1704 = vld [vmem:[#allocation2 + $0x14] sm:$0xf]
      %v1705 = vld [vmem:[#allocation2 + $0x18] sm:$0xf]
      %v1706 = vld [vmem:[#allocation2 + $0x1c] sm:$0xf]
      %v1707 = vld [vmem:[#allocation2 + $0x20] sm:$0xf]
      %v1708 = vld [vmem:[#allocation2 + $0x24] sm:$0xf]
      %v1709 = vld [vmem:[#allocation2 + $0x28] sm:$0xf]
      %v1710 = vld [vmem:[#allocation2 + $0x2c] sm:$0xf]
      %v1711 = vld [vmem:[#allocation2 + $0x30] sm:$0xf]
      %v1712 = vld [vmem:[#allocation2 + $0x34] sm:$0xf]
      %v1713 = vld [vmem:[#allocation2 + $0x38] sm:$0xf]
      %v1714 = vld [vmem:[#allocation2 + $0x3c] sm:$0xf]
      %v1715 = vld [vmem:[#allocation2 + $0x40] sm:$0xf]
      %v1716 = vld [vmem:[#allocation2 + $0x44] sm:$0xf]
      %v1717 = vld [vmem:[#allocation2 + $0x48] sm:$0xf]
      %v1718 = vld [vmem:[#allocation2 + $0x4c] sm:$0xf]
      %v1719 = vld [vmem:[#allocation2 + $0x50] sm:$0xf]
      %v1720 = vld [vmem:[#allocation2 + $0x54] sm:$0xf]
      %v1721 = vld [vmem:[#allocation2 + $0x58] sm:$0xf]
      %v1722 = vld [vmem:[#allocation2 + $0x5c] sm:$0xf]
      %v1723 = vld [vmem:[#allocation2 + $0x60] sm:$0xf]
      %v1724 = vld [vmem:[#allocation2 + $0x64] sm:$0xf]
      %v1725 = vld [vmem:[#allocation2 + $0x68] sm:$0xf]
      %v1726 = vld [vmem:[#allocation2 + $0x6c] sm:$0xf]
      %v1727 = vld [vmem:[#allocation2 + $0x70] sm:$0xf]
      %v1728 = vld [vmem:[#allocation2 + $0x74] sm:$0xf]
      %v1729 = vld [vmem:[#allocation2 + $0x78] sm:$0xf]
      %v1730 = vld [vmem:[#allocation2 + $0x7c] sm:$0xf]
      %v1731 = vld [vmem:[%s3] sm:$0x7]
      %v1764 = vunpack.c.l.b16 %v1699
      %v1765 = vunpack.c.l.b16 %v1700
      %v1766 = vunpack.c.l.b16 %v1701
      %v1767 = vunpack.c.l.b16 %v1702
      %v1768 = vunpack.c.l.b16 %v1703
      %v1769 = vunpack.c.l.b16 %v1704
      %v1770 = vunpack.c.l.b16 %v1705
      %v1771 = vunpack.c.l.b16 %v1706
      %v1772 = vunpack.c.l.b16 %v1707
      %v1773 = vunpack.c.l.b16 %v1708
      %v1774 = vunpack.c.l.b16 %v1709
      %v1775 = vunpack.c.l.b16 %v1710
      %v1776 = vunpack.c.l.b16 %v1711
      %v1777 = vunpack.c.l.b16 %v1712
      %v1778 = vunpack.c.l.b16 %v1713
      %v1779 = vunpack.c.l.b16 %v1714
      %v1780 = vunpack.c.l.b16 %v1715
      %v1781 = vunpack.c.l.b16 %v1716
      %v1782 = vunpack.c.l.b16 %v1717
      %v1783 = vunpack.c.l.b16 %v1718
      %v1784 = vunpack.c.l.b16 %v1719
      %v1785 = vunpack.c.l.b16 %v1720
      %v1786 = vunpack.c.l.b16 %v1721
      %v1787 = vunpack.c.l.b16 %v1722
      %v1788 = vunpack.c.l.b16 %v1723
      %v1789 = vunpack.c.l.b16 %v1724
      %v1790 = vunpack.c.l.b16 %v1725
      %v1791 = vunpack.c.l.b16 %v1726
      %v1792 = vunpack.c.l.b16 %v1727
      %v1793 = vunpack.c.l.b16 %v1728
      %v1794 = vunpack.c.l.b16 %v1729
      %v1795 = vunpack.c.l.b16 %v1730
      %v1796 = vpack.c.b16 %v1765, %v1764
      %v1797 = vpack.c.b16 %v1767, %v1766
      %v1798 = vpack.c.b16 %v1769, %v1768
      %v1799 = vpack.c.b16 %v1771, %v1770
      %v1800 = vpack.c.b16 %v1773, %v1772
      %v1801 = vpack.c.b16 %v1775, %v1774
      %v1802 = vpack.c.b16 %v1777, %v1776
      %v1803 = vpack.c.b16 %v1779, %v1778
      %v1804 = vpack.c.b16 %v1781, %v1780
      %v1805 = vpack.c.b16 %v1783, %v1782
      %v1806 = vpack.c.b16 %v1785, %v1784
      %v1807 = vpack.c.b16 %v1787, %v1786
      %v1808 = vpack.c.b16 %v1789, %v1788
      %v1809 = vpack.c.b16 %v1791, %v1790
      %v1810 = vpack.c.b16 %v1793, %v1792
      %v1811 = vpack.c.b16 %v1795, %v1794
      %vm1812 = vcmask 48128
      %v1814 = vsel %vm1812, %v1796, 0
      %v1817 = vsel %vm1812, %v1797, 0
      %v1820 = vsel %vm1812, %v1798, 0
      %v1823 = vsel %vm1812, %v1799, 0
      %v1826 = vsel %vm1812, %v1800, 0
      %v1829 = vsel %vm1812, %v1801, 0
      %v1832 = vsel %vm1812, %v1802, 0
      %v1835 = vsel %vm1812, %v1803, 0
      %v1838 = vsel %vm1812, %v1804, 0
      %v1841 = vsel %vm1812, %v1805, 0
      %v1844 = vsel %vm1812, %v1806, 0
      %v1847 = vsel %vm1812, %v1807, 0
      %v1850 = vsel %vm1812, %v1808, 0
      %v1853 = vsel %vm1812, %v1809, 0
      %v1856 = vsel %vm1812, %v1810, 0
      %v1859 = vsel %vm1812, %v1811, 0
      %vm1861 = vcmask 1042432
      %v1863 = vsel %vm1861, %v1731, 0
      %1865 = vmatpush.bf16.msra.mxu0 0
      %1866 = vmatpush.bf16.msra.mxu0 0
      %1867 = vmatpush.bf16.msra.mxu0 0
      %1868 = vmatpush.bf16.msra.mxu0 0
      %1869 = vmatpush.bf16.msra.mxu0 0
      %1870 = vmatpush.bf16.msra.mxu0 0
      %1871 = vmatpush.bf16.msra.mxu0 0
      %1872 = vmatpush.bf16.msra.mxu0 %v1863
      %1873 = vmatmul.bf16.gmra.mxu0 %v1814
      %v1874 = vpop.f32.mrf.mxu0
      %v1875 = vadd.f32 0.0, %v1874
      %v1876 = vpop.f32.mrf.mxu0
      %v1877 = vadd.f32 0.0, %v1876
      %1878 = vmatmul.bf16.gmra.mxu0 %v1817
      %v1879 = vpop.f32.mrf.mxu0
      %v1880 = vadd.f32 0.0, %v1879
      %v1881 = vpop.f32.mrf.mxu0
      %v1882 = vadd.f32 0.0, %v1881
      %1883 = vmatmul.bf16.gmra.mxu0 %v1820
      %v1884 = vpop.f32.mrf.mxu0
      %v1885 = vadd.f32 0.0, %v1884
      %v1886 = vpop.f32.mrf.mxu0
      %v1887 = vadd.f32 0.0, %v1886
      %1888 = vmatmul.bf16.gmra.mxu0 %v1823
      %v1889 = vpop.f32.mrf.mxu0
      %v1890 = vadd.f32 0.0, %v1889
      %v1891 = vpop.f32.mrf.mxu0
      %v1892 = vadd.f32 0.0, %v1891
      %1893 = vmatmul.bf16.gmra.mxu0 %v1826
      %v1894 = vpop.f32.mrf.mxu0
      %v1895 = vadd.f32 0.0, %v1894
      %v1896 = vpop.f32.mrf.mxu0
      %v1897 = vadd.f32 0.0, %v1896
      %1898 = vmatmul.bf16.gmra.mxu0 %v1829
      %v1899 = vpop.f32.mrf.mxu0
      %v1900 = vadd.f32 0.0, %v1899
      %v1901 = vpop.f32.mrf.mxu0
      %v1902 = vadd.f32 0.0, %v1901
      %1903 = vmatmul.bf16.gmra.mxu0 %v1832
      %v1904 = vpop.f32.mrf.mxu0
      %v1905 = vadd.f32 0.0, %v1904
      %v1906 = vpop.f32.mrf.mxu0
      %v1907 = vadd.f32 0.0, %v1906
      %1908 = vmatmul.bf16.gmra.mxu0 %v1835
      %v1909 = vpop.f32.mrf.mxu0
      %v1910 = vadd.f32 0.0, %v1909
      %v1911 = vpop.f32.mrf.mxu0
      %v1912 = vadd.f32 0.0, %v1911
      %1913 = vmatmul.bf16.gmra.mxu0 %v1838
      %v1914 = vpop.f32.mrf.mxu0
      %v1915 = vadd.f32 0.0, %v1914
      %v1916 = vpop.f32.mrf.mxu0
      %v1917 = vadd.f32 0.0, %v1916
      %1918 = vmatmul.bf16.gmra.mxu0 %v1841
      %v1919 = vpop.f32.mrf.mxu0
      %v1920 = vadd.f32 0.0, %v1919
      %v1921 = vpop.f32.mrf.mxu0
      %v1922 = vadd.f32 0.0, %v1921
      %1923 = vmatmul.bf16.gmra.mxu0 %v1844
      %v1924 = vpop.f32.mrf.mxu0
      %v1925 = vadd.f32 0.0, %v1924
      %v1926 = vpop.f32.mrf.mxu0
      %v1927 = vadd.f32 0.0, %v1926
      %1928 = vmatmul.bf16.gmra.mxu0 %v1847
      %v1929 = vpop.f32.mrf.mxu0
      %v1930 = vadd.f32 0.0, %v1929
      %v1931 = vpop.f32.mrf.mxu0
      %v1932 = vadd.f32 0.0, %v1931
      %1933 = vmatmul.bf16.gmra.mxu0 %v1850
      %v1934 = vpop.f32.mrf.mxu0
      %v1935 = vadd.f32 0.0, %v1934
      %v1936 = vpop.f32.mrf.mxu0
      %v1937 = vadd.f32 0.0, %v1936
      %1938 = vmatmul.bf16.gmra.mxu0 %v1853
      %v1939 = vpop.f32.mrf.mxu0
      %v1940 = vadd.f32 0.0, %v1939
      %v1941 = vpop.f32.mrf.mxu0
      %v1942 = vadd.f32 0.0, %v1941
      %1943 = vmatmul.bf16.gmra.mxu0 %v1856
      %v1944 = vpop.f32.mrf.mxu0
      %v1945 = vadd.f32 0.0, %v1944
      %v1946 = vpop.f32.mrf.mxu0
      %v1947 = vadd.f32 0.0, %v1946
      %1948 = vmatmul.bf16.gmra.mxu0 %v1859
      %v1949 = vpop.f32.mrf.mxu0
      %v1950 = vadd.f32 0.0, %v1949
      %v1951 = vpop.f32.mrf.mxu0
      %v1952 = vadd.f32 0.0, %v1951
      %1953 = vdwg.mxu0
      %1954 = vst.msk [vmem:[#allocation3] sm:$0xff] %vm285, %v1875
      %1955 = vst.msk [vmem:[#allocation3 + $0x8] sm:$0xff] %vm285, %v1877
      %1956 = vst.msk [vmem:[#allocation3 + $0x10] sm:$0xff] %vm285, %v1880
      %1957 = vst.msk [vmem:[#allocation3 + $0x18] sm:$0xff] %vm285, %v1882
      %1958 = vst.msk [vmem:[#allocation3 + $0x20] sm:$0xff] %vm285, %v1885
      %1959 = vst.msk [vmem:[#allocation3 + $0x28] sm:$0xff] %vm285, %v1887
      %1960 = vst.msk [vmem:[#allocation3 + $0x30] sm:$0xff] %vm285, %v1890
      %1961 = vst.msk [vmem:[#allocation3 + $0x38] sm:$0xff] %vm285, %v1892
      %1962 = vst.msk [vmem:[#allocation3 + $0x40] sm:$0xff] %vm285, %v1895
      %1963 = vst.msk [vmem:[#allocation3 + $0x48] sm:$0xff] %vm285, %v1897
      %1964 = vst.msk [vmem:[#allocation3 + $0x50] sm:$0xff] %vm285, %v1900
      %1965 = vst.msk [vmem:[#allocation3 + $0x58] sm:$0xff] %vm285, %v1902
      %1966 = vst.msk [vmem:[#allocation3 + $0x60] sm:$0xff] %vm285, %v1905
      %1967 = vst.msk [vmem:[#allocation3 + $0x68] sm:$0xff] %vm285, %v1907
      %1968 = vst.msk [vmem:[#allocation3 + $0x70] sm:$0xff] %vm285, %v1910
      %1969 = vst.msk [vmem:[#allocation3 + $0x78] sm:$0xff] %vm285, %v1912
      %1970 = vst.msk [vmem:[#allocation3 + $0x80] sm:$0xff] %vm285, %v1915
      %1971 = vst.msk [vmem:[#allocation3 + $0x88] sm:$0xff] %vm285, %v1917
      %1972 = vst.msk [vmem:[#allocation3 + $0x90] sm:$0xff] %vm285, %v1920
      %1973 = vst.msk [vmem:[#allocation3 + $0x98] sm:$0xff] %vm285, %v1922
      %1974 = vst.msk [vmem:[#allocation3 + $0xa0] sm:$0xff] %vm285, %v1925
      %1975 = vst.msk [vmem:[#allocation3 + $0xa8] sm:$0xff] %vm285, %v1927
      %1976 = vst.msk [vmem:[#allocation3 + $0xb0] sm:$0xff] %vm285, %v1930
      %1977 = vst.msk [vmem:[#allocation3 + $0xb8] sm:$0xff] %vm285, %v1932
      %1978 = vst.msk [vmem:[#allocation3 + $0xc0] sm:$0xff] %vm285, %v1935
      %1979 = vst.msk [vmem:[#allocation3 + $0xc8] sm:$0xff] %vm285, %v1937
      %1980 = vst.msk [vmem:[#allocation3 + $0xd0] sm:$0xff] %vm285, %v1940
      %1981 = vst.msk [vmem:[#allocation3 + $0xd8] sm:$0xff] %vm285, %v1942
      %1982 = vst.msk [vmem:[#allocation3 + $0xe0] sm:$0xff] %vm285, %v1945
      %1983 = vst.msk [vmem:[#allocation3 + $0xe8] sm:$0xff] %vm285, %v1947
      %1984 = vst.msk [vmem:[#allocation3 + $0xf0] sm:$0xff] %vm285, %v1950
      %1985 = vst.msk [vmem:[#allocation3 + $0xf8] sm:$0xff] %vm285, %v1952
      %v1986 = vld [vmem:[#allocation3] sm:$0xff]
      %v1987 = vld [vmem:[#allocation3 + $0x8] sm:$0xff]
      %v1988 = vld [vmem:[#allocation3 + $0x10] sm:$0xff]
      %v1989 = vld [vmem:[#allocation3 + $0x18] sm:$0xff]
      %v1990 = vld [vmem:[#allocation3 + $0x20] sm:$0xff]
      %v1991 = vld [vmem:[#allocation3 + $0x28] sm:$0xff]
      %v1992 = vld [vmem:[#allocation3 + $0x30] sm:$0xff]
      %v1993 = vld [vmem:[#allocation3 + $0x38] sm:$0xff]
      %v1994 = vld [vmem:[#allocation3 + $0x40] sm:$0xff]
      %v1995 = vld [vmem:[#allocation3 + $0x48] sm:$0xff]
      %v1996 = vld [vmem:[#allocation3 + $0x50] sm:$0xff]
      %v1997 = vld [vmem:[#allocation3 + $0x58] sm:$0xff]
      %v1998 = vld [vmem:[#allocation3 + $0x60] sm:$0xff]
      %v1999 = vld [vmem:[#allocation3 + $0x68] sm:$0xff]
      %v2000 = vld [vmem:[#allocation3 + $0x70] sm:$0xff]
      %v2001 = vld [vmem:[#allocation3 + $0x78] sm:$0xff]
      %v2002 = vld [vmem:[#allocation3 + $0x80] sm:$0xff]
      %v2003 = vld [vmem:[#allocation3 + $0x88] sm:$0xff]
      %v2004 = vld [vmem:[#allocation3 + $0x90] sm:$0xff]
      %v2005 = vld [vmem:[#allocation3 + $0x98] sm:$0xff]
      %v2006 = vld [vmem:[#allocation3 + $0xa0] sm:$0xff]
      %v2007 = vld [vmem:[#allocation3 + $0xa8] sm:$0xff]
      %v2008 = vld [vmem:[#allocation3 + $0xb0] sm:$0xff]
      %v2009 = vld [vmem:[#allocation3 + $0xb8] sm:$0xff]
      %v2010 = vld [vmem:[#allocation3 + $0xc0] sm:$0xff]
      %v2011 = vld [vmem:[#allocation3 + $0xc8] sm:$0xff]
      %v2012 = vld [vmem:[#allocation3 + $0xd0] sm:$0xff]
      %v2013 = vld [vmem:[#allocation3 + $0xd8] sm:$0xff]
      %v2014 = vld [vmem:[#allocation3 + $0xe0] sm:$0xff]
      %v2015 = vld [vmem:[#allocation3 + $0xe8] sm:$0xff]
      %v2016 = vld [vmem:[#allocation3 + $0xf0] sm:$0xff]
      %v2017 = vld [vmem:[#allocation3 + $0xf8] sm:$0xff]
      %v2018 = vld [vmem:[%s1666] sm:$0xf]
      %v2019 = vld [vmem:[%s1666 + $0x4] sm:$0xf]
      %v2020 = vld [vmem:[%s1666 + $0x8] sm:$0xf]
      %v2021 = vld [vmem:[%s1666 + $0xc] sm:$0xf]
      %v2022 = vld [vmem:[%s1666 + $0x10] sm:$0xf]
      %v2023 = vld [vmem:[%s1666 + $0x14] sm:$0xf]
      %v2024 = vld [vmem:[%s1666 + $0x18] sm:$0xf]
      %v2025 = vld [vmem:[%s1666 + $0x1c] sm:$0xf]
      %v2026 = vld [vmem:[%s1666 + $0x20] sm:$0xf]
      %v2027 = vld [vmem:[%s1666 + $0x24] sm:$0xf]
      %v2028 = vld [vmem:[%s1666 + $0x28] sm:$0xf]
      %v2029 = vld [vmem:[%s1666 + $0x2c] sm:$0xf]
      %v2030 = vld [vmem:[%s1666 + $0x30] sm:$0xf]
      %v2031 = vld [vmem:[%s1666 + $0x34] sm:$0xf]
      %v2032 = vld [vmem:[%s1666 + $0x38] sm:$0xf]
      %v2033 = vld [vmem:[%s1666 + $0x3c] sm:$0xf]
      %v2034 = vld [vmem:[%s1666 + $0x40] sm:$0xf]
      %v2035 = vld [vmem:[%s1666 + $0x44] sm:$0xf]
      %v2036 = vld [vmem:[%s1666 + $0x48] sm:$0xf]
      %v2037 = vld [vmem:[%s1666 + $0x4c] sm:$0xf]
      %v2038 = vld [vmem:[%s1666 + $0x50] sm:$0xf]
      %v2039 = vld [vmem:[%s1666 + $0x54] sm:$0xf]
      %v2040 = vld [vmem:[%s1666 + $0x58] sm:$0xf]
      %v2041 = vld [vmem:[%s1666 + $0x5c] sm:$0xf]
      %v2042 = vld [vmem:[%s1666 + $0x60] sm:$0xf]
      %v2043 = vld [vmem:[%s1666 + $0x64] sm:$0xf]
      %v2044 = vld [vmem:[%s1666 + $0x68] sm:$0xf]
      %v2045 = vld [vmem:[%s1666 + $0x6c] sm:$0xf]
      %v2046 = vld [vmem:[%s1666 + $0x70] sm:$0xf]
      %v2047 = vld [vmem:[%s1666 + $0x74] sm:$0xf]
      %v2048 = vld [vmem:[%s1666 + $0x78] sm:$0xf]
      %v2049 = vld [vmem:[%s1666 + $0x7c] sm:$0xf]
      %s2050 = scalar_lea.vmem %s3, 4
      %v2051 = vld [vmem:[%s2050] sm:$0x7]
      %v2084 = vunpack.c.l.b16 %v2018
      %v2085 = vunpack.c.l.b16 %v2019
      %v2086 = vunpack.c.l.b16 %v2020
      %v2087 = vunpack.c.l.b16 %v2021
      %v2088 = vunpack.c.l.b16 %v2022
      %v2089 = vunpack.c.l.b16 %v2023
      %v2090 = vunpack.c.l.b16 %v2024
      %v2091 = vunpack.c.l.b16 %v2025
      %v2092 = vunpack.c.l.b16 %v2026
      %v2093 = vunpack.c.l.b16 %v2027
      %v2094 = vunpack.c.l.b16 %v2028
      %v2095 = vunpack.c.l.b16 %v2029
      %v2096 = vunpack.c.l.b16 %v2030
      %v2097 = vunpack.c.l.b16 %v2031
      %v2098 = vunpack.c.l.b16 %v2032
      %v2099 = vunpack.c.l.b16 %v2033
      %v2100 = vunpack.c.l.b16 %v2034
      %v2101 = vunpack.c.l.b16 %v2035
      %v2102 = vunpack.c.l.b16 %v2036
      %v2103 = vunpack.c.l.b16 %v2037
      %v2104 = vunpack.c.l.b16 %v2038
      %v2105 = vunpack.c.l.b16 %v2039
      %v2106 = vunpack.c.l.b16 %v2040
      %v2107 = vunpack.c.l.b16 %v2041
      %v2108 = vunpack.c.l.b16 %v2042
      %v2109 = vunpack.c.l.b16 %v2043
      %v2110 = vunpack.c.l.b16 %v2044
      %v2111 = vunpack.c.l.b16 %v2045
      %v2112 = vunpack.c.l.b16 %v2046
      %v2113 = vunpack.c.l.b16 %v2047
      %v2114 = vunpack.c.l.b16 %v2048
      %v2115 = vunpack.c.l.b16 %v2049
      %v2116 = vpack.c.b16 %v2085, %v2084
      %v2117 = vpack.c.b16 %v2087, %v2086
      %v2118 = vpack.c.b16 %v2089, %v2088
      %v2119 = vpack.c.b16 %v2091, %v2090
      %v2120 = vpack.c.b16 %v2093, %v2092
      %v2121 = vpack.c.b16 %v2095, %v2094
      %v2122 = vpack.c.b16 %v2097, %v2096
      %v2123 = vpack.c.b16 %v2099, %v2098
      %v2124 = vpack.c.b16 %v2101, %v2100
      %v2125 = vpack.c.b16 %v2103, %v2102
      %v2126 = vpack.c.b16 %v2105, %v2104
      %v2127 = vpack.c.b16 %v2107, %v2106
      %v2128 = vpack.c.b16 %v2109, %v2108
      %v2129 = vpack.c.b16 %v2111, %v2110
      %v2130 = vpack.c.b16 %v2113, %v2112
      %v2131 = vpack.c.b16 %v2115, %v2114
      %v2133 = vsel %vm1812, %v2116, 0
      %v2136 = vsel %vm1812, %v2117, 0
      %v2139 = vsel %vm1812, %v2118, 0
      %v2142 = vsel %vm1812, %v2119, 0
      %v2145 = vsel %vm1812, %v2120, 0
      %v2148 = vsel %vm1812, %v2121, 0
      %v2151 = vsel %vm1812, %v2122, 0
      %v2154 = vsel %vm1812, %v2123, 0
      %v2157 = vsel %vm1812, %v2124, 0
      %v2160 = vsel %vm1812, %v2125, 0
      %v2163 = vsel %vm1812, %v2126, 0
      %v2166 = vsel %vm1812, %v2127, 0
      %v2169 = vsel %vm1812, %v2128, 0
      %v2172 = vsel %vm1812, %v2129, 0
      %v2175 = vsel %vm1812, %v2130, 0
      %v2178 = vsel %vm1812, %v2131, 0
      %v2181 = vsel %vm1861, %v2051, 0
      %2183 = vmatpush.bf16.msra.mxu0 0
      %2184 = vmatpush.bf16.msra.mxu0 0
      %2185 = vmatpush.bf16.msra.mxu0 0
      %2186 = vmatpush.bf16.msra.mxu0 0
      %2187 = vmatpush.bf16.msra.mxu0 0
      %2188 = vmatpush.bf16.msra.mxu0 0
      %2189 = vmatpush.bf16.msra.mxu0 0
      %2190 = vmatpush.bf16.msra.mxu0 %v2181
      %2191 = vmatmul.bf16.gmra.mxu0 %v2133
      %v2192 = vpop.f32.mrf.mxu0
      %v2193 = vadd.f32 0.0, %v2192
      %v2194 = vpop.f32.mrf.mxu0
      %v2195 = vadd.f32 0.0, %v2194
      %2196 = vmatmul.bf16.gmra.mxu0 %v2136
      %v2197 = vpop.f32.mrf.mxu0
      %v2198 = vadd.f32 0.0, %v2197
      %v2199 = vpop.f32.mrf.mxu0
      %v2200 = vadd.f32 0.0, %v2199
      %2201 = vmatmul.bf16.gmra.mxu0 %v2139
      %v2202 = vpop.f32.mrf.mxu0
      %v2203 = vadd.f32 0.0, %v2202
      %v2204 = vpop.f32.mrf.mxu0
      %v2205 = vadd.f32 0.0, %v2204
      %2206 = vmatmul.bf16.gmra.mxu0 %v2142
      %v2207 = vpop.f32.mrf.mxu0
      %v2208 = vadd.f32 0.0, %v2207
      %v2209 = vpop.f32.mrf.mxu0
      %v2210 = vadd.f32 0.0, %v2209
      %2211 = vmatmul.bf16.gmra.mxu0 %v2145
      %v2212 = vpop.f32.mrf.mxu0
      %v2213 = vadd.f32 0.0, %v2212
      %v2214 = vpop.f32.mrf.mxu0
      %v2215 = vadd.f32 0.0, %v2214
      %2216 = vmatmul.bf16.gmra.mxu0 %v2148
      %v2217 = vpop.f32.mrf.mxu0
      %v2218 = vadd.f32 0.0, %v2217
      %v2219 = vpop.f32.mrf.mxu0
      %v2220 = vadd.f32 0.0, %v2219
      %2221 = vmatmul.bf16.gmra.mxu0 %v2151
      %v2222 = vpop.f32.mrf.mxu0
      %v2223 = vadd.f32 0.0, %v2222
      %v2224 = vpop.f32.mrf.mxu0
      %v2225 = vadd.f32 0.0, %v2224
      %2226 = vmatmul.bf16.gmra.mxu0 %v2154
      %v2227 = vpop.f32.mrf.mxu0
      %v2228 = vadd.f32 0.0, %v2227
      %v2229 = vpop.f32.mrf.mxu0
      %v2230 = vadd.f32 0.0, %v2229
      %2231 = vmatmul.bf16.gmra.mxu0 %v2157
      %v2232 = vpop.f32.mrf.mxu0
      %v2233 = vadd.f32 0.0, %v2232
      %v2234 = vpop.f32.mrf.mxu0
      %v2235 = vadd.f32 0.0, %v2234
      %2236 = vmatmul.bf16.gmra.mxu0 %v2160
      %v2237 = vpop.f32.mrf.mxu0
      %v2238 = vadd.f32 0.0, %v2237
      %v2239 = vpop.f32.mrf.mxu0
      %v2240 = vadd.f32 0.0, %v2239
      %2241 = vmatmul.bf16.gmra.mxu0 %v2163
      %v2242 = vpop.f32.mrf.mxu0
      %v2243 = vadd.f32 0.0, %v2242
      %v2244 = vpop.f32.mrf.mxu0
      %v2245 = vadd.f32 0.0, %v2244
      %2246 = vmatmul.bf16.gmra.mxu0 %v2166
      %v2247 = vpop.f32.mrf.mxu0
      %v2248 = vadd.f32 0.0, %v2247
      %v2249 = vpop.f32.mrf.mxu0
      %v2250 = vadd.f32 0.0, %v2249
      %2251 = vmatmul.bf16.gmra.mxu0 %v2169
      %v2252 = vpop.f32.mrf.mxu0
      %v2253 = vadd.f32 0.0, %v2252
      %v2254 = vpop.f32.mrf.mxu0
      %v2255 = vadd.f32 0.0, %v2254
      %2256 = vmatmul.bf16.gmra.mxu0 %v2172
      %v2257 = vpop.f32.mrf.mxu0
      %v2258 = vadd.f32 0.0, %v2257
      %v2259 = vpop.f32.mrf.mxu0
      %v2260 = vadd.f32 0.0, %v2259
      %2261 = vmatmul.bf16.gmra.mxu0 %v2175
      %v2262 = vpop.f32.mrf.mxu0
      %v2263 = vadd.f32 0.0, %v2262
      %v2264 = vpop.f32.mrf.mxu0
      %v2265 = vadd.f32 0.0, %v2264
      %2266 = vmatmul.bf16.gmra.mxu0 %v2178
      %v2267 = vpop.f32.mrf.mxu0
      %v2268 = vadd.f32 0.0, %v2267
      %v2269 = vpop.f32.mrf.mxu0
      %v2270 = vadd.f32 0.0, %v2269
      %2271 = vdwg.mxu0
      %v2272 = vadd.f32 %v1986, %v2193
      %v2273 = vadd.f32 %v1987, %v2195
      %v2274 = vadd.f32 %v1988, %v2198
      %v2275 = vadd.f32 %v1989, %v2200
      %v2276 = vadd.f32 %v1990, %v2203
      %v2277 = vadd.f32 %v1991, %v2205
      %v2278 = vadd.f32 %v1992, %v2208
      %v2279 = vadd.f32 %v1993, %v2210
      %v2280 = vadd.f32 %v1994, %v2213
      %v2281 = vadd.f32 %v1995, %v2215
      %v2282 = vadd.f32 %v1996, %v2218
      %v2283 = vadd.f32 %v1997, %v2220
      %v2284 = vadd.f32 %v1998, %v2223
      %v2285 = vadd.f32 %v1999, %v2225
      %v2286 = vadd.f32 %v2000, %v2228
      %v2287 = vadd.f32 %v2001, %v2230
      %v2288 = vadd.f32 %v2002, %v2233
      %v2289 = vadd.f32 %v2003, %v2235
      %v2290 = vadd.f32 %v2004, %v2238
      %v2291 = vadd.f32 %v2005, %v2240
      %v2292 = vadd.f32 %v2006, %v2243
      %v2293 = vadd.f32 %v2007, %v2245
      %v2294 = vadd.f32 %v2008, %v2248
      %v2295 = vadd.f32 %v2009, %v2250
      %v2296 = vadd.f32 %v2010, %v2253
      %v2297 = vadd.f32 %v2011, %v2255
      %v2298 = vadd.f32 %v2012, %v2258
      %v2299 = vadd.f32 %v2013, %v2260
      %v2300 = vadd.f32 %v2014, %v2263
      %v2301 = vadd.f32 %v2015, %v2265
      %v2302 = vadd.f32 %v2016, %v2268
      %v2303 = vadd.f32 %v2017, %v2270
      %2304 = vst.msk [vmem:[#allocation3] sm:$0xff] %vm285, %v2272
      %2305 = vst.msk [vmem:[#allocation3 + $0x8] sm:$0xff] %vm285, %v2273
      %2306 = vst.msk [vmem:[#allocation3 + $0x10] sm:$0xff] %vm285, %v2274
      %2307 = vst.msk [vmem:[#allocation3 + $0x18] sm:$0xff] %vm285, %v2275
      %2308 = vst.msk [vmem:[#allocation3 + $0x20] sm:$0xff] %vm285, %v2276
      %2309 = vst.msk [vmem:[#allocation3 + $0x28] sm:$0xff] %vm285, %v2277
      %2310 = vst.msk [vmem:[#allocation3 + $0x30] sm:$0xff] %vm285, %v2278
      %2311 = vst.msk [vmem:[#allocation3 + $0x38] sm:$0xff] %vm285, %v2279
      %2312 = vst.msk [vmem:[#allocation3 + $0x40] sm:$0xff] %vm285, %v2280
      %2313 = vst.msk [vmem:[#allocation3 + $0x48] sm:$0xff] %vm285, %v2281
      %2314 = vst.msk [vmem:[#allocation3 + $0x50] sm:$0xff] %vm285, %v2282
      %2315 = vst.msk [vmem:[#allocation3 + $0x58] sm:$0xff] %vm285, %v2283
      %2316 = vst.msk [vmem:[#allocation3 + $0x60] sm:$0xff] %vm285, %v2284
      %2317 = vst.msk [vmem:[#allocation3 + $0x68] sm:$0xff] %vm285, %v2285
      %2318 = vst.msk [vmem:[#allocation3 + $0x70] sm:$0xff] %vm285, %v2286
      %2319 = vst.msk [vmem:[#allocation3 + $0x78] sm:$0xff] %vm285, %v2287
      %2320 = vst.msk [vmem:[#allocation3 + $0x80] sm:$0xff] %vm285, %v2288
      %2321 = vst.msk [vmem:[#allocation3 + $0x88] sm:$0xff] %vm285, %v2289
      %2322 = vst.msk [vmem:[#allocation3 + $0x90] sm:$0xff] %vm285, %v2290
      %2323 = vst.msk [vmem:[#allocation3 + $0x98] sm:$0xff] %vm285, %v2291
      %2324 = vst.msk [vmem:[#allocation3 + $0xa0] sm:$0xff] %vm285, %v2292
      %2325 = vst.msk [vmem:[#allocation3 + $0xa8] sm:$0xff] %vm285, %v2293
      %2326 = vst.msk [vmem:[#allocation3 + $0xb0] sm:$0xff] %vm285, %v2294
      %2327 = vst.msk [vmem:[#allocation3 + $0xb8] sm:$0xff] %vm285, %v2295
      %2328 = vst.msk [vmem:[#allocation3 + $0xc0] sm:$0xff] %vm285, %v2296
      %2329 = vst.msk [vmem:[#allocation3 + $0xc8] sm:$0xff] %vm285, %v2297
      %2330 = vst.msk [vmem:[#allocation3 + $0xd0] sm:$0xff] %vm285, %v2298
      %2331 = vst.msk [vmem:[#allocation3 + $0xd8] sm:$0xff] %vm285, %v2299
      %2332 = vst.msk [vmem:[#allocation3 + $0xe0] sm:$0xff] %vm285, %v2300
      %2333 = vst.msk [vmem:[#allocation3 + $0xe8] sm:$0xff] %vm285, %v2301
      %2334 = vst.msk [vmem:[#allocation3 + $0xf0] sm:$0xff] %vm285, %v2302
      %2335 = vst.msk [vmem:[#allocation3 + $0xf8] sm:$0xff] %vm285, %v2303
      %v2336 = vld [vmem:[#allocation3] sm:$0xff]
      %v2337 = vld [vmem:[#allocation3 + $0x8] sm:$0xff]
      %v2338 = vld [vmem:[#allocation3 + $0x10] sm:$0xff]
      %v2339 = vld [vmem:[#allocation3 + $0x18] sm:$0xff]
      %v2340 = vld [vmem:[#allocation3 + $0x20] sm:$0xff]
      %v2341 = vld [vmem:[#allocation3 + $0x28] sm:$0xff]
      %v2342 = vld [vmem:[#allocation3 + $0x30] sm:$0xff]
      %v2343 = vld [vmem:[#allocation3 + $0x38] sm:$0xff]
      %v2344 = vld [vmem:[#allocation3 + $0x40] sm:$0xff]
      %v2345 = vld [vmem:[#allocation3 + $0x48] sm:$0xff]
      %v2346 = vld [vmem:[#allocation3 + $0x50] sm:$0xff]
      %v2347 = vld [vmem:[#allocation3 + $0x58] sm:$0xff]
      %v2348 = vld [vmem:[#allocation3 + $0x60] sm:$0xff]
      %v2349 = vld [vmem:[#allocation3 + $0x68] sm:$0xff]
      %v2350 = vld [vmem:[#allocation3 + $0x70] sm:$0xff]
      %v2351 = vld [vmem:[#allocation3 + $0x78] sm:$0xff]
      %v2352 = vld [vmem:[#allocation3 + $0x80] sm:$0xff]
      %v2353 = vld [vmem:[#allocation3 + $0x88] sm:$0xff]
      %v2354 = vld [vmem:[#allocation3 + $0x90] sm:$0xff]
      %v2355 = vld [vmem:[#allocation3 + $0x98] sm:$0xff]
      %v2356 = vld [vmem:[#allocation3 + $0xa0] sm:$0xff]
      %v2357 = vld [vmem:[#allocation3 + $0xa8] sm:$0xff]
      %v2358 = vld [vmem:[#allocation3 + $0xb0] sm:$0xff]
      %v2359 = vld [vmem:[#allocation3 + $0xb8] sm:$0xff]
      %v2360 = vld [vmem:[#allocation3 + $0xc0] sm:$0xff]
      %v2361 = vld [vmem:[#allocation3 + $0xc8] sm:$0xff]
      %v2362 = vld [vmem:[#allocation3 + $0xd0] sm:$0xff]
      %v2363 = vld [vmem:[#allocation3 + $0xd8] sm:$0xff]
      %v2364 = vld [vmem:[#allocation3 + $0xe0] sm:$0xff]
      %v2365 = vld [vmem:[#allocation3 + $0xe8] sm:$0xff]
      %v2366 = vld [vmem:[#allocation3 + $0xf0] sm:$0xff]
      %v2367 = vld [vmem:[#allocation3 + $0xf8] sm:$0xff]
      %s2368 = scalar_lea.vmem [#allocation2], 16
      %v2369 = vld [vmem:[%s2368] sm:$0xf]
      %v2370 = vld [vmem:[%s2368 + $0x4] sm:$0xf]
      %v2371 = vld [vmem:[%s2368 + $0x8] sm:$0xf]
      %v2372 = vld [vmem:[%s2368 + $0xc] sm:$0xf]
      %v2373 = vld [vmem:[%s2368 + $0x10] sm:$0xf]
      %v2374 = vld [vmem:[%s2368 + $0x14] sm:$0xf]
      %v2375 = vld [vmem:[%s2368 + $0x18] sm:$0xf]
      %v2376 = vld [vmem:[%s2368 + $0x1c] sm:$0xf]
      %v2377 = vld [vmem:[%s2368 + $0x20] sm:$0xf]
      %v2378 = vld [vmem:[%s2368 + $0x24] sm:$0xf]
      %v2379 = vld [vmem:[%s2368 + $0x28] sm:$0xf]
      %v2380 = vld [vmem:[%s2368 + $0x2c] sm:$0xf]
      %v2381 = vld [vmem:[%s2368 + $0x30] sm:$0xf]
      %v2382 = vld [vmem:[%s2368 + $0x34] sm:$0xf]
      %v2383 = vld [vmem:[%s2368 + $0x38] sm:$0xf]
      %v2384 = vld [vmem:[%s2368 + $0x3c] sm:$0xf]
      %v2385 = vld [vmem:[%s2368 + $0x40] sm:$0xf]
      %v2386 = vld [vmem:[%s2368 + $0x44] sm:$0xf]
      %v2387 = vld [vmem:[%s2368 + $0x48] sm:$0xf]
      %v2388 = vld [vmem:[%s2368 + $0x4c] sm:$0xf]
      %v2389 = vld [vmem:[%s2368 + $0x50] sm:$0xf]
      %v2390 = vld [vmem:[%s2368 + $0x54] sm:$0xf]
      %v2391 = vld [vmem:[%s2368 + $0x58] sm:$0xf]
      %v2392 = vld [vmem:[%s2368 + $0x5c] sm:$0xf]
      %v2393 = vld [vmem:[%s2368 + $0x60] sm:$0xf]
      %v2394 = vld [vmem:[%s2368 + $0x64] sm:$0xf]
      %v2395 = vld [vmem:[%s2368 + $0x68] sm:$0xf]
      %v2396 = vld [vmem:[%s2368 + $0x6c] sm:$0xf]
      %v2397 = vld [vmem:[%s2368 + $0x70] sm:$0xf]
      %v2398 = vld [vmem:[%s2368 + $0x74] sm:$0xf]
      %v2399 = vld [vmem:[%s2368 + $0x78] sm:$0xf]
      %v2400 = vld [vmem:[%s2368 + $0x7c] sm:$0xf]
      %s2401 = scalar_lea.vmem %s3, 8
      %v2402 = vld [vmem:[%s2401] sm:$0x7]
      %v2435 = vunpack.c.l.b16 %v2369
      %v2436 = vunpack.c.l.b16 %v2370
      %v2437 = vunpack.c.l.b16 %v2371
      %v2438 = vunpack.c.l.b16 %v2372
      %v2439 = vunpack.c.l.b16 %v2373
      %v2440 = vunpack.c.l.b16 %v2374
      %v2441 = vunpack.c.l.b16 %v2375
      %v2442 = vunpack.c.l.b16 %v2376
      %v2443 = vunpack.c.l.b16 %v2377
      %v2444 = vunpack.c.l.b16 %v2378
      %v2445 = vunpack.c.l.b16 %v2379
      %v2446 = vunpack.c.l.b16 %v2380
      %v2447 = vunpack.c.l.b16 %v2381
      %v2448 = vunpack.c.l.b16 %v2382
      %v2449 = vunpack.c.l.b16 %v2383
      %v2450 = vunpack.c.l.b16 %v2384
      %v2451 = vunpack.c.l.b16 %v2385
      %v2452 = vunpack.c.l.b16 %v2386
      %v2453 = vunpack.c.l.b16 %v2387
      %v2454 = vunpack.c.l.b16 %v2388
      %v2455 = vunpack.c.l.b16 %v2389
      %v2456 = vunpack.c.l.b16 %v2390
      %v2457 = vunpack.c.l.b16 %v2391
      %v2458 = vunpack.c.l.b16 %v2392
      %v2459 = vunpack.c.l.b16 %v2393
      %v2460 = vunpack.c.l.b16 %v2394
      %v2461 = vunpack.c.l.b16 %v2395
      %v2462 = vunpack.c.l.b16 %v2396
      %v2463 = vunpack.c.l.b16 %v2397
      %v2464 = vunpack.c.l.b16 %v2398
      %v2465 = vunpack.c.l.b16 %v2399
      %v2466 = vunpack.c.l.b16 %v2400
      %v2467 = vpack.c.b16 %v2436, %v2435
      %v2468 = vpack.c.b16 %v2438, %v2437
      %v2469 = vpack.c.b16 %v2440, %v2439
      %v2470 = vpack.c.b16 %v2442, %v2441
      %v2471 = vpack.c.b16 %v2444, %v2443
      %v2472 = vpack.c.b16 %v2446, %v2445
      %v2473 = vpack.c.b16 %v2448, %v2447
      %v2474 = vpack.c.b16 %v2450, %v2449
      %v2475 = vpack.c.b16 %v2452, %v2451
      %v2476 = vpack.c.b16 %v2454, %v2453
      %v2477 = vpack.c.b16 %v2456, %v2455
      %v2478 = vpack.c.b16 %v2458, %v2457
      %v2479 = vpack.c.b16 %v2460, %v2459
      %v2480 = vpack.c.b16 %v2462, %v2461
      %v2481 = vpack.c.b16 %v2464, %v2463
      %v2482 = vpack.c.b16 %v2466, %v2465
      %v2484 = vsel %vm1812, %v2467, 0
      %v2487 = vsel %vm1812, %v2468, 0
      %v2490 = vsel %vm1812, %v2469, 0
      %v2493 = vsel %vm1812, %v2470, 0
      %v2496 = vsel %vm1812, %v2471, 0
      %v2499 = vsel %vm1812, %v2472, 0
      %v2502 = vsel %vm1812, %v2473, 0
      %v2505 = vsel %vm1812, %v2474, 0
      %v2508 = vsel %vm1812, %v2475, 0
      %v2511 = vsel %vm1812, %v2476, 0
      %v2514 = vsel %vm1812, %v2477, 0
      %v2517 = vsel %vm1812, %v2478, 0
      %v2520 = vsel %vm1812, %v2479, 0
      %v2523 = vsel %vm1812, %v2480, 0
      %v2526 = vsel %vm1812, %v2481, 0
      %v2529 = vsel %vm1812, %v2482, 0
      %v2532 = vsel %vm1861, %v2402, 0
      %2534 = vmatpush.bf16.msra.mxu0 0
      %2535 = vmatpush.bf16.msra.mxu0 0
      %2536 = vmatpush.bf16.msra.mxu0 0
      %2537 = vmatpush.bf16.msra.mxu0 0
      %2538 = vmatpush.bf16.msra.mxu0 0
      %2539 = vmatpush.bf16.msra.mxu0 0
      %2540 = vmatpush.bf16.msra.mxu0 0
      %2541 = vmatpush.bf16.msra.mxu0 %v2532
      %2542 = vmatmul.bf16.gmra.mxu0 %v2484
      %v2543 = vpop.f32.mrf.mxu0
      %v2544 = vadd.f32 0.0, %v2543
      %v2545 = vpop.f32.mrf.mxu0
      %v2546 = vadd.f32 0.0, %v2545
      %2547 = vmatmul.bf16.gmra.mxu0 %v2487
      %v2548 = vpop.f32.mrf.mxu0
      %v2549 = vadd.f32 0.0, %v2548
      %v2550 = vpop.f32.mrf.mxu0
      %v2551 = vadd.f32 0.0, %v2550
      %2552 = vmatmul.bf16.gmra.mxu0 %v2490
      %v2553 = vpop.f32.mrf.mxu0
      %v2554 = vadd.f32 0.0, %v2553
      %v2555 = vpop.f32.mrf.mxu0
      %v2556 = vadd.f32 0.0, %v2555
      %2557 = vmatmul.bf16.gmra.mxu0 %v2493
      %v2558 = vpop.f32.mrf.mxu0
      %v2559 = vadd.f32 0.0, %v2558
      %v2560 = vpop.f32.mrf.mxu0
      %v2561 = vadd.f32 0.0, %v2560
      %2562 = vmatmul.bf16.gmra.mxu0 %v2496
      %v2563 = vpop.f32.mrf.mxu0
      %v2564 = vadd.f32 0.0, %v2563
      %v2565 = vpop.f32.mrf.mxu0
      %v2566 = vadd.f32 0.0, %v2565
      %2567 = vmatmul.bf16.gmra.mxu0 %v2499
      %v2568 = vpop.f32.mrf.mxu0
      %v2569 = vadd.f32 0.0, %v2568
      %v2570 = vpop.f32.mrf.mxu0
      %v2571 = vadd.f32 0.0, %v2570
      %2572 = vmatmul.bf16.gmra.mxu0 %v2502
      %v2573 = vpop.f32.mrf.mxu0
      %v2574 = vadd.f32 0.0, %v2573
      %v2575 = vpop.f32.mrf.mxu0
      %v2576 = vadd.f32 0.0, %v2575
      %2577 = vmatmul.bf16.gmra.mxu0 %v2505
      %v2578 = vpop.f32.mrf.mxu0
      %v2579 = vadd.f32 0.0, %v2578
      %v2580 = vpop.f32.mrf.mxu0
      %v2581 = vadd.f32 0.0, %v2580
      %2582 = vmatmul.bf16.gmra.mxu0 %v2508
      %v2583 = vpop.f32.mrf.mxu0
      %v2584 = vadd.f32 0.0, %v2583
      %v2585 = vpop.f32.mrf.mxu0
      %v2586 = vadd.f32 0.0, %v2585
      %2587 = vmatmul.bf16.gmra.mxu0 %v2511
      %v2588 = vpop.f32.mrf.mxu0
      %v2589 = vadd.f32 0.0, %v2588
      %v2590 = vpop.f32.mrf.mxu0
      %v2591 = vadd.f32 0.0, %v2590
      %2592 = vmatmul.bf16.gmra.mxu0 %v2514
      %v2593 = vpop.f32.mrf.mxu0
      %v2594 = vadd.f32 0.0, %v2593
      %v2595 = vpop.f32.mrf.mxu0
      %v2596 = vadd.f32 0.0, %v2595
      %2597 = vmatmul.bf16.gmra.mxu0 %v2517
      %v2598 = vpop.f32.mrf.mxu0
      %v2599 = vadd.f32 0.0, %v2598
      %v2600 = vpop.f32.mrf.mxu0
      %v2601 = vadd.f32 0.0, %v2600
      %2602 = vmatmul.bf16.gmra.mxu0 %v2520
      %v2603 = vpop.f32.mrf.mxu0
      %v2604 = vadd.f32 0.0, %v2603
      %v2605 = vpop.f32.mrf.mxu0
      %v2606 = vadd.f32 0.0, %v2605
      %2607 = vmatmul.bf16.gmra.mxu0 %v2523
      %v2608 = vpop.f32.mrf.mxu0
      %v2609 = vadd.f32 0.0, %v2608
      %v2610 = vpop.f32.mrf.mxu0
      %v2611 = vadd.f32 0.0, %v2610
      %2612 = vmatmul.bf16.gmra.mxu0 %v2526
      %v2613 = vpop.f32.mrf.mxu0
      %v2614 = vadd.f32 0.0, %v2613
      %v2615 = vpop.f32.mrf.mxu0
      %v2616 = vadd.f32 0.0, %v2615
      %2617 = vmatmul.bf16.gmra.mxu0 %v2529
      %v2618 = vpop.f32.mrf.mxu0
      %v2619 = vadd.f32 0.0, %v2618
      %v2620 = vpop.f32.mrf.mxu0
      %v2621 = vadd.f32 0.0, %v2620
      %2622 = vdwg.mxu0
      %v2623 = vadd.f32 %v2336, %v2544
      %v2624 = vadd.f32 %v2337, %v2546
      %v2625 = vadd.f32 %v2338, %v2549
      %v2626 = vadd.f32 %v2339, %v2551
      %v2627 = vadd.f32 %v2340, %v2554
      %v2628 = vadd.f32 %v2341, %v2556
      %v2629 = vadd.f32 %v2342, %v2559
      %v2630 = vadd.f32 %v2343, %v2561
      %v2631 = vadd.f32 %v2344, %v2564
      %v2632 = vadd.f32 %v2345, %v2566
      %v2633 = vadd.f32 %v2346, %v2569
      %v2634 = vadd.f32 %v2347, %v2571
      %v2635 = vadd.f32 %v2348, %v2574
      %v2636 = vadd.f32 %v2349, %v2576
      %v2637 = vadd.f32 %v2350, %v2579
      %v2638 = vadd.f32 %v2351, %v2581
      %v2639 = vadd.f32 %v2352, %v2584
      %v2640 = vadd.f32 %v2353, %v2586
      %v2641 = vadd.f32 %v2354, %v2589
      %v2642 = vadd.f32 %v2355, %v2591
      %v2643 = vadd.f32 %v2356, %v2594
      %v2644 = vadd.f32 %v2357, %v2596
      %v2645 = vadd.f32 %v2358, %v2599
      %v2646 = vadd.f32 %v2359, %v2601
      %v2647 = vadd.f32 %v2360, %v2604
      %v2648 = vadd.f32 %v2361, %v2606
      %v2649 = vadd.f32 %v2362, %v2609
      %v2650 = vadd.f32 %v2363, %v2611
      %v2651 = vadd.f32 %v2364, %v2614
      %v2652 = vadd.f32 %v2365, %v2616
      %v2653 = vadd.f32 %v2366, %v2619
      %v2654 = vadd.f32 %v2367, %v2621
      %2655 = vst.msk [vmem:[#allocation3] sm:$0xff] %vm285, %v2623
      %2656 = vst.msk [vmem:[#allocation3 + $0x8] sm:$0xff] %vm285, %v2624
      %2657 = vst.msk [vmem:[#allocation3 + $0x10] sm:$0xff] %vm285, %v2625
      %2658 = vst.msk [vmem:[#allocation3 + $0x18] sm:$0xff] %vm285, %v2626
      %2659 = vst.msk [vmem:[#allocation3 + $0x20] sm:$0xff] %vm285, %v2627
      %2660 = vst.msk [vmem:[#allocation3 + $0x28] sm:$0xff] %vm285, %v2628
      %2661 = vst.msk [vmem:[#allocation3 + $0x30] sm:$0xff] %vm285, %v2629
      %2662 = vst.msk [vmem:[#allocation3 + $0x38] sm:$0xff] %vm285, %v2630
      %2663 = vst.msk [vmem:[#allocation3 + $0x40] sm:$0xff] %vm285, %v2631
      %2664 = vst.msk [vmem:[#allocation3 + $0x48] sm:$0xff] %vm285, %v2632
      %2665 = vst.msk [vmem:[#allocation3 + $0x50] sm:$0xff] %vm285, %v2633
      %2666 = vst.msk [vmem:[#allocation3 + $0x58] sm:$0xff] %vm285, %v2634
      %2667 = vst.msk [vmem:[#allocation3 + $0x60] sm:$0xff] %vm285, %v2635
      %2668 = vst.msk [vmem:[#allocation3 + $0x68] sm:$0xff] %vm285, %v2636
      %2669 = vst.msk [vmem:[#allocation3 + $0x70] sm:$0xff] %vm285, %v2637
      %2670 = vst.msk [vmem:[#allocation3 + $0x78] sm:$0xff] %vm285, %v2638
      %2671 = vst.msk [vmem:[#allocation3 + $0x80] sm:$0xff] %vm285, %v2639
      %2672 = vst.msk [vmem:[#allocation3 + $0x88] sm:$0xff] %vm285, %v2640
      %2673 = vst.msk [vmem:[#allocation3 + $0x90] sm:$0xff] %vm285, %v2641
      %2674 = vst.msk [vmem:[#allocation3 + $0x98] sm:$0xff] %vm285, %v2642
      %2675 = vst.msk [vmem:[#allocation3 + $0xa0] sm:$0xff] %vm285, %v2643
      %2676 = vst.msk [vmem:[#allocation3 + $0xa8] sm:$0xff] %vm285, %v2644
      %2677 = vst.msk [vmem:[#allocation3 + $0xb0] sm:$0xff] %vm285, %v2645
      %2678 = vst.msk [vmem:[#allocation3 + $0xb8] sm:$0xff] %vm285, %v2646
      %2679 = vst.msk [vmem:[#allocation3 + $0xc0] sm:$0xff] %vm285, %v2647
      %2680 = vst.msk [vmem:[#allocation3 + $0xc8] sm:$0xff] %vm285, %v2648
      %2681 = vst.msk [vmem:[#allocation3 + $0xd0] sm:$0xff] %vm285, %v2649
      %2682 = vst.msk [vmem:[#allocation3 + $0xd8] sm:$0xff] %vm285, %v2650
      %2683 = vst.msk [vmem:[#allocation3 + $0xe0] sm:$0xff] %vm285, %v2651
      %2684 = vst.msk [vmem:[#allocation3 + $0xe8] sm:$0xff] %vm285, %v2652
      %2685 = vst.msk [vmem:[#allocation3 + $0xf0] sm:$0xff] %vm285, %v2653
      %2686 = vst.msk [vmem:[#allocation3 + $0xf8] sm:$0xff] %vm285, %v2654
      %v2687 = vld [vmem:[#allocation3] sm:$0xff]
      %v2688 = vld [vmem:[#allocation3 + $0x8] sm:$0xff]
      %v2689 = vld [vmem:[#allocation3 + $0x10] sm:$0xff]
      %v2690 = vld [vmem:[#allocation3 + $0x18] sm:$0xff]
      %v2691 = vld [vmem:[#allocation3 + $0x20] sm:$0xff]
      %v2692 = vld [vmem:[#allocation3 + $0x28] sm:$0xff]
      %v2693 = vld [vmem:[#allocation3 + $0x30] sm:$0xff]
      %v2694 = vld [vmem:[#allocation3 + $0x38] sm:$0xff]
      %v2695 = vld [vmem:[#allocation3 + $0x40] sm:$0xff]
      %v2696 = vld [vmem:[#allocation3 + $0x48] sm:$0xff]
      %v2697 = vld [vmem:[#allocation3 + $0x50] sm:$0xff]
      %v2698 = vld [vmem:[#allocation3 + $0x58] sm:$0xff]
      %v2699 = vld [vmem:[#allocation3 + $0x60] sm:$0xff]
      %v2700 = vld [vmem:[#allocation3 + $0x68] sm:$0xff]
      %v2701 = vld [vmem:[#allocation3 + $0x70] sm:$0xff]
      %v2702 = vld [vmem:[#allocation3 + $0x78] sm:$0xff]
      %v2703 = vld [vmem:[#allocation3 + $0x80] sm:$0xff]
      %v2704 = vld [vmem:[#allocation3 + $0x88] sm:$0xff]
      %v2705 = vld [vmem:[#allocation3 + $0x90] sm:$0xff]
      %v2706 = vld [vmem:[#allocation3 + $0x98] sm:$0xff]
      %v2707 = vld [vmem:[#allocation3 + $0xa0] sm:$0xff]
      %v2708 = vld [vmem:[#allocation3 + $0xa8] sm:$0xff]
      %v2709 = vld [vmem:[#allocation3 + $0xb0] sm:$0xff]
      %v2710 = vld [vmem:[#allocation3 + $0xb8] sm:$0xff]
      %v2711 = vld [vmem:[#allocation3 + $0xc0] sm:$0xff]
      %v2712 = vld [vmem:[#allocation3 + $0xc8] sm:$0xff]
      %v2713 = vld [vmem:[#allocation3 + $0xd0] sm:$0xff]
      %v2714 = vld [vmem:[#allocation3 + $0xd8] sm:$0xff]
      %v2715 = vld [vmem:[#allocation3 + $0xe0] sm:$0xff]
      %v2716 = vld [vmem:[#allocation3 + $0xe8] sm:$0xff]
      %v2717 = vld [vmem:[#allocation3 + $0xf0] sm:$0xff]
      %v2718 = vld [vmem:[#allocation3 + $0xf8] sm:$0xff]
      %v2719 = vld [vmem:[%s4] sm:$0x1]
      %v2721 = vperm.slane %v2719, 0
      %v2723 = vadd.f32 %v2687, %v2721
      %v2724 = vadd.f32 %v2688, %v2721
      %v2725 = vadd.f32 %v2689, %v2721
      %v2726 = vadd.f32 %v2690, %v2721
      %v2727 = vadd.f32 %v2691, %v2721
      %v2728 = vadd.f32 %v2692, %v2721
      %v2729 = vadd.f32 %v2693, %v2721
      %v2730 = vadd.f32 %v2694, %v2721
      %v2731 = vadd.f32 %v2695, %v2721
      %v2732 = vadd.f32 %v2696, %v2721
      %v2733 = vadd.f32 %v2697, %v2721
      %v2734 = vadd.f32 %v2698, %v2721
      %v2735 = vadd.f32 %v2699, %v2721
      %v2736 = vadd.f32 %v2700, %v2721
      %v2737 = vadd.f32 %v2701, %v2721
      %v2738 = vadd.f32 %v2702, %v2721
      %v2739 = vadd.f32 %v2703, %v2721
      %v2740 = vadd.f32 %v2704, %v2721
      %v2741 = vadd.f32 %v2705, %v2721
      %v2742 = vadd.f32 %v2706, %v2721
      %v2743 = vadd.f32 %v2707, %v2721
      %v2744 = vadd.f32 %v2708, %v2721
      %v2745 = vadd.f32 %v2709, %v2721
      %v2746 = vadd.f32 %v2710, %v2721
      %v2747 = vadd.f32 %v2711, %v2721
      %v2748 = vadd.f32 %v2712, %v2721
      %v2749 = vadd.f32 %v2713, %v2721
      %v2750 = vadd.f32 %v2714, %v2721
      %v2751 = vadd.f32 %v2715, %v2721
      %v2752 = vadd.f32 %v2716, %v2721
      %v2753 = vadd.f32 %v2717, %v2721
      %v2754 = vadd.f32 %v2718, %v2721
      %v2755 = vxor.u32 %v2723, 2147483648
      %v2756 = vxor.u32 %v2724, 2147483648
      %v2757 = vxor.u32 %v2725, 2147483648
      %v2758 = vxor.u32 %v2726, 2147483648
      %v2759 = vxor.u32 %v2727, 2147483648
      %v2760 = vxor.u32 %v2728, 2147483648
      %v2761 = vxor.u32 %v2729, 2147483648
      %v2762 = vxor.u32 %v2730, 2147483648
      %v2763 = vxor.u32 %v2731, 2147483648
      %v2764 = vxor.u32 %v2732, 2147483648
      %v2765 = vxor.u32 %v2733, 2147483648
      %v2766 = vxor.u32 %v2734, 2147483648
      %v2767 = vxor.u32 %v2735, 2147483648
      %v2768 = vxor.u32 %v2736, 2147483648
      %v2769 = vxor.u32 %v2737, 2147483648
      %v2770 = vxor.u32 %v2738, 2147483648
      %v2771 = vxor.u32 %v2739, 2147483648
      %v2772 = vxor.u32 %v2740, 2147483648
      %v2773 = vxor.u32 %v2741, 2147483648
      %v2774 = vxor.u32 %v2742, 2147483648
      %v2775 = vxor.u32 %v2743, 2147483648
      %v2776 = vxor.u32 %v2744, 2147483648
      %v2777 = vxor.u32 %v2745, 2147483648
      %v2778 = vxor.u32 %v2746, 2147483648
      %v2779 = vxor.u32 %v2747, 2147483648
      %v2780 = vxor.u32 %v2748, 2147483648
      %v2781 = vxor.u32 %v2749, 2147483648
      %v2782 = vxor.u32 %v2750, 2147483648
      %v2783 = vxor.u32 %v2751, 2147483648
      %v2784 = vxor.u32 %v2752, 2147483648
      %v2785 = vxor.u32 %v2753, 2147483648
      %v2786 = vxor.u32 %v2754, 2147483648
      %v2787 = vmul.f32 %v2755, 1.442695
      %v2788 = vpow.pop %v2787
      %v2789 = vmul.f32 %v2756, 1.442695
      %v2790 = vpow.pop %v2789
      %v2791 = vmul.f32 %v2757, 1.442695
      %v2792 = vpow.pop %v2791
      %v2793 = vmul.f32 %v2758, 1.442695
      %v2794 = vpow.pop %v2793
      %v2795 = vmul.f32 %v2759, 1.442695
      %v2796 = vpow.pop %v2795
      %v2797 = vmul.f32 %v2760, 1.442695
      %v2798 = vpow.pop %v2797
      %v2799 = vmul.f32 %v2761, 1.442695
      %v2800 = vpow.pop %v2799
      %v2801 = vmul.f32 %v2762, 1.442695
      %v2802 = vpow.pop %v2801
      %v2803 = vmul.f32 %v2763, 1.442695
      %v2804 = vpow.pop %v2803
      %v2805 = vmul.f32 %v2764, 1.442695
      %v2806 = vpow.pop %v2805
      %v2807 = vmul.f32 %v2765, 1.442695
      %v2808 = vpow.pop %v2807
      %v2809 = vmul.f32 %v2766, 1.442695
      %v2810 = vpow.pop %v2809
      %v2811 = vmul.f32 %v2767, 1.442695
      %v2812 = vpow.pop %v2811
      %v2813 = vmul.f32 %v2768, 1.442695
      %v2814 = vpow.pop %v2813
      %v2815 = vmul.f32 %v2769, 1.442695
      %v2816 = vpow.pop %v2815
      %v2817 = vmul.f32 %v2770, 1.442695
      %v2818 = vpow.pop %v2817
      %v2819 = vmul.f32 %v2771, 1.442695
      %v2820 = vpow.pop %v2819
      %v2821 = vmul.f32 %v2772, 1.442695
      %v2822 = vpow.pop %v2821
      %v2823 = vmul.f32 %v2773, 1.442695
      %v2824 = vpow.pop %v2823
      %v2825 = vmul.f32 %v2774, 1.442695
      %v2826 = vpow.pop %v2825
      %v2827 = vmul.f32 %v2775, 1.442695
      %v2828 = vpow.pop %v2827
      %v2829 = vmul.f32 %v2776, 1.442695
      %v2830 = vpow.pop %v2829
      %v2831 = vmul.f32 %v2777, 1.442695
      %v2832 = vpow.pop %v2831
      %v2833 = vmul.f32 %v2778, 1.442695
      %v2834 = vpow.pop %v2833
      %v2835 = vmul.f32 %v2779, 1.442695
      %v2836 = vpow.pop %v2835
      %v2837 = vmul.f32 %v2780, 1.442695
      %v2838 = vpow.pop %v2837
      %v2839 = vmul.f32 %v2781, 1.442695
      %v2840 = vpow.pop %v2839
      %v2841 = vmul.f32 %v2782, 1.442695
      %v2842 = vpow.pop %v2841
      %v2843 = vmul.f32 %v2783, 1.442695
      %v2844 = vpow.pop %v2843
      %v2845 = vmul.f32 %v2784, 1.442695
      %v2846 = vpow.pop %v2845
      %v2847 = vmul.f32 %v2785, 1.442695
      %v2848 = vpow.pop %v2847
      %v2849 = vmul.f32 %v2786, 1.442695
      %v2850 = vpow.pop %v2849
      %v2851 = vadd.f32 %v2788, 1.0
      %v2852 = vadd.f32 %v2790, 1.0
      %v2853 = vadd.f32 %v2792, 1.0
      %v2854 = vadd.f32 %v2794, 1.0
      %v2855 = vadd.f32 %v2796, 1.0
      %v2856 = vadd.f32 %v2798, 1.0
      %v2857 = vadd.f32 %v2800, 1.0
      %v2858 = vadd.f32 %v2802, 1.0
      %v2859 = vadd.f32 %v2804, 1.0
      %v2860 = vadd.f32 %v2806, 1.0
      %v2861 = vadd.f32 %v2808, 1.0
      %v2862 = vadd.f32 %v2810, 1.0
      %v2863 = vadd.f32 %v2812, 1.0
      %v2864 = vadd.f32 %v2814, 1.0
      %v2865 = vadd.f32 %v2816, 1.0
      %v2866 = vadd.f32 %v2818, 1.0
      %v2867 = vadd.f32 %v2820, 1.0
      %v2868 = vadd.f32 %v2822, 1.0
      %v2869 = vadd.f32 %v2824, 1.0
      %v2870 = vadd.f32 %v2826, 1.0
      %v2871 = vadd.f32 %v2828, 1.0
      %v2872 = vadd.f32 %v2830, 1.0
      %v2873 = vadd.f32 %v2832, 1.0
      %v2874 = vadd.f32 %v2834, 1.0
      %v2875 = vadd.f32 %v2836, 1.0
      %v2876 = vadd.f32 %v2838, 1.0
      %v2877 = vadd.f32 %v2840, 1.0
      %v2878 = vadd.f32 %v2842, 1.0
      %v2879 = vadd.f32 %v2844, 1.0
      %v2880 = vadd.f32 %v2846, 1.0
      %v2881 = vadd.f32 %v2848, 1.0
      %v2882 = vadd.f32 %v2850, 1.0
      %v2883 = vrcp.pop %v2851
      %v2884 = vmul.f32 %v2851, %v2883
      %v2885 = vsub.f32 1.0, %v2884
      %v2886 = vmul.f32 %v2883, %v2885
      %v2887 = vadd.f32 %v2883, %v2886
      %vm2888 = vweird.f32 %v2851
      %vm2889 = vweird.f32 %v2883
      %vm2890 = vmor %vm2888, %vm2889
      %v2891 = vsel %vm2890, %v2883, %v2887
      %v2892 = vand.u32 2147483647, %v2851
      %vm2893 = vcmp.eq.f32.partialorder %v2892, 8.507059e+37
      %v2894 = vand.u32 %v2851, 2147483648
      %v2895 = vor.u32 1.1754944e-38, %v2894
      %v2896 = vsel %vm2893, %v2895, %v2891
      %v2897 = vmul.f32 1.0, %v2896
      %v2898 = vrcp.pop %v2852
      %v2899 = vmul.f32 %v2852, %v2898
      %v2900 = vsub.f32 1.0, %v2899
      %v2901 = vmul.f32 %v2898, %v2900
      %v2902 = vadd.f32 %v2898, %v2901
      %vm2903 = vweird.f32 %v2852
      %vm2904 = vweird.f32 %v2898
      %vm2905 = vmor %vm2903, %vm2904
      %v2906 = vsel %vm2905, %v2898, %v2902
      %v2907 = vand.u32 2147483647, %v2852
      %vm2908 = vcmp.eq.f32.partialorder %v2907, 8.507059e+37
      %v2909 = vand.u32 %v2852, 2147483648
      %v2910 = vor.u32 1.1754944e-38, %v2909
      %v2911 = vsel %vm2908, %v2910, %v2906
      %v2912 = vmul.f32 1.0, %v2911
      %v2913 = vrcp.pop %v2853
      %v2914 = vmul.f32 %v2853, %v2913
      %v2915 = vsub.f32 1.0, %v2914
      %v2916 = vmul.f32 %v2913, %v2915
      %v2917 = vadd.f32 %v2913, %v2916
      %vm2918 = vweird.f32 %v2853
      %vm2919 = vweird.f32 %v2913
      %vm2920 = vmor %vm2918, %vm2919
      %v2921 = vsel %vm2920, %v2913, %v2917
      %v2922 = vand.u32 2147483647, %v2853
      %vm2923 = vcmp.eq.f32.partialorder %v2922, 8.507059e+37
      %v2924 = vand.u32 %v2853, 2147483648
      %v2925 = vor.u32 1.1754944e-38, %v2924
      %v2926 = vsel %vm2923, %v2925, %v2921
      %v2927 = vmul.f32 1.0, %v2926
      %v2928 = vrcp.pop %v2854
      %v2929 = vmul.f32 %v2854, %v2928
      %v2930 = vsub.f32 1.0, %v2929
      %v2931 = vmul.f32 %v2928, %v2930
      %v2932 = vadd.f32 %v2928, %v2931
      %vm2933 = vweird.f32 %v2854
      %vm2934 = vweird.f32 %v2928
      %vm2935 = vmor %vm2933, %vm2934
      %v2936 = vsel %vm2935, %v2928, %v2932
      %v2937 = vand.u32 2147483647, %v2854
      %vm2938 = vcmp.eq.f32.partialorder %v2937, 8.507059e+37
      %v2939 = vand.u32 %v2854, 2147483648
      %v2940 = vor.u32 1.1754944e-38, %v2939
      %v2941 = vsel %vm2938, %v2940, %v2936
      %v2942 = vmul.f32 1.0, %v2941
      %v2943 = vrcp.pop %v2855
      %v2944 = vmul.f32 %v2855, %v2943
      %v2945 = vsub.f32 1.0, %v2944
      %v2946 = vmul.f32 %v2943, %v2945
      %v2947 = vadd.f32 %v2943, %v2946
      %vm2948 = vweird.f32 %v2855
      %vm2949 = vweird.f32 %v2943
      %vm2950 = vmor %vm2948, %vm2949
      %v2951 = vsel %vm2950, %v2943, %v2947
      %v2952 = vand.u32 2147483647, %v2855
      %vm2953 = vcmp.eq.f32.partialorder %v2952, 8.507059e+37
      %v2954 = vand.u32 %v2855, 2147483648
      %v2955 = vor.u32 1.1754944e-38, %v2954
      %v2956 = vsel %vm2953, %v2955, %v2951
      %v2957 = vmul.f32 1.0, %v2956
      %v2958 = vrcp.pop %v2856
      %v2959 = vmul.f32 %v2856, %v2958
      %v2960 = vsub.f32 1.0, %v2959
      %v2961 = vmul.f32 %v2958, %v2960
      %v2962 = vadd.f32 %v2958, %v2961
      %vm2963 = vweird.f32 %v2856
      %vm2964 = vweird.f32 %v2958
      %vm2965 = vmor %vm2963, %vm2964
      %v2966 = vsel %vm2965, %v2958, %v2962
      %v2967 = vand.u32 2147483647, %v2856
      %vm2968 = vcmp.eq.f32.partialorder %v2967, 8.507059e+37
      %v2969 = vand.u32 %v2856, 2147483648
      %v2970 = vor.u32 1.1754944e-38, %v2969
      %v2971 = vsel %vm2968, %v2970, %v2966
      %v2972 = vmul.f32 1.0, %v2971
      %v2973 = vrcp.pop %v2857
      %v2974 = vmul.f32 %v2857, %v2973
      %v2975 = vsub.f32 1.0, %v2974
      %v2976 = vmul.f32 %v2973, %v2975
      %v2977 = vadd.f32 %v2973, %v2976
      %vm2978 = vweird.f32 %v2857
      %vm2979 = vweird.f32 %v2973
      %vm2980 = vmor %vm2978, %vm2979
      %v2981 = vsel %vm2980, %v2973, %v2977
      %v2982 = vand.u32 2147483647, %v2857
      %vm2983 = vcmp.eq.f32.partialorder %v2982, 8.507059e+37
      %v2984 = vand.u32 %v2857, 2147483648
      %v2985 = vor.u32 1.1754944e-38, %v2984
      %v2986 = vsel %vm2983, %v2985, %v2981
      %v2987 = vmul.f32 1.0, %v2986
      %v2988 = vrcp.pop %v2858
      %v2989 = vmul.f32 %v2858, %v2988
      %v2990 = vsub.f32 1.0, %v2989
      %v2991 = vmul.f32 %v2988, %v2990
      %v2992 = vadd.f32 %v2988, %v2991
      %vm2993 = vweird.f32 %v2858
      %vm2994 = vweird.f32 %v2988
      %vm2995 = vmor %vm2993, %vm2994
      %v2996 = vsel %vm2995, %v2988, %v2992
      %v2997 = vand.u32 2147483647, %v2858
      %vm2998 = vcmp.eq.f32.partialorder %v2997, 8.507059e+37
      %v2999 = vand.u32 %v2858, 2147483648
      %v3000 = vor.u32 1.1754944e-38, %v2999
      %v3001 = vsel %vm2998, %v3000, %v2996
      %v3002 = vmul.f32 1.0, %v3001
      %v3003 = vrcp.pop %v2859
      %v3004 = vmul.f32 %v2859, %v3003
      %v3005 = vsub.f32 1.0, %v3004
      %v3006 = vmul.f32 %v3003, %v3005
      %v3007 = vadd.f32 %v3003, %v3006
      %vm3008 = vweird.f32 %v2859
      %vm3009 = vweird.f32 %v3003
      %vm3010 = vmor %vm3008, %vm3009
      %v3011 = vsel %vm3010, %v3003, %v3007
      %v3012 = vand.u32 2147483647, %v2859
      %vm3013 = vcmp.eq.f32.partialorder %v3012, 8.507059e+37
      %v3014 = vand.u32 %v2859, 2147483648
      %v3015 = vor.u32 1.1754944e-38, %v3014
      %v3016 = vsel %vm3013, %v3015, %v3011
      %v3017 = vmul.f32 1.0, %v3016
      %v3018 = vrcp.pop %v2860
      %v3019 = vmul.f32 %v2860, %v3018
      %v3020 = vsub.f32 1.0, %v3019
      %v3021 = vmul.f32 %v3018, %v3020
      %v3022 = vadd.f32 %v3018, %v3021
      %vm3023 = vweird.f32 %v2860
      %vm3024 = vweird.f32 %v3018
      %vm3025 = vmor %vm3023, %vm3024
      %v3026 = vsel %vm3025, %v3018, %v3022
      %v3027 = vand.u32 2147483647, %v2860
      %vm3028 = vcmp.eq.f32.partialorder %v3027, 8.507059e+37
      %v3029 = vand.u32 %v2860, 2147483648
      %v3030 = vor.u32 1.1754944e-38, %v3029
      %v3031 = vsel %vm3028, %v3030, %v3026
      %v3032 = vmul.f32 1.0, %v3031
      %v3033 = vrcp.pop %v2861
      %v3034 = vmul.f32 %v2861, %v3033
      %v3035 = vsub.f32 1.0, %v3034
      %v3036 = vmul.f32 %v3033, %v3035
      %v3037 = vadd.f32 %v3033, %v3036
      %vm3038 = vweird.f32 %v2861
      %vm3039 = vweird.f32 %v3033
      %vm3040 = vmor %vm3038, %vm3039
      %v3041 = vsel %vm3040, %v3033, %v3037
      %v3042 = vand.u32 2147483647, %v2861
      %vm3043 = vcmp.eq.f32.partialorder %v3042, 8.507059e+37
      %v3044 = vand.u32 %v2861, 2147483648
      %v3045 = vor.u32 1.1754944e-38, %v3044
      %v3046 = vsel %vm3043, %v3045, %v3041
      %v3047 = vmul.f32 1.0, %v3046
      %v3048 = vrcp.pop %v2862
      %v3049 = vmul.f32 %v2862, %v3048
      %v3050 = vsub.f32 1.0, %v3049
      %v3051 = vmul.f32 %v3048, %v3050
      %v3052 = vadd.f32 %v3048, %v3051
      %vm3053 = vweird.f32 %v2862
      %vm3054 = vweird.f32 %v3048
      %vm3055 = vmor %vm3053, %vm3054
      %v3056 = vsel %vm3055, %v3048, %v3052
      %v3057 = vand.u32 2147483647, %v2862
      %vm3058 = vcmp.eq.f32.partialorder %v3057, 8.507059e+37
      %v3059 = vand.u32 %v2862, 2147483648
      %v3060 = vor.u32 1.1754944e-38, %v3059
      %v3061 = vsel %vm3058, %v3060, %v3056
      %v3062 = vmul.f32 1.0, %v3061
      %v3063 = vrcp.pop %v2863
      %v3064 = vmul.f32 %v2863, %v3063
      %v3065 = vsub.f32 1.0, %v3064
      %v3066 = vmul.f32 %v3063, %v3065
      %v3067 = vadd.f32 %v3063, %v3066
      %vm3068 = vweird.f32 %v2863
      %vm3069 = vweird.f32 %v3063
      %vm3070 = vmor %vm3068, %vm3069
      %v3071 = vsel %vm3070, %v3063, %v3067
      %v3072 = vand.u32 2147483647, %v2863
      %vm3073 = vcmp.eq.f32.partialorder %v3072, 8.507059e+37
      %v3074 = vand.u32 %v2863, 2147483648
      %v3075 = vor.u32 1.1754944e-38, %v3074
      %v3076 = vsel %vm3073, %v3075, %v3071
      %v3077 = vmul.f32 1.0, %v3076
      %v3078 = vrcp.pop %v2864
      %v3079 = vmul.f32 %v2864, %v3078
      %v3080 = vsub.f32 1.0, %v3079
      %v3081 = vmul.f32 %v3078, %v3080
      %v3082 = vadd.f32 %v3078, %v3081
      %vm3083 = vweird.f32 %v2864
      %vm3084 = vweird.f32 %v3078
      %vm3085 = vmor %vm3083, %vm3084
      %v3086 = vsel %vm3085, %v3078, %v3082
      %v3087 = vand.u32 2147483647, %v2864
      %vm3088 = vcmp.eq.f32.partialorder %v3087, 8.507059e+37
      %v3089 = vand.u32 %v2864, 2147483648
      %v3090 = vor.u32 1.1754944e-38, %v3089
      %v3091 = vsel %vm3088, %v3090, %v3086
      %v3092 = vmul.f32 1.0, %v3091
      %v3093 = vrcp.pop %v2865
      %v3094 = vmul.f32 %v2865, %v3093
      %v3095 = vsub.f32 1.0, %v3094
      %v3096 = vmul.f32 %v3093, %v3095
      %v3097 = vadd.f32 %v3093, %v3096
      %vm3098 = vweird.f32 %v2865
      %vm3099 = vweird.f32 %v3093
      %vm3100 = vmor %vm3098, %vm3099
      %v3101 = vsel %vm3100, %v3093, %v3097
      %v3102 = vand.u32 2147483647, %v2865
      %vm3103 = vcmp.eq.f32.partialorder %v3102, 8.507059e+37
      %v3104 = vand.u32 %v2865, 2147483648
      %v3105 = vor.u32 1.1754944e-38, %v3104
      %v3106 = vsel %vm3103, %v3105, %v3101
      %v3107 = vmul.f32 1.0, %v3106
      %v3108 = vrcp.pop %v2866
      %v3109 = vmul.f32 %v2866, %v3108
      %v3110 = vsub.f32 1.0, %v3109
      %v3111 = vmul.f32 %v3108, %v3110
      %v3112 = vadd.f32 %v3108, %v3111
      %vm3113 = vweird.f32 %v2866
      %vm3114 = vweird.f32 %v3108
      %vm3115 = vmor %vm3113, %vm3114
      %v3116 = vsel %vm3115, %v3108, %v3112
      %v3117 = vand.u32 2147483647, %v2866
      %vm3118 = vcmp.eq.f32.partialorder %v3117, 8.507059e+37
      %v3119 = vand.u32 %v2866, 2147483648
      %v3120 = vor.u32 1.1754944e-38, %v3119
      %v3121 = vsel %vm3118, %v3120, %v3116
      %v3122 = vmul.f32 1.0, %v3121
      %v3123 = vrcp.pop %v2867
      %v3124 = vmul.f32 %v2867, %v3123
      %v3125 = vsub.f32 1.0, %v3124
      %v3126 = vmul.f32 %v3123, %v3125
      %v3127 = vadd.f32 %v3123, %v3126
      %vm3128 = vweird.f32 %v2867
      %vm3129 = vweird.f32 %v3123
      %vm3130 = vmor %vm3128, %vm3129
      %v3131 = vsel %vm3130, %v3123, %v3127
      %v3132 = vand.u32 2147483647, %v2867
      %vm3133 = vcmp.eq.f32.partialorder %v3132, 8.507059e+37
      %v3134 = vand.u32 %v2867, 2147483648
      %v3135 = vor.u32 1.1754944e-38, %v3134
      %v3136 = vsel %vm3133, %v3135, %v3131
      %v3137 = vmul.f32 1.0, %v3136
      %v3138 = vrcp.pop %v2868
      %v3139 = vmul.f32 %v2868, %v3138
      %v3140 = vsub.f32 1.0, %v3139
      %v3141 = vmul.f32 %v3138, %v3140
      %v3142 = vadd.f32 %v3138, %v3141
      %vm3143 = vweird.f32 %v2868
      %vm3144 = vweird.f32 %v3138
      %vm3145 = vmor %vm3143, %vm3144
      %v3146 = vsel %vm3145, %v3138, %v3142
      %v3147 = vand.u32 2147483647, %v2868
      %vm3148 = vcmp.eq.f32.partialorder %v3147, 8.507059e+37
      %v3149 = vand.u32 %v2868, 2147483648
      %v3150 = vor.u32 1.1754944e-38, %v3149
      %v3151 = vsel %vm3148, %v3150, %v3146
      %v3152 = vmul.f32 1.0, %v3151
      %v3153 = vrcp.pop %v2869
      %v3154 = vmul.f32 %v2869, %v3153
      %v3155 = vsub.f32 1.0, %v3154
      %v3156 = vmul.f32 %v3153, %v3155
      %v3157 = vadd.f32 %v3153, %v3156
      %vm3158 = vweird.f32 %v2869
      %vm3159 = vweird.f32 %v3153
      %vm3160 = vmor %vm3158, %vm3159
      %v3161 = vsel %vm3160, %v3153, %v3157
      %v3162 = vand.u32 2147483647, %v2869
      %vm3163 = vcmp.eq.f32.partialorder %v3162, 8.507059e+37
      %v3164 = vand.u32 %v2869, 2147483648
      %v3165 = vor.u32 1.1754944e-38, %v3164
      %v3166 = vsel %vm3163, %v3165, %v3161
      %v3167 = vmul.f32 1.0, %v3166
      %v3168 = vrcp.pop %v2870
      %v3169 = vmul.f32 %v2870, %v3168
      %v3170 = vsub.f32 1.0, %v3169
      %v3171 = vmul.f32 %v3168, %v3170
      %v3172 = vadd.f32 %v3168, %v3171
      %vm3173 = vweird.f32 %v2870
      %vm3174 = vweird.f32 %v3168
      %vm3175 = vmor %vm3173, %vm3174
      %v3176 = vsel %vm3175, %v3168, %v3172
      %v3177 = vand.u32 2147483647, %v2870
      %vm3178 = vcmp.eq.f32.partialorder %v3177, 8.507059e+37
      %v3179 = vand.u32 %v2870, 2147483648
      %v3180 = vor.u32 1.1754944e-38, %v3179
      %v3181 = vsel %vm3178, %v3180, %v3176
      %v3182 = vmul.f32 1.0, %v3181
      %v3183 = vrcp.pop %v2871
      %v3184 = vmul.f32 %v2871, %v3183
      %v3185 = vsub.f32 1.0, %v3184
      %v3186 = vmul.f32 %v3183, %v3185
      %v3187 = vadd.f32 %v3183, %v3186
      %vm3188 = vweird.f32 %v2871
      %vm3189 = vweird.f32 %v3183
      %vm3190 = vmor %vm3188, %vm3189
      %v3191 = vsel %vm3190, %v3183, %v3187
      %v3192 = vand.u32 2147483647, %v2871
      %vm3193 = vcmp.eq.f32.partialorder %v3192, 8.507059e+37
      %v3194 = vand.u32 %v2871, 2147483648
      %v3195 = vor.u32 1.1754944e-38, %v3194
      %v3196 = vsel %vm3193, %v3195, %v3191
      %v3197 = vmul.f32 1.0, %v3196
      %v3198 = vrcp.pop %v2872
      %v3199 = vmul.f32 %v2872, %v3198
      %v3200 = vsub.f32 1.0, %v3199
      %v3201 = vmul.f32 %v3198, %v3200
      %v3202 = vadd.f32 %v3198, %v3201
      %vm3203 = vweird.f32 %v2872
      %vm3204 = vweird.f32 %v3198
      %vm3205 = vmor %vm3203, %vm3204
      %v3206 = vsel %vm3205, %v3198, %v3202
      %v3207 = vand.u32 2147483647, %v2872
      %vm3208 = vcmp.eq.f32.partialorder %v3207, 8.507059e+37
      %v3209 = vand.u32 %v2872, 2147483648
      %v3210 = vor.u32 1.1754944e-38, %v3209
      %v3211 = vsel %vm3208, %v3210, %v3206
      %v3212 = vmul.f32 1.0, %v3211
      %v3213 = vrcp.pop %v2873
      %v3214 = vmul.f32 %v2873, %v3213
      %v3215 = vsub.f32 1.0, %v3214
      %v3216 = vmul.f32 %v3213, %v3215
      %v3217 = vadd.f32 %v3213, %v3216
      %vm3218 = vweird.f32 %v2873
      %vm3219 = vweird.f32 %v3213
      %vm3220 = vmor %vm3218, %vm3219
      %v3221 = vsel %vm3220, %v3213, %v3217
      %v3222 = vand.u32 2147483647, %v2873
      %vm3223 = vcmp.eq.f32.partialorder %v3222, 8.507059e+37
      %v3224 = vand.u32 %v2873, 2147483648
      %v3225 = vor.u32 1.1754944e-38, %v3224
      %v3226 = vsel %vm3223, %v3225, %v3221
      %v3227 = vmul.f32 1.0, %v3226
      %v3228 = vrcp.pop %v2874
      %v3229 = vmul.f32 %v2874, %v3228
      %v3230 = vsub.f32 1.0, %v3229
      %v3231 = vmul.f32 %v3228, %v3230
      %v3232 = vadd.f32 %v3228, %v3231
      %vm3233 = vweird.f32 %v2874
      %vm3234 = vweird.f32 %v3228
      %vm3235 = vmor %vm3233, %vm3234
      %v3236 = vsel %vm3235, %v3228, %v3232
      %v3237 = vand.u32 2147483647, %v2874
      %vm3238 = vcmp.eq.f32.partialorder %v3237, 8.507059e+37
      %v3239 = vand.u32 %v2874, 2147483648
      %v3240 = vor.u32 1.1754944e-38, %v3239
      %v3241 = vsel %vm3238, %v3240, %v3236
      %v3242 = vmul.f32 1.0, %v3241
      %v3243 = vrcp.pop %v2875
      %v3244 = vmul.f32 %v2875, %v3243
      %v3245 = vsub.f32 1.0, %v3244
      %v3246 = vmul.f32 %v3243, %v3245
      %v3247 = vadd.f32 %v3243, %v3246
      %vm3248 = vweird.f32 %v2875
      %vm3249 = vweird.f32 %v3243
      %vm3250 = vmor %vm3248, %vm3249
      %v3251 = vsel %vm3250, %v3243, %v3247
      %v3252 = vand.u32 2147483647, %v2875
      %vm3253 = vcmp.eq.f32.partialorder %v3252, 8.507059e+37
      %v3254 = vand.u32 %v2875, 2147483648
      %v3255 = vor.u32 1.1754944e-38, %v3254
      %v3256 = vsel %vm3253, %v3255, %v3251
      %v3257 = vmul.f32 1.0, %v3256
      %v3258 = vrcp.pop %v2876
      %v3259 = vmul.f32 %v2876, %v3258
      %v3260 = vsub.f32 1.0, %v3259
      %v3261 = vmul.f32 %v3258, %v3260
      %v3262 = vadd.f32 %v3258, %v3261
      %vm3263 = vweird.f32 %v2876
      %vm3264 = vweird.f32 %v3258
      %vm3265 = vmor %vm3263, %vm3264
      %v3266 = vsel %vm3265, %v3258, %v3262
      %v3267 = vand.u32 2147483647, %v2876
      %vm3268 = vcmp.eq.f32.partialorder %v3267, 8.507059e+37
      %v3269 = vand.u32 %v2876, 2147483648
      %v3270 = vor.u32 1.1754944e-38, %v3269
      %v3271 = vsel %vm3268, %v3270, %v3266
      %v3272 = vmul.f32 1.0, %v3271
      %v3273 = vrcp.pop %v2877
      %v3274 = vmul.f32 %v2877, %v3273
      %v3275 = vsub.f32 1.0, %v3274
      %v3276 = vmul.f32 %v3273, %v3275
      %v3277 = vadd.f32 %v3273, %v3276
      %vm3278 = vweird.f32 %v2877
      %vm3279 = vweird.f32 %v3273
      %vm3280 = vmor %vm3278, %vm3279
      %v3281 = vsel %vm3280, %v3273, %v3277
      %v3282 = vand.u32 2147483647, %v2877
      %vm3283 = vcmp.eq.f32.partialorder %v3282, 8.507059e+37
      %v3284 = vand.u32 %v2877, 2147483648
      %v3285 = vor.u32 1.1754944e-38, %v3284
      %v3286 = vsel %vm3283, %v3285, %v3281
      %v3287 = vmul.f32 1.0, %v3286
      %v3288 = vrcp.pop %v2878
      %v3289 = vmul.f32 %v2878, %v3288
      %v3290 = vsub.f32 1.0, %v3289
      %v3291 = vmul.f32 %v3288, %v3290
      %v3292 = vadd.f32 %v3288, %v3291
      %vm3293 = vweird.f32 %v2878
      %vm3294 = vweird.f32 %v3288
      %vm3295 = vmor %vm3293, %vm3294
      %v3296 = vsel %vm3295, %v3288, %v3292
      %v3297 = vand.u32 2147483647, %v2878
      %vm3298 = vcmp.eq.f32.partialorder %v3297, 8.507059e+37
      %v3299 = vand.u32 %v2878, 2147483648
      %v3300 = vor.u32 1.1754944e-38, %v3299
      %v3301 = vsel %vm3298, %v3300, %v3296
      %v3302 = vmul.f32 1.0, %v3301
      %v3303 = vrcp.pop %v2879
      %v3304 = vmul.f32 %v2879, %v3303
      %v3305 = vsub.f32 1.0, %v3304
      %v3306 = vmul.f32 %v3303, %v3305
      %v3307 = vadd.f32 %v3303, %v3306
      %vm3308 = vweird.f32 %v2879
      %vm3309 = vweird.f32 %v3303
      %vm3310 = vmor %vm3308, %vm3309
      %v3311 = vsel %vm3310, %v3303, %v3307
      %v3312 = vand.u32 2147483647, %v2879
      %vm3313 = vcmp.eq.f32.partialorder %v3312, 8.507059e+37
      %v3314 = vand.u32 %v2879, 2147483648
      %v3315 = vor.u32 1.1754944e-38, %v3314
      %v3316 = vsel %vm3313, %v3315, %v3311
      %v3317 = vmul.f32 1.0, %v3316
      %v3318 = vrcp.pop %v2880
      %v3319 = vmul.f32 %v2880, %v3318
      %v3320 = vsub.f32 1.0, %v3319
      %v3321 = vmul.f32 %v3318, %v3320
      %v3322 = vadd.f32 %v3318, %v3321
      %vm3323 = vweird.f32 %v2880
      %vm3324 = vweird.f32 %v3318
      %vm3325 = vmor %vm3323, %vm3324
      %v3326 = vsel %vm3325, %v3318, %v3322
      %v3327 = vand.u32 2147483647, %v2880
      %vm3328 = vcmp.eq.f32.partialorder %v3327, 8.507059e+37
      %v3329 = vand.u32 %v2880, 2147483648
      %v3330 = vor.u32 1.1754944e-38, %v3329
      %v3331 = vsel %vm3328, %v3330, %v3326
      %v3332 = vmul.f32 1.0, %v3331
      %v3333 = vrcp.pop %v2881
      %v3334 = vmul.f32 %v2881, %v3333
      %v3335 = vsub.f32 1.0, %v3334
      %v3336 = vmul.f32 %v3333, %v3335
      %v3337 = vadd.f32 %v3333, %v3336
      %vm3338 = vweird.f32 %v2881
      %vm3339 = vweird.f32 %v3333
      %vm3340 = vmor %vm3338, %vm3339
      %v3341 = vsel %vm3340, %v3333, %v3337
      %v3342 = vand.u32 2147483647, %v2881
      %vm3343 = vcmp.eq.f32.partialorder %v3342, 8.507059e+37
      %v3344 = vand.u32 %v2881, 2147483648
      %v3345 = vor.u32 1.1754944e-38, %v3344
      %v3346 = vsel %vm3343, %v3345, %v3341
      %v3347 = vmul.f32 1.0, %v3346
      %v3348 = vrcp.pop %v2882
      %v3349 = vmul.f32 %v2882, %v3348
      %v3350 = vsub.f32 1.0, %v3349
      %v3351 = vmul.f32 %v3348, %v3350
      %v3352 = vadd.f32 %v3348, %v3351
      %vm3353 = vweird.f32 %v2882
      %vm3354 = vweird.f32 %v3348
      %vm3355 = vmor %vm3353, %vm3354
      %v3356 = vsel %vm3355, %v3348, %v3352
      %v3357 = vand.u32 2147483647, %v2882
      %vm3358 = vcmp.eq.f32.partialorder %v3357, 8.507059e+37
      %v3359 = vand.u32 %v2882, 2147483648
      %v3360 = vor.u32 1.1754944e-38, %v3359
      %v3361 = vsel %vm3358, %v3360, %v3356
      %v3362 = vmul.f32 1.0, %v3361
      %v3363 = vmul.f32 %v2723, %v2897
      %v3364 = vmul.f32 %v2724, %v2912
      %v3365 = vmul.f32 %v2725, %v2927
      %v3366 = vmul.f32 %v2726, %v2942
      %v3367 = vmul.f32 %v2727, %v2957
      %v3368 = vmul.f32 %v2728, %v2972
      %v3369 = vmul.f32 %v2729, %v2987
      %v3370 = vmul.f32 %v2730, %v3002
      %v3371 = vmul.f32 %v2731, %v3017
      %v3372 = vmul.f32 %v2732, %v3032
      %v3373 = vmul.f32 %v2733, %v3047
      %v3374 = vmul.f32 %v2734, %v3062
      %v3375 = vmul.f32 %v2735, %v3077
      %v3376 = vmul.f32 %v2736, %v3092
      %v3377 = vmul.f32 %v2737, %v3107
      %v3378 = vmul.f32 %v2738, %v3122
      %v3379 = vmul.f32 %v2739, %v3137
      %v3380 = vmul.f32 %v2740, %v3152
      %v3381 = vmul.f32 %v2741, %v3167
      %v3382 = vmul.f32 %v2742, %v3182
      %v3383 = vmul.f32 %v2743, %v3197
      %v3384 = vmul.f32 %v2744, %v3212
      %v3385 = vmul.f32 %v2745, %v3227
      %v3386 = vmul.f32 %v2746, %v3242
      %v3387 = vmul.f32 %v2747, %v3257
      %v3388 = vmul.f32 %v2748, %v3272
      %v3389 = vmul.f32 %v2749, %v3287
      %v3390 = vmul.f32 %v2750, %v3302
      %v3391 = vmul.f32 %v2751, %v3317
      %v3392 = vmul.f32 %v2752, %v3332
      %v3393 = vmul.f32 %v2753, %v3347
      %v3394 = vmul.f32 %v2754, %v3362
      %v3395 = vadd.f32 %v3363, %v232
      %v3396 = vadd.f32 %v3364, %v233
      %v3397 = vadd.f32 %v3365, %v234
      %v3398 = vadd.f32 %v3366, %v235
      %v3399 = vadd.f32 %v3367, %v236
      %v3400 = vadd.f32 %v3368, %v237
      %v3401 = vadd.f32 %v3369, %v238
      %v3402 = vadd.f32 %v3370, %v239
      %v3403 = vadd.f32 %v3371, %v240
      %v3404 = vadd.f32 %v3372, %v241
      %v3405 = vadd.f32 %v3373, %v242
      %v3406 = vadd.f32 %v3374, %v243
      %v3407 = vadd.f32 %v3375, %v244
      %v3408 = vadd.f32 %v3376, %v245
      %v3409 = vadd.f32 %v3377, %v246
      %v3410 = vadd.f32 %v3378, %v247
      %v3411 = vadd.f32 %v3379, %v248
      %v3412 = vadd.f32 %v3380, %v249
      %v3413 = vadd.f32 %v3381, %v250
      %v3414 = vadd.f32 %v3382, %v251
      %v3415 = vadd.f32 %v3383, %v252
      %v3416 = vadd.f32 %v3384, %v253
      %v3417 = vadd.f32 %v3385, %v254
      %v3418 = vadd.f32 %v3386, %v255
      %v3419 = vadd.f32 %v3387, %v256
      %v3420 = vadd.f32 %v3388, %v257
      %v3421 = vadd.f32 %v3389, %v258
      %v3422 = vadd.f32 %v3390, %v259
      %v3423 = vadd.f32 %v3391, %v260
      %v3424 = vadd.f32 %v3392, %v261
      %v3425 = vadd.f32 %v3393, %v262
      %v3426 = vadd.f32 %v3394, %v263
      %3427 = vst.msk [vmem:[%s224] sm:$0xff] %vm285, %v3395
      %3428 = vst.msk [vmem:[%s224 + $0x8] sm:$0xff] %vm285, %v3396
      %3429 = vst.msk [vmem:[%s224 + $0x10] sm:$0xff] %vm285, %v3397
      %3430 = vst.msk [vmem:[%s224 + $0x18] sm:$0xff] %vm285, %v3398
      %3431 = vst.msk [vmem:[%s224 + $0x20] sm:$0xff] %vm285, %v3399
      %3432 = vst.msk [vmem:[%s224 + $0x28] sm:$0xff] %vm285, %v3400
      %3433 = vst.msk [vmem:[%s224 + $0x30] sm:$0xff] %vm285, %v3401
      %3434 = vst.msk [vmem:[%s224 + $0x38] sm:$0xff] %vm285, %v3402
      %3435 = vst.msk [vmem:[%s224 + $0x40] sm:$0xff] %vm285, %v3403
      %3436 = vst.msk [vmem:[%s224 + $0x48] sm:$0xff] %vm285, %v3404
      %3437 = vst.msk [vmem:[%s224 + $0x50] sm:$0xff] %vm285, %v3405
      %3438 = vst.msk [vmem:[%s224 + $0x58] sm:$0xff] %vm285, %v3406
      %3439 = vst.msk [vmem:[%s224 + $0x60] sm:$0xff] %vm285, %v3407
      %3440 = vst.msk [vmem:[%s224 + $0x68] sm:$0xff] %vm285, %v3408
      %3441 = vst.msk [vmem:[%s224 + $0x70] sm:$0xff] %vm285, %v3409
      %3442 = vst.msk [vmem:[%s224 + $0x78] sm:$0xff] %vm285, %v3410
      %3443 = vst.msk [vmem:[%s224 + $0x80] sm:$0xff] %vm285, %v3411
      %3444 = vst.msk [vmem:[%s224 + $0x88] sm:$0xff] %vm285, %v3412
      %3445 = vst.msk [vmem:[%s224 + $0x90] sm:$0xff] %vm285, %v3413
      %3446 = vst.msk [vmem:[%s224 + $0x98] sm:$0xff] %vm285, %v3414
      %3447 = vst.msk [vmem:[%s224 + $0xa0] sm:$0xff] %vm285, %v3415
      %3448 = vst.msk [vmem:[%s224 + $0xa8] sm:$0xff] %vm285, %v3416
      %3449 = vst.msk [vmem:[%s224 + $0xb0] sm:$0xff] %vm285, %v3417
      %3450 = vst.msk [vmem:[%s224 + $0xb8] sm:$0xff] %vm285, %v3418
      %3451 = vst.msk [vmem:[%s224 + $0xc0] sm:$0xff] %vm285, %v3419
      %3452 = vst.msk [vmem:[%s224 + $0xc8] sm:$0xff] %vm285, %v3420
      %3453 = vst.msk [vmem:[%s224 + $0xd0] sm:$0xff] %vm285, %v3421
      %3454 = vst.msk [vmem:[%s224 + $0xd8] sm:$0xff] %vm285, %v3422
      %3455 = vst.msk [vmem:[%s224 + $0xe0] sm:$0xff] %vm285, %v3423
      %3456 = vst.msk [vmem:[%s224 + $0xe8] sm:$0xff] %vm285, %v3424
      %3457 = vst.msk [vmem:[%s224 + $0xf0] sm:$0xff] %vm285, %v3425
      %3458 = vst.msk [vmem:[%s224 + $0xf8] sm:$0xff] %vm285, %v3426
      %p3459 = scmp.lt.s32.totalorder %s16, 1
      %s3460 = scalar_select %p3459, %s16, 1
      %s3461 = smul.addr %s3460, 32
      %s3462 = smul.addr %s3461, 8
      %s3463 = scalar_lea.vmem %s5, %s3462
      // Predicated region
      $region41: #{tpu_custom_call.1} parent=39 // pred_check
        %p3464 = pneg %p144
      $region42: #{tpu_custom_call.1} parent=39 // pred_check_branch
        %3466 = sbr.rel (%p3464) target = $region44
      $region43: #{tpu_custom_call.1} parent=39 // pred_region
        _
      $region44: #{tpu_custom_call.1} parent=39 // pred_fallthru
        _
    $region40: #{tpu_custom_call.1} parent=5 // pred_fallthru
      _
    %p3467 = scmp.le.s32.totalorder 2, %s11
    // Predicated region
    $region45: #{tpu_custom_call.1} parent=5 // pred_check
      %p3468 = pneg %p3467
    $region46: #{tpu_custom_call.1} parent=5 // pred_check_branch
      %3470 = sbr.rel (%p3468) target = $region48
    $region47: #{tpu_custom_call.1} parent=5 // pred_region
      %s3471 = ssub.s32 %s11, 2
      // Predicated region
      $region49: #{tpu_custom_call.1} parent=47 // pred_check
        %p3472 = pneg %p150
      $region50: #{tpu_custom_call.1} parent=47 // pred_check_branch
        %3474 = sbr.rel (%p3472) target = $region52
      $region51: #{tpu_custom_call.1} parent=47 // pred_region
        %p3475 = scmp.lt.s32.totalorder %s17, 1
        %s3476 = scalar_select %p3475, %s17, 1
        %s3477 = smul.addr %s3476, 32
        %s3478 = smul.addr %s3477, 8
        %s3479 = scalar_lea.vmem %s5, %s3478
      $region52: #{tpu_custom_call.1} parent=47 // pred_fallthru
        _
    $region48: #{tpu_custom_call.1} parent=5 // pred_fallthru
      _
  $region6: #{tpu_custom_call.1} parent=0 // loop_footer
    %s15 = sadd.s32 1, %s11
  $region7: #{tpu_custom_call.1} parent=0 // loop_footer_branch
    %10 = sbr.rel target = $region3
  $region8: #{tpu_custom_call.1} parent=0 // loop_exit
    _

</llo_original>
